<compile_context>
chip_gen: v7x
topology: tpu7x:2x2x1
jax: 0.10.0
libtpu: 0.0.40
codegen_flags: <defaults>
</compile_context>

<pallas_src>
import numpy as np
import jax
import jax.numpy as jnp
from jax.experimental import pallas as pl
from jax.experimental.pallas import tpu as pltpu


# ------------------------------ fused kernel -------------------------------- #

def _cnn_fused_kernel(xp1_ref,   # (2, N, P, L1)  padded input, even/odd row planes
                      w1b_ref,   # (3, L1, L2)    conv1 banded weights (one per kh)
                      b1p_ref,   # (1, L2)        conv1 bias, zeroed W-halo columns
                      w2b_ref,   # (3, L2, L3)    conv2 banded weights (cols permuted)
                      b2p_ref,   # (1, L3)        conv2 bias (same column order)
                      fw1_ref,   # (F, HID)       FC1 weight, flatten order folded in
                      fb1_ref,   # (1, HID)
                      fw2_ref,   # (HID, OUT)
                      fb2_ref,   # (1, OUT)
                      out_ref,   # (N, OUT)
                      xp2_ref,   # scratch (2, N, P, L2)  conv2 padded input
                      feat_ref): # scratch (N, F)         flattened pooled features
    _, N, P, L1 = xp1_ref.shape
    Ho = P - 1
    L2 = w1b_ref.shape[2]
    L3 = w2b_ref.shape[2]
    half = L3 // 2                       # = Wo * C2 (even-w / odd-w half split)
    f32 = jnp.float32

    w1_0, w1_1, w1_2 = w1b_ref[0], w1b_ref[1], w1b_ref[2]
    w2_0, w2_1, w2_2 = w2b_ref[0], w2b_ref[1], w2b_ref[2]
    b1p = b1p_ref[...]
    b2p = b2p_ref[...]
    zrow2 = jnp.zeros((1, L2), f32)

    def band_conv(a, b, c, w0, w1, w2, bias):
        # 3 accumulating MXU matmuls over full padded rows + bias + ReLU.
        acc = jnp.dot(a, w0, preferred_element_type=f32)
        acc = acc + jnp.dot(b, w1, preferred_element_type=f32)
        acc = acc + jnp.dot(c, w2, preferred_element_type=f32)
        return jnp.maximum(acc + bias, 0.0)

    for n in range(N):   # N = 2; unrolled so every ref access is a plain 2-D slice
        # ---- conv1 + ReLU (even / odd output rows separately) -------------
        a1 = xp1_ref[0, n, 0:Ho, :]          # padded rows 2m      (tap kh=0, even)
        b1 = xp1_ref[1, n, 0:Ho, :]          # padded rows 2m + 1
        c1 = xp1_ref[0, n, 1:Ho + 1, :]      # padded rows 2m + 2
        d1 = xp1_ref[1, n, 1:Ho + 1, :]      # padded rows 2m + 3
        ev1 = band_conv(a1, b1, c1, w1_0, w1_1, w1_2, b1p)   # rows h = 2m   (Ho, L2)
        od1 = band_conv(b1, c1, d1, w1_0, w1_1, w1_2, b1p)   # rows h = 2m+1 (Ho, L2)

        # ---- scatter into conv2 padded buffer; W-halo is already zero ------
        xp2_ref[1, n, 0:Ho, :] = ev1                 # conv2 padded row 2m + 1
        xp2_ref[0, n, 1:Ho + 1, :] = od1             # conv2 padded row 2m + 2
        xp2_ref[0, n, 0:1, :] = zrow2                # top H-halo row only
        xp2_ref[1, n, Ho:Ho + 1, :] = zrow2          # bottom H-halo row only

        # ---- conv2 + ReLU + fused 2x2 max-pool ------------------------------
        a2 = xp2_ref[0, n, 0:Ho, :]
        b2 = xp2_ref[1, n, 0:Ho, :]
        c2 = xp2_ref[0, n, 1:Ho + 1, :]
        d2 = xp2_ref[1, n, 1:Ho + 1, :]
        ev2 = band_conv(a2, b2, c2, w2_0, w2_1, w2_2, b2p)   # rows h = 2m   (Ho, L3)
        od2 = band_conv(b2, c2, d2, w2_0, w2_1, w2_2, b2p)   # rows h = 2m+1 (Ho, L3)
        hpool = jnp.maximum(ev2, od2)                        # pool over h
        wpool = jnp.maximum(hpool[:, :half], hpool[:, half:])  # pool over w (Ho, half)

        # ---- flatten Ho rows into lanes (64-lane blocks, 16 tiny stores) ----
        for ho in range(Ho):
            feat_ref[n:n + 1, ho * half:(ho + 1) * half] = wpool[ho:ho + 1, :]

    # ---- MLP head: one K=512 FC1 matmul -> ReLU -> FC2, all in VMEM ---------
    hid = jnp.maximum(
        jnp.dot(feat_ref[...], fw1_ref[...], preferred_element_type=f32) + fb1_ref[...],
        0.0)
    out = jnp.dot(hid, fw2_ref[...], preferred_element_type=f32) + fb2_ref[...]
    out_ref[...] = out.astype(out_ref.dtype)


# ------------------------------ wrapper / glue ------------------------------- #

def _banded_weights(w, W, pad_out_halo):
    """3x3 / pad-1 conv as 3 banded matrices acting on a lane-dense padded row.

    w: (Cout, Cin, 3, 3).  Returns (3, (W+2)*Cin, Yout*Cout) where
    Yout = W+2 (output keeps a zeroed W-halo) or W.
    Rows are indexed wi*Cin + ci over the padded input row; columns wp*Cout + co.
    """
    Cout, Cin, KH, KW = w.shape
    assert KH == 3 and KW == 3, "kernel specialized to 3x3 convs"
    Wp = W + 2
    Yout = Wp if pad_out_halo else W
    place = np.zeros((3, Wp, Yout), np.float32)
    for kw in range(3):
        for y in range(Yout):
            wsp = (y - 1) if pad_out_halo else y     # conv output spatial w
            if 0 <= wsp < W:
                place[kw, wsp + kw, y] = 1.0
    band = jnp.einsum('kxy,oihk->hxiyo', jnp.asarray(place), w)
    return band.reshape(3, Wp * Cin, Yout * Cout)


@jax.jit
def cnn_forward(x_nchw, params):
    w1, b1, w2, b2, fw1, fb1, fw2, fb2 = params
    N, Cin, H, W = x_nchw.shape
    C1, C2 = w1.shape[0], w2.shape[0]
    assert H % 2 == 0 and W % 2 == 0, "kernel specialized to even H/W (2x2 pool)"
    Ho, Wo = H // 2, W // 2
    P = Ho + 1
    HID, OUT = fw1.shape[0], fw2.shape[0]
    F = C2 * Ho * Wo
    L1, L2, L3 = (W + 2) * Cin, (W + 2) * C1, W * C2

    # ---- trace-time layout prep (parameters + the tiny padded input) --------
    x_nhwc = jnp.transpose(x_nchw, (0, 2, 3, 1))
    xpad = jnp.pad(x_nhwc, ((0, 0), (1, 1), (1, 1), (0, 0)))            # (N,H+2,W+2,Cin)
    xp1 = jnp.transpose(xpad.reshape(N, P, 2, L1), (2, 0, 1, 3))        # (2, N, P, L1)

    w1b = _banded_weights(w1, W, pad_out_halo=True)                     # (3, L1, L2)
    b1p = jnp.concatenate([jnp.zeros((C1,), jnp.float32),
                           jnp.tile(b1, W),
                           jnp.zeros((C1,), jnp.float32)]).reshape(1, L2)

    w2b = _banded_weights(w2, W, pad_out_halo=False)                    # (3, L2, L3)
    # Permute conv2 output columns to [all even-w | all odd-w] so the 2x2
    # W-pool is one half-split max and the pooled features are already compact.
    perm = np.empty((L3,), np.int32)
    for s in range(2):
        for wo in range(Wo):
            for co in range(C2):
                perm[s * (Wo * C2) + wo * C2 + co] = (2 * wo + s) * C2 + co
    w2b = w2b[:, :, perm]
    b2p = jnp.tile(b2, W).reshape(1, L3)

    # FC1: fold PyTorch's NCHW flatten (c*Ho*Wo + ho*Wo + wo) into the weight;
    # kernel feature order is ho*(Wo*C2) + wo*C2 + c.
    fw1m = jnp.transpose(fw1.reshape(HID, C2, Ho, Wo), (2, 3, 1, 0)).reshape(F, HID)
    fw2t = jnp.transpose(fw2)                                           # (HID, OUT)

    vmem = pl.BlockSpec(memory_space=pltpu.MemorySpace.VMEM)
    return pl.pallas_call(
        _cnn_fused_kernel,
        out_shape=jax.ShapeDtypeStruct((N, OUT), jnp.float32),
        in_specs=[vmem] * 9,
        out_specs=vmem,
        scratch_shapes=[
            pltpu.VMEM((2, N, P, L2), jnp.float32),   # conv2 padded input (even/odd planes)
            pltpu.VMEM((N, F), jnp.float32),          # flattened pooled features
        ],
    )(xp1, w1b, b1p, w2b, b2p, fw1m,
      fb1.reshape(1, HID), fw2t, fb2.reshape(1, OUT))


# ------------------------------ pure-JAX reference --------------------------- #

def ref_forward(x_nchw, params):
    w1, b1, w2, b2, fw1, fb1, fw2, fb2 = params
    x = jnp.transpose(x_nchw, (0, 2, 3, 1))

    def conv(x, w, b):
        return jax.lax.conv_general_dilated(
            x, jnp.transpose(w, (2, 3, 1, 0)), (1, 1), 'SAME',
            dimension_numbers=('NHWC', 'HWIO', 'NHWC')) + b

    y = jax.nn.relu(conv(x, w1, b1))
    y = jax.nn.relu(conv(y, w2, b2))
    N, H, W, C = y.shape
    y = y.reshape(N, H // 2, 2, W // 2, 2, C).max(axis=(2, 4))
    feat = jnp.transpose(y, (0, 3, 1, 2)).reshape(N, -1)      # NCHW flatten
    h = jax.nn.relu(feat @ fw1.T + fb1)
    return h @ fw2.T + fb2


# ----------------------------------- main ------------------------------------ #

if __name__ == "__main__":
    N, C, H, W = 2, 4, 16, 16
    channels = [8, 8]
    hidden = 32
    out_classes = 10

    key = jax.random.PRNGKey(0)
    keys = jax.random.split(key, 9)
    x = jax.random.normal(keys[0], (N, C, H, W), jnp.float32)

    # deterministic synthetic parameters (shapes follow the nn.Module __init__)
    w1 = 0.10 * jax.random.normal(keys[1], (channels[0], C, 3, 3), jnp.float32)
    b1 = 0.10 * jax.random.normal(keys[2], (channels[0],), jnp.float32)
    w2 = 0.10 * jax.random.normal(keys[3], (channels[1], channels[0], 3, 3), jnp.float32)
    b2 = 0.10 * jax.random.normal(keys[4], (channels[1],), jnp.float32)
    n_feat = channels[1] * (H // 2) * (W // 2)               # 8*8*8 = 512
    fw1 = 0.05 * jax.random.normal(keys[5], (hidden, n_feat), jnp.float32)
    fb1 = 0.05 * jax.random.normal(keys[6], (hidden,), jnp.float32)
    fw2 = 0.05 * jax.random.normal(keys[7], (out_classes, hidden), jnp.float32)
    fb2 = 0.05 * jax.random.normal(keys[8], (out_classes,), jnp.float32)
    params = (w1, b1, w2, b2, fw1, fb1, fw2, fb2)

    out = jax.block_until_ready(cnn_forward(x, params))
    ref = ref_forward(x, params)
    assert out.shape == (N, out_classes), out.shape
    # Both sides use default (fast) MXU precision but with different contraction
    # groupings, so a few e-3 of divergence is expected; real bugs are O(0.1+).
    err = float(jnp.max(jnp.abs(out - ref)))
    assert jnp.allclose(out, ref, atol=2e-2, rtol=2e-2), err
    print("KERNEL_OK")
</pallas_src>

<mosaic_0001>
module attributes {stable_mosaic.version = 11 : i64} {
  func.func @_cnn_fused_kernel(%arg0: memref<2x2x9x72xf32, #tpu.memory_space<vmem>>, %arg1: memref<3x72x144xf32, #tpu.memory_space<vmem>>, %arg2: memref<1x144xf32, #tpu.memory_space<vmem>>, %arg3: memref<3x144x128xf32, #tpu.memory_space<vmem>>, %arg4: memref<1x128xf32, #tpu.memory_space<vmem>>, %arg5: memref<512x32xf32, #tpu.memory_space<vmem>>, %arg6: memref<1x32xf32, #tpu.memory_space<vmem>>, %arg7: memref<32x10xf32, #tpu.memory_space<vmem>>, %arg8: memref<1x10xf32, #tpu.memory_space<vmem>>, %arg9: memref<2x10xf32, #tpu.memory_space<vmem>>, %arg10: memref<2x2x9x144xf32, #tpu.memory_space<vmem>>, %arg11: memref<2x512xf32, #tpu.memory_space<vmem>>) attributes {dimension_semantics = [], scalar_prefetch = 0 : i64, scratch_operands = 2 : i64, tpu.core_type = #tpu.core_type<tc>} {
    %c0 = arith.constant 0 : index
    %c0_0 = arith.constant 0 : index
    %c0_1 = arith.constant 0 : index
    %0 = vector.load %arg1[%c0, %c0_0, %c0_1] : memref<3x72x144xf32, #tpu.memory_space<vmem>>, vector<1x72x144xf32>
    %1 = vector.shape_cast %0 : vector<1x72x144xf32> to vector<72x144xf32>
    %c1 = arith.constant 1 : index
    %c0_2 = arith.constant 0 : index
    %c0_3 = arith.constant 0 : index
    %2 = vector.load %arg1[%c1, %c0_2, %c0_3] : memref<3x72x144xf32, #tpu.memory_space<vmem>>, vector<1x72x144xf32>
    %3 = vector.shape_cast %2 : vector<1x72x144xf32> to vector<72x144xf32>
    %c2 = arith.constant 2 : index
    %c0_4 = arith.constant 0 : index
    %c0_5 = arith.constant 0 : index
    %4 = vector.load %arg1[%c2, %c0_4, %c0_5] : memref<3x72x144xf32, #tpu.memory_space<vmem>>, vector<1x72x144xf32>
    %5 = vector.shape_cast %4 : vector<1x72x144xf32> to vector<72x144xf32>
    %c0_6 = arith.constant 0 : index
    %c0_7 = arith.constant 0 : index
    %c0_8 = arith.constant 0 : index
    %6 = vector.load %arg3[%c0_6, %c0_7, %c0_8] : memref<3x144x128xf32, #tpu.memory_space<vmem>>, vector<1x144x128xf32>
    %7 = vector.shape_cast %6 : vector<1x144x128xf32> to vector<144x128xf32>
    %c1_9 = arith.constant 1 : index
    %c0_10 = arith.constant 0 : index
    %c0_11 = arith.constant 0 : index
    %8 = vector.load %arg3[%c1_9, %c0_10, %c0_11] : memref<3x144x128xf32, #tpu.memory_space<vmem>>, vector<1x144x128xf32>
    %9 = vector.shape_cast %8 : vector<1x144x128xf32> to vector<144x128xf32>
    %c2_12 = arith.constant 2 : index
    %c0_13 = arith.constant 0 : index
    %c0_14 = arith.constant 0 : index
    %10 = vector.load %arg3[%c2_12, %c0_13, %c0_14] : memref<3x144x128xf32, #tpu.memory_space<vmem>>, vector<1x144x128xf32>
    %11 = vector.shape_cast %10 : vector<1x144x128xf32> to vector<144x128xf32>
    %c0_15 = arith.constant 0 : index
    %c0_16 = arith.constant 0 : index
    %12 = vector.load %arg2[%c0_15, %c0_16] : memref<1x144xf32, #tpu.memory_space<vmem>>, vector<1x144xf32>
    %c0_17 = arith.constant 0 : index
    %c0_18 = arith.constant 0 : index
    %13 = vector.load %arg4[%c0_17, %c0_18] : memref<1x128xf32, #tpu.memory_space<vmem>>, vector<1x128xf32>
    %cst = arith.constant 0.000000e+00 : f32
    %14 = vector.broadcast %cst : f32 to vector<1x144xf32>
    %c0_19 = arith.constant 0 : index
    %c0_20 = arith.constant 0 : index
    %c0_21 = arith.constant 0 : index
    %c0_22 = arith.constant 0 : index
    %15 = vector.load %arg0[%c0_19, %c0_20, %c0_21, %c0_22] : memref<2x2x9x72xf32, #tpu.memory_space<vmem>>, vector<1x1x8x72xf32>
    %16 = vector.shape_cast %15 : vector<1x1x8x72xf32> to vector<8x72xf32>
    %c1_23 = arith.constant 1 : index
    %c0_24 = arith.constant 0 : index
    %c0_25 = arith.constant 0 : index
    %c0_26 = arith.constant 0 : index
    %17 = vector.load %arg0[%c1_23, %c0_24, %c0_25, %c0_26] : memref<2x2x9x72xf32, #tpu.memory_space<vmem>>, vector<1x1x8x72xf32>
    %18 = vector.shape_cast %17 : vector<1x1x8x72xf32> to vector<8x72xf32>
    %c0_27 = arith.constant 0 : index
    %c0_28 = arith.constant 0 : index
    %c1_29 = arith.constant 1 : index
    %c0_30 = arith.constant 0 : index
    %19 = vector.load %arg0[%c0_27, %c0_28, %c1_29, %c0_30] : memref<2x2x9x72xf32, #tpu.memory_space<vmem>>, vector<1x1x8x72xf32>
    %20 = vector.shape_cast %19 : vector<1x1x8x72xf32> to vector<8x72xf32>
    %c1_31 = arith.constant 1 : index
    %c0_32 = arith.constant 0 : index
    %c1_33 = arith.constant 1 : index
    %c0_34 = arith.constant 0 : index
    %21 = vector.load %arg0[%c1_31, %c0_32, %c1_33, %c0_34] : memref<2x2x9x72xf32, #tpu.memory_space<vmem>>, vector<1x1x8x72xf32>
    %22 = vector.shape_cast %21 : vector<1x1x8x72xf32> to vector<8x72xf32>
    %cst_35 = arith.constant dense<0.000000e+00> : vector<8x144xf32>
    %23 = tpu.matmul %16, %1, %cst_35 {dimension_numbers = #tpu.dot_dimension_numbers<[1], [0], [0], [1], [0, 0, 1, 1], [], []>} : vector<8x72xf32>, vector<72x144xf32>, vector<8x144xf32> -> vector<8x144xf32>
    %cst_36 = arith.constant dense<0.000000e+00> : vector<8x144xf32>
    %24 = tpu.matmul %18, %3, %cst_36 {dimension_numbers = #tpu.dot_dimension_numbers<[1], [0], [0], [1], [0, 0, 1, 1], [], []>} : vector<8x72xf32>, vector<72x144xf32>, vector<8x144xf32> -> vector<8x144xf32>
    %25 = arith.addf %23, %24 : vector<8x144xf32>
    %cst_37 = arith.constant dense<0.000000e+00> : vector<8x144xf32>
    %26 = tpu.matmul %20, %5, %cst_37 {dimension_numbers = #tpu.dot_dimension_numbers<[1], [0], [0], [1], [0, 0, 1, 1], [], []>} : vector<8x72xf32>, vector<72x144xf32>, vector<8x144xf32> -> vector<8x144xf32>
    %27 = arith.addf %25, %26 : vector<8x144xf32>
    %28 = vector.broadcast %12 : vector<1x144xf32> to vector<8x144xf32>
    %29 = arith.addf %27, %28 : vector<8x144xf32>
    %cst_38 = arith.constant 0.000000e+00 : f32
    %30 = vector.broadcast %cst_38 : f32 to vector<8x144xf32>
    %31 = arith.maximumf %29, %30 : vector<8x144xf32>
    %cst_39 = arith.constant dense<0.000000e+00> : vector<8x144xf32>
    %32 = tpu.matmul %18, %1, %cst_39 {dimension_numbers = #tpu.dot_dimension_numbers<[1], [0], [0], [1], [0, 0, 1, 1], [], []>} : vector<8x72xf32>, vector<72x144xf32>, vector<8x144xf32> -> vector<8x144xf32>
    %cst_40 = arith.constant dense<0.000000e+00> : vector<8x144xf32>
    %33 = tpu.matmul %20, %3, %cst_40 {dimension_numbers = #tpu.dot_dimension_numbers<[1], [0], [0], [1], [0, 0, 1, 1], [], []>} : vector<8x72xf32>, vector<72x144xf32>, vector<8x144xf32> -> vector<8x144xf32>
    %34 = arith.addf %32, %33 : vector<8x144xf32>
    %cst_41 = arith.constant dense<0.000000e+00> : vector<8x144xf32>
    %35 = tpu.matmul %22, %5, %cst_41 {dimension_numbers = #tpu.dot_dimension_numbers<[1], [0], [0], [1], [0, 0, 1, 1], [], []>} : vector<8x72xf32>, vector<72x144xf32>, vector<8x144xf32> -> vector<8x144xf32>
    %36 = arith.addf %34, %35 : vector<8x144xf32>
    %37 = vector.broadcast %12 : vector<1x144xf32> to vector<8x144xf32>
    %38 = arith.addf %36, %37 : vector<8x144xf32>
    %cst_42 = arith.constant 0.000000e+00 : f32
    %39 = vector.broadcast %cst_42 : f32 to vector<8x144xf32>
    %40 = arith.maximumf %38, %39 : vector<8x144xf32>
    %c1_43 = arith.constant 1 : index
    %c0_44 = arith.constant 0 : index
    %c0_45 = arith.constant 0 : index
    %c0_46 = arith.constant 0 : index
    %41 = vector.load %arg10[%c1_43, %c0_44, %c0_45, %c0_46] : memref<2x2x9x144xf32, #tpu.memory_space<vmem>>, vector<1x1x8x144xf32>
    %42 = vector.shape_cast %41 : vector<1x1x8x144xf32> to vector<8x144xf32>
    %43 = vector.shape_cast %31 : vector<8x144xf32> to vector<1x1x8x144xf32>
    tpu.vector_store %arg10[%c1_43, %c0_44, %c0_45, %c0_46], %43 {strides = array<i32>} : memref<2x2x9x144xf32, #tpu.memory_space<vmem>>, vector<1x1x8x144xf32>,
    %c0_47 = arith.constant 0 : index
    %c0_48 = arith.constant 0 : index
    %c1_49 = arith.constant 1 : index
    %c0_50 = arith.constant 0 : index
    %44 = vector.load %arg10[%c0_47, %c0_48, %c1_49, %c0_50] : memref<2x2x9x144xf32, #tpu.memory_space<vmem>>, vector<1x1x8x144xf32>
    %45 = vector.shape_cast %44 : vector<1x1x8x144xf32> to vector<8x144xf32>
    %46 = vector.shape_cast %40 : vector<8x144xf32> to vector<1x1x8x144xf32>
    tpu.vector_store %arg10[%c0_47, %c0_48, %c1_49, %c0_50], %46 {strides = array<i32>} : memref<2x2x9x144xf32, #tpu.memory_space<vmem>>, vector<1x1x8x144xf32>,
    %c0_51 = arith.constant 0 : index
    %c0_52 = arith.constant 0 : index
    %c0_53 = arith.constant 0 : index
    %c0_54 = arith.constant 0 : index
    %47 = vector.load %arg10[%c0_51, %c0_52, %c0_53, %c0_54] : memref<2x2x9x144xf32, #tpu.memory_space<vmem>>, vector<1x1x1x144xf32>
    %48 = vector.shape_cast %47 : vector<1x1x1x144xf32> to vector<1x144xf32>
    %49 = vector.shape_cast %14 : vector<1x144xf32> to vector<1x1x1x144xf32>
    tpu.vector_store %arg10[%c0_51, %c0_52, %c0_53, %c0_54], %49 {strides = array<i32>} : memref<2x2x9x144xf32, #tpu.memory_space<vmem>>, vector<1x1x1x144xf32>,
    %c1_55 = arith.constant 1 : index
    %c0_56 = arith.constant 0 : index
    %c8 = arith.constant 8 : index
    %c0_57 = arith.constant 0 : index
    %50 = vector.load %arg10[%c1_55, %c0_56, %c8, %c0_57] : memref<2x2x9x144xf32, #tpu.memory_space<vmem>>, vector<1x1x1x144xf32>
    %51 = vector.shape_cast %50 : vector<1x1x1x144xf32> to vector<1x144xf32>
    %52 = vector.shape_cast %14 : vector<1x144xf32> to vector<1x1x1x144xf32>
    tpu.vector_store %arg10[%c1_55, %c0_56, %c8, %c0_57], %52 {strides = array<i32>} : memref<2x2x9x144xf32, #tpu.memory_space<vmem>>, vector<1x1x1x144xf32>,
    %c0_58 = arith.constant 0 : index
    %c0_59 = arith.constant 0 : index
    %c0_60 = arith.constant 0 : index
    %c0_61 = arith.constant 0 : index
    %53 = vector.load %arg10[%c0_58, %c0_59, %c0_60, %c0_61] : memref<2x2x9x144xf32, #tpu.memory_space<vmem>>, vector<1x1x8x144xf32>
    %54 = vector.shape_cast %53 : vector<1x1x8x144xf32> to vector<8x144xf32>
    %c1_62 = arith.constant 1 : index
    %c0_63 = arith.constant 0 : index
    %c0_64 = arith.constant 0 : index
    %c0_65 = arith.constant 0 : index
    %55 = vector.load %arg10[%c1_62, %c0_63, %c0_64, %c0_65] : memref<2x2x9x144xf32, #tpu.memory_space<vmem>>, vector<1x1x8x144xf32>
    %56 = vector.shape_cast %55 : vector<1x1x8x144xf32> to vector<8x144xf32>
    %c0_66 = arith.constant 0 : index
    %c0_67 = arith.constant 0 : index
    %c1_68 = arith.constant 1 : index
    %c0_69 = arith.constant 0 : index
    %57 = vector.load %arg10[%c0_66, %c0_67, %c1_68, %c0_69] : memref<2x2x9x144xf32, #tpu.memory_space<vmem>>, vector<1x1x8x144xf32>
    %58 = vector.shape_cast %57 : vector<1x1x8x144xf32> to vector<8x144xf32>
    %c1_70 = arith.constant 1 : index
    %c0_71 = arith.constant 0 : index
    %c1_72 = arith.constant 1 : index
    %c0_73 = arith.constant 0 : index
    %59 = vector.load %arg10[%c1_70, %c0_71, %c1_72, %c0_73] : memref<2x2x9x144xf32, #tpu.memory_space<vmem>>, vector<1x1x8x144xf32>
    %60 = vector.shape_cast %59 : vector<1x1x8x144xf32> to vector<8x144xf32>
    %cst_74 = arith.constant dense<0.000000e+00> : vector<8x128xf32>
    %61 = tpu.matmul %54, %7, %cst_74 {dimension_numbers = #tpu.dot_dimension_numbers<[1], [0], [0], [1], [0, 0, 1, 1], [], []>} : vector<8x144xf32>, vector<144x128xf32>, vector<8x128xf32> -> vector<8x128xf32>
    %cst_75 = arith.constant dense<0.000000e+00> : vector<8x128xf32>
    %62 = tpu.matmul %56, %9, %cst_75 {dimension_numbers = #tpu.dot_dimension_numbers<[1], [0], [0], [1], [0, 0, 1, 1], [], []>} : vector<8x144xf32>, vector<144x128xf32>, vector<8x128xf32> -> vector<8x128xf32>
    %63 = arith.addf %61, %62 : vector<8x128xf32>
    %cst_76 = arith.constant dense<0.000000e+00> : vector<8x128xf32>
    %64 = tpu.matmul %58, %11, %cst_76 {dimension_numbers = #tpu.dot_dimension_numbers<[1], [0], [0], [1], [0, 0, 1, 1], [], []>} : vector<8x144xf32>, vector<144x128xf32>, vector<8x128xf32> -> vector<8x128xf32>
    %65 = arith.addf %63, %64 : vector<8x128xf32>
    %66 = vector.broadcast %13 : vector<1x128xf32> to vector<8x128xf32>
    %67 = arith.addf %65, %66 : vector<8x128xf32>
    %cst_77 = arith.constant 0.000000e+00 : f32
    %68 = vector.broadcast %cst_77 : f32 to vector<8x128xf32>
    %69 = arith.maximumf %67, %68 : vector<8x128xf32>
    %cst_78 = arith.constant dense<0.000000e+00> : vector<8x128xf32>
    %70 = tpu.matmul %56, %7, %cst_78 {dimension_numbers = #tpu.dot_dimension_numbers<[1], [0], [0], [1], [0, 0, 1, 1], [], []>} : vector<8x144xf32>, vector<144x128xf32>, vector<8x128xf32> -> vector<8x128xf32>
    %cst_79 = arith.constant dense<0.000000e+00> : vector<8x128xf32>
    %71 = tpu.matmul %58, %9, %cst_79 {dimension_numbers = #tpu.dot_dimension_numbers<[1], [0], [0], [1], [0, 0, 1, 1], [], []>} : vector<8x144xf32>, vector<144x128xf32>, vector<8x128xf32> -> vector<8x128xf32>
    %72 = arith.addf %70, %71 : vector<8x128xf32>
    %cst_80 = arith.constant dense<0.000000e+00> : vector<8x128xf32>
    %73 = tpu.matmul %60, %11, %cst_80 {dimension_numbers = #tpu.dot_dimension_numbers<[1], [0], [0], [1], [0, 0, 1, 1], [], []>} : vector<8x144xf32>, vector<144x128xf32>, vector<8x128xf32> -> vector<8x128xf32>
    %74 = arith.addf %72, %73 : vector<8x128xf32>
    %75 = vector.broadcast %13 : vector<1x128xf32> to vector<8x128xf32>
    %76 = arith.addf %74, %75 : vector<8x128xf32>
    %cst_81 = arith.constant 0.000000e+00 : f32
    %77 = vector.broadcast %cst_81 : f32 to vector<8x128xf32>
    %78 = arith.maximumf %76, %77 : vector<8x128xf32>
    %79 = arith.maximumf %69, %78 : vector<8x128xf32>
    %80 = vector.extract_strided_slice %79 {offsets = [0, 0], sizes = [8, 64], strides = [1, 1]} : vector<8x128xf32> to vector<8x64xf32>
    %81 = vector.extract_strided_slice %79 {offsets = [0, 64], sizes = [8, 64], strides = [1, 1]} : vector<8x128xf32> to vector<8x64xf32>
    %82 = arith.maximumf %80, %81 : vector<8x64xf32>
    %83 = vector.extract_strided_slice %82 {offsets = [0, 0], sizes = [1, 64], strides = [1, 1]} : vector<8x64xf32> to vector<1x64xf32>
    %c0_82 = arith.constant 0 : index
    %c0_83 = arith.constant 0 : index
    %84 = vector.load %arg11[%c0_82, %c0_83] : memref<2x512xf32, #tpu.memory_space<vmem>>, vector<1x64xf32>
    tpu.vector_store %arg11[%c0_82, %c0_83], %83 {strides = array<i32>} : memref<2x512xf32, #tpu.memory_space<vmem>>, vector<1x64xf32>,
    %85 = vector.extract_strided_slice %82 {offsets = [1, 0], sizes = [1, 64], strides = [1, 1]} : vector<8x64xf32> to vector<1x64xf32>
    %c0_84 = arith.constant 0 : index
    %c64 = arith.constant 64 : index
    %86 = vector.load %arg11[%c0_84, %c64] : memref<2x512xf32, #tpu.memory_space<vmem>>, vector<1x64xf32>
    tpu.vector_store %arg11[%c0_84, %c64], %85 {strides = array<i32>} : memref<2x512xf32, #tpu.memory_space<vmem>>, vector<1x64xf32>,
    %87 = vector.extract_strided_slice %82 {offsets = [2, 0], sizes = [1, 64], strides = [1, 1]} : vector<8x64xf32> to vector<1x64xf32>
    %c0_85 = arith.constant 0 : index
    %c128 = arith.constant 128 : index
    %88 = vector.load %arg11[%c0_85, %c128] : memref<2x512xf32, #tpu.memory_space<vmem>>, vector<1x64xf32>
    tpu.vector_store %arg11[%c0_85, %c128], %87 {strides = array<i32>} : memref<2x512xf32, #tpu.memory_space<vmem>>, vector<1x64xf32>,
    %89 = vector.extract_strided_slice %82 {offsets = [3, 0], sizes = [1, 64], strides = [1, 1]} : vector<8x64xf32> to vector<1x64xf32>
    %c0_86 = arith.constant 0 : index
    %c192 = arith.constant 192 : index
    %90 = vector.load %arg11[%c0_86, %c192] : memref<2x512xf32, #tpu.memory_space<vmem>>, vector<1x64xf32>
    tpu.vector_store %arg11[%c0_86, %c192], %89 {strides = array<i32>} : memref<2x512xf32, #tpu.memory_space<vmem>>, vector<1x64xf32>,
    %91 = vector.extract_strided_slice %82 {offsets = [4, 0], sizes = [1, 64], strides = [1, 1]} : vector<8x64xf32> to vector<1x64xf32>
    %c0_87 = arith.constant 0 : index
    %c256 = arith.constant 256 : index
    %92 = vector.load %arg11[%c0_87, %c256] : memref<2x512xf32, #tpu.memory_space<vmem>>, vector<1x64xf32>
    tpu.vector_store %arg11[%c0_87, %c256], %91 {strides = array<i32>} : memref<2x512xf32, #tpu.memory_space<vmem>>, vector<1x64xf32>,
    %93 = vector.extract_strided_slice %82 {offsets = [5, 0], sizes = [1, 64], strides = [1, 1]} : vector<8x64xf32> to vector<1x64xf32>
    %c0_88 = arith.constant 0 : index
    %c320 = arith.constant 320 : index
    %94 = vector.load %arg11[%c0_88, %c320] : memref<2x512xf32, #tpu.memory_space<vmem>>, vector<1x64xf32>
    tpu.vector_store %arg11[%c0_88, %c320], %93 {strides = array<i32>} : memref<2x512xf32, #tpu.memory_space<vmem>>, vector<1x64xf32>,
    %95 = vector.extract_strided_slice %82 {offsets = [6, 0], sizes = [1, 64], strides = [1, 1]} : vector<8x64xf32> to vector<1x64xf32>
    %c0_89 = arith.constant 0 : index
    %c384 = arith.constant 384 : index
    %96 = vector.load %arg11[%c0_89, %c384] : memref<2x512xf32, #tpu.memory_space<vmem>>, vector<1x64xf32>
    tpu.vector_store %arg11[%c0_89, %c384], %95 {strides = array<i32>} : memref<2x512xf32, #tpu.memory_space<vmem>>, vector<1x64xf32>,
    %97 = vector.extract_strided_slice %82 {offsets = [7, 0], sizes = [1, 64], strides = [1, 1]} : vector<8x64xf32> to vector<1x64xf32>
    %c0_90 = arith.constant 0 : index
    %c448 = arith.constant 448 : index
    %98 = vector.load %arg11[%c0_90, %c448] : memref<2x512xf32, #tpu.memory_space<vmem>>, vector<1x64xf32>
    tpu.vector_store %arg11[%c0_90, %c448], %97 {strides = array<i32>} : memref<2x512xf32, #tpu.memory_space<vmem>>, vector<1x64xf32>,
    %c0_91 = arith.constant 0 : index
    %c1_92 = arith.constant 1 : index
    %c0_93 = arith.constant 0 : index
    %c0_94 = arith.constant 0 : index
    %99 = vector.load %arg0[%c0_91, %c1_92, %c0_93, %c0_94] : memref<2x2x9x72xf32, #tpu.memory_space<vmem>>, vector<1x1x8x72xf32>
    %100 = vector.shape_cast %99 : vector<1x1x8x72xf32> to vector<8x72xf32>
    %c1_95 = arith.constant 1 : index
    %c1_96 = arith.constant 1 : index
    %c0_97 = arith.constant 0 : index
    %c0_98 = arith.constant 0 : index
    %101 = vector.load %arg0[%c1_95, %c1_96, %c0_97, %c0_98] : memref<2x2x9x72xf32, #tpu.memory_space<vmem>>, vector<1x1x8x72xf32>
    %102 = vector.shape_cast %101 : vector<1x1x8x72xf32> to vector<8x72xf32>
    %c0_99 = arith.constant 0 : index
    %c1_100 = arith.constant 1 : index
    %c1_101 = arith.constant 1 : index
    %c0_102 = arith.constant 0 : index
    %103 = vector.load %arg0[%c0_99, %c1_100, %c1_101, %c0_102] : memref<2x2x9x72xf32, #tpu.memory_space<vmem>>, vector<1x1x8x72xf32>
    %104 = vector.shape_cast %103 : vector<1x1x8x72xf32> to vector<8x72xf32>
    %c1_103 = arith.constant 1 : index
    %c1_104 = arith.constant 1 : index
    %c1_105 = arith.constant 1 : index
    %c0_106 = arith.constant 0 : index
    %105 = vector.load %arg0[%c1_103, %c1_104, %c1_105, %c0_106] : memref<2x2x9x72xf32, #tpu.memory_space<vmem>>, vector<1x1x8x72xf32>
    %106 = vector.shape_cast %105 : vector<1x1x8x72xf32> to vector<8x72xf32>
    %cst_107 = arith.constant dense<0.000000e+00> : vector<8x144xf32>
    %107 = tpu.matmul %100, %1, %cst_107 {dimension_numbers = #tpu.dot_dimension_numbers<[1], [0], [0], [1], [0, 0, 1, 1], [], []>} : vector<8x72xf32>, vector<72x144xf32>, vector<8x144xf32> -> vector<8x144xf32>
    %cst_108 = arith.constant dense<0.000000e+00> : vector<8x144xf32>
    %108 = tpu.matmul %102, %3, %cst_108 {dimension_numbers = #tpu.dot_dimension_numbers<[1], [0], [0], [1], [0, 0, 1, 1], [], []>} : vector<8x72xf32>, vector<72x144xf32>, vector<8x144xf32> -> vector<8x144xf32>
    %109 = arith.addf %107, %108 : vector<8x144xf32>
    %cst_109 = arith.constant dense<0.000000e+00> : vector<8x144xf32>
    %110 = tpu.matmul %104, %5, %cst_109 {dimension_numbers = #tpu.dot_dimension_numbers<[1], [0], [0], [1], [0, 0, 1, 1], [], []>} : vector<8x72xf32>, vector<72x144xf32>, vector<8x144xf32> -> vector<8x144xf32>
    %111 = arith.addf %109, %110 : vector<8x144xf32>
    %112 = vector.broadcast %12 : vector<1x144xf32> to vector<8x144xf32>
    %113 = arith.addf %111, %112 : vector<8x144xf32>
    %cst_110 = arith.constant 0.000000e+00 : f32
    %114 = vector.broadcast %cst_110 : f32 to vector<8x144xf32>
    %115 = arith.maximumf %113, %114 : vector<8x144xf32>
    %cst_111 = arith.constant dense<0.000000e+00> : vector<8x144xf32>
    %116 = tpu.matmul %102, %1, %cst_111 {dimension_numbers = #tpu.dot_dimension_numbers<[1], [0], [0], [1], [0, 0, 1, 1], [], []>} : vector<8x72xf32>, vector<72x144xf32>, vector<8x144xf32> -> vector<8x144xf32>
    %cst_112 = arith.constant dense<0.000000e+00> : vector<8x144xf32>
    %117 = tpu.matmul %104, %3, %cst_112 {dimension_numbers = #tpu.dot_dimension_numbers<[1], [0], [0], [1], [0, 0, 1, 1], [], []>} : vector<8x72xf32>, vector<72x144xf32>, vector<8x144xf32> -> vector<8x144xf32>
    %118 = arith.addf %116, %117 : vector<8x144xf32>
    %cst_113 = arith.constant dense<0.000000e+00> : vector<8x144xf32>
    %119 = tpu.matmul %106, %5, %cst_113 {dimension_numbers = #tpu.dot_dimension_numbers<[1], [0], [0], [1], [0, 0, 1, 1], [], []>} : vector<8x72xf32>, vector<72x144xf32>, vector<8x144xf32> -> vector<8x144xf32>
    %120 = arith.addf %118, %119 : vector<8x144xf32>
    %121 = vector.broadcast %12 : vector<1x144xf32> to vector<8x144xf32>
    %122 = arith.addf %120, %121 : vector<8x144xf32>
    %cst_114 = arith.constant 0.000000e+00 : f32
    %123 = vector.broadcast %cst_114 : f32 to vector<8x144xf32>
    %124 = arith.maximumf %122, %123 : vector<8x144xf32>
    %c1_115 = arith.constant 1 : index
    %c1_116 = arith.constant 1 : index
    %c0_117 = arith.constant 0 : index
    %c0_118 = arith.constant 0 : index
    %125 = vector.load %arg10[%c1_115, %c1_116, %c0_117, %c0_118] : memref<2x2x9x144xf32, #tpu.memory_space<vmem>>, vector<1x1x8x144xf32>
    %126 = vector.shape_cast %125 : vector<1x1x8x144xf32> to vector<8x144xf32>
    %127 = vector.shape_cast %115 : vector<8x144xf32> to vector<1x1x8x144xf32>
    tpu.vector_store %arg10[%c1_115, %c1_116, %c0_117, %c0_118], %127 {strides = array<i32>} : memref<2x2x9x144xf32, #tpu.memory_space<vmem>>, vector<1x1x8x144xf32>,
    %c0_119 = arith.constant 0 : index
    %c1_120 = arith.constant 1 : index
    %c1_121 = arith.constant 1 : index
    %c0_122 = arith.constant 0 : index
    %128 = vector.load %arg10[%c0_119, %c1_120, %c1_121, %c0_122] : memref<2x2x9x144xf32, #tpu.memory_space<vmem>>, vector<1x1x8x144xf32>
    %129 = vector.shape_cast %128 : vector<1x1x8x144xf32> to vector<8x144xf32>
    %130 = vector.shape_cast %124 : vector<8x144xf32> to vector<1x1x8x144xf32>
    tpu.vector_store %arg10[%c0_119, %c1_120, %c1_121, %c0_122], %130 {strides = array<i32>} : memref<2x2x9x144xf32, #tpu.memory_space<vmem>>, vector<1x1x8x144xf32>,
    %c0_123 = arith.constant 0 : index
    %c1_124 = arith.constant 1 : index
    %c0_125 = arith.constant 0 : index
    %c0_126 = arith.constant 0 : index
    %131 = vector.load %arg10[%c0_123, %c1_124, %c0_125, %c0_126] : memref<2x2x9x144xf32, #tpu.memory_space<vmem>>, vector<1x1x1x144xf32>
    %132 = vector.shape_cast %131 : vector<1x1x1x144xf32> to vector<1x144xf32>
    %133 = vector.shape_cast %14 : vector<1x144xf32> to vector<1x1x1x144xf32>
    tpu.vector_store %arg10[%c0_123, %c1_124, %c0_125, %c0_126], %133 {strides = array<i32>} : memref<2x2x9x144xf32, #tpu.memory_space<vmem>>, vector<1x1x1x144xf32>,
    %c1_127 = arith.constant 1 : index
    %c1_128 = arith.constant 1 : index
    %c8_129 = arith.constant 8 : index
    %c0_130 = arith.constant 0 : index
    %134 = vector.load %arg10[%c1_127, %c1_128, %c8_129, %c0_130] : memref<2x2x9x144xf32, #tpu.memory_space<vmem>>, vector<1x1x1x144xf32>
    %135 = vector.shape_cast %134 : vector<1x1x1x144xf32> to vector<1x144xf32>
    %136 = vector.shape_cast %14 : vector<1x144xf32> to vector<1x1x1x144xf32>
    tpu.vector_store %arg10[%c1_127, %c1_128, %c8_129, %c0_130], %136 {strides = array<i32>} : memref<2x2x9x144xf32, #tpu.memory_space<vmem>>, vector<1x1x1x144xf32>,
    %c0_131 = arith.constant 0 : index
    %c1_132 = arith.constant 1 : index
    %c0_133 = arith.constant 0 : index
    %c0_134 = arith.constant 0 : index
    %137 = vector.load %arg10[%c0_131, %c1_132, %c0_133, %c0_134] : memref<2x2x9x144xf32, #tpu.memory_space<vmem>>, vector<1x1x8x144xf32>
    %138 = vector.shape_cast %137 : vector<1x1x8x144xf32> to vector<8x144xf32>
    %c1_135 = arith.constant 1 : index
    %c1_136 = arith.constant 1 : index
    %c0_137 = arith.constant 0 : index
    %c0_138 = arith.constant 0 : index
    %139 = vector.load %arg10[%c1_135, %c1_136, %c0_137, %c0_138] : memref<2x2x9x144xf32, #tpu.memory_space<vmem>>, vector<1x1x8x144xf32>
    %140 = vector.shape_cast %139 : vector<1x1x8x144xf32> to vector<8x144xf32>
    %c0_139 = arith.constant 0 : index
    %c1_140 = arith.constant 1 : index
    %c1_141 = arith.constant 1 : index
    %c0_142 = arith.constant 0 : index
    %141 = vector.load %arg10[%c0_139, %c1_140, %c1_141, %c0_142] : memref<2x2x9x144xf32, #tpu.memory_space<vmem>>, vector<1x1x8x144xf32>
    %142 = vector.shape_cast %141 : vector<1x1x8x144xf32> to vector<8x144xf32>
    %c1_143 = arith.constant 1 : index
    %c1_144 = arith.constant 1 : index
    %c1_145 = arith.constant 1 : index
    %c0_146 = arith.constant 0 : index
    %143 = vector.load %arg10[%c1_143, %c1_144, %c1_145, %c0_146] : memref<2x2x9x144xf32, #tpu.memory_space<vmem>>, vector<1x1x8x144xf32>
    %144 = vector.shape_cast %143 : vector<1x1x8x144xf32> to vector<8x144xf32>
    %cst_147 = arith.constant dense<0.000000e+00> : vector<8x128xf32>
    %145 = tpu.matmul %138, %7, %cst_147 {dimension_numbers = #tpu.dot_dimension_numbers<[1], [0], [0], [1], [0, 0, 1, 1], [], []>} : vector<8x144xf32>, vector<144x128xf32>, vector<8x128xf32> -> vector<8x128xf32>
    %cst_148 = arith.constant dense<0.000000e+00> : vector<8x128xf32>
    %146 = tpu.matmul %140, %9, %cst_148 {dimension_numbers = #tpu.dot_dimension_numbers<[1], [0], [0], [1], [0, 0, 1, 1], [], []>} : vector<8x144xf32>, vector<144x128xf32>, vector<8x128xf32> -> vector<8x128xf32>
    %147 = arith.addf %145, %146 : vector<8x128xf32>
    %cst_149 = arith.constant dense<0.000000e+00> : vector<8x128xf32>
    %148 = tpu.matmul %142, %11, %cst_149 {dimension_numbers = #tpu.dot_dimension_numbers<[1], [0], [0], [1], [0, 0, 1, 1], [], []>} : vector<8x144xf32>, vector<144x128xf32>, vector<8x128xf32> -> vector<8x128xf32>
    %149 = arith.addf %147, %148 : vector<8x128xf32>
    %150 = vector.broadcast %13 : vector<1x128xf32> to vector<8x128xf32>
    %151 = arith.addf %149, %150 : vector<8x128xf32>
    %cst_150 = arith.constant 0.000000e+00 : f32
    %152 = vector.broadcast %cst_150 : f32 to vector<8x128xf32>
    %153 = arith.maximumf %151, %152 : vector<8x128xf32>
    %cst_151 = arith.constant dense<0.000000e+00> : vector<8x128xf32>
    %154 = tpu.matmul %140, %7, %cst_151 {dimension_numbers = #tpu.dot_dimension_numbers<[1], [0], [0], [1], [0, 0, 1, 1], [], []>} : vector<8x144xf32>, vector<144x128xf32>, vector<8x128xf32> -> vector<8x128xf32>
    %cst_152 = arith.constant dense<0.000000e+00> : vector<8x128xf32>
    %155 = tpu.matmul %142, %9, %cst_152 {dimension_numbers = #tpu.dot_dimension_numbers<[1], [0], [0], [1], [0, 0, 1, 1], [], []>} : vector<8x144xf32>, vector<144x128xf32>, vector<8x128xf32> -> vector<8x128xf32>
    %156 = arith.addf %154, %155 : vector<8x128xf32>
    %cst_153 = arith.constant dense<0.000000e+00> : vector<8x128xf32>
    %157 = tpu.matmul %144, %11, %cst_153 {dimension_numbers = #tpu.dot_dimension_numbers<[1], [0], [0], [1], [0, 0, 1, 1], [], []>} : vector<8x144xf32>, vector<144x128xf32>, vector<8x128xf32> -> vector<8x128xf32>
    %158 = arith.addf %156, %157 : vector<8x128xf32>
    %159 = vector.broadcast %13 : vector<1x128xf32> to vector<8x128xf32>
    %160 = arith.addf %158, %159 : vector<8x128xf32>
    %cst_154 = arith.constant 0.000000e+00 : f32
    %161 = vector.broadcast %cst_154 : f32 to vector<8x128xf32>
    %162 = arith.maximumf %160, %161 : vector<8x128xf32>
    %163 = arith.maximumf %153, %162 : vector<8x128xf32>
    %164 = vector.extract_strided_slice %163 {offsets = [0, 0], sizes = [8, 64], strides = [1, 1]} : vector<8x128xf32> to vector<8x64xf32>
    %165 = vector.extract_strided_slice %163 {offsets = [0, 64], sizes = [8, 64], strides = [1, 1]} : vector<8x128xf32> to vector<8x64xf32>
    %166 = arith.maximumf %164, %165 : vector<8x64xf32>
    %167 = vector.extract_strided_slice %166 {offsets = [0, 0], sizes = [1, 64], strides = [1, 1]} : vector<8x64xf32> to vector<1x64xf32>
    %c1_155 = arith.constant 1 : index
    %c0_156 = arith.constant 0 : index
    %168 = vector.load %arg11[%c1_155, %c0_156] : memref<2x512xf32, #tpu.memory_space<vmem>>, vector<1x64xf32>
    tpu.vector_store %arg11[%c1_155, %c0_156], %167 {strides = array<i32>} : memref<2x512xf32, #tpu.memory_space<vmem>>, vector<1x64xf32>,
    %169 = vector.extract_strided_slice %166 {offsets = [1, 0], sizes = [1, 64], strides = [1, 1]} : vector<8x64xf32> to vector<1x64xf32>
    %c1_157 = arith.constant 1 : index
    %c64_158 = arith.constant 64 : index
    %170 = vector.load %arg11[%c1_157, %c64_158] : memref<2x512xf32, #tpu.memory_space<vmem>>, vector<1x64xf32>
    tpu.vector_store %arg11[%c1_157, %c64_158], %169 {strides = array<i32>} : memref<2x512xf32, #tpu.memory_space<vmem>>, vector<1x64xf32>,
    %171 = vector.extract_strided_slice %166 {offsets = [2, 0], sizes = [1, 64], strides = [1, 1]} : vector<8x64xf32> to vector<1x64xf32>
    %c1_159 = arith.constant 1 : index
    %c128_160 = arith.constant 128 : index
    %172 = vector.load %arg11[%c1_159, %c128_160] : memref<2x512xf32, #tpu.memory_space<vmem>>, vector<1x64xf32>
    tpu.vector_store %arg11[%c1_159, %c128_160], %171 {strides = array<i32>} : memref<2x512xf32, #tpu.memory_space<vmem>>, vector<1x64xf32>,
    %173 = vector.extract_strided_slice %166 {offsets = [3, 0], sizes = [1, 64], strides = [1, 1]} : vector<8x64xf32> to vector<1x64xf32>
    %c1_161 = arith.constant 1 : index
    %c192_162 = arith.constant 192 : index
    %174 = vector.load %arg11[%c1_161, %c192_162] : memref<2x512xf32, #tpu.memory_space<vmem>>, vector<1x64xf32>
    tpu.vector_store %arg11[%c1_161, %c192_162], %173 {strides = array<i32>} : memref<2x512xf32, #tpu.memory_space<vmem>>, vector<1x64xf32>,
    %175 = vector.extract_strided_slice %166 {offsets = [4, 0], sizes = [1, 64], strides = [1, 1]} : vector<8x64xf32> to vector<1x64xf32>
    %c1_163 = arith.constant 1 : index
    %c256_164 = arith.constant 256 : index
    %176 = vector.load %arg11[%c1_163, %c256_164] : memref<2x512xf32, #tpu.memory_space<vmem>>, vector<1x64xf32>
    tpu.vector_store %arg11[%c1_163, %c256_164], %175 {strides = array<i32>} : memref<2x512xf32, #tpu.memory_space<vmem>>, vector<1x64xf32>,
    %177 = vector.extract_strided_slice %166 {offsets = [5, 0], sizes = [1, 64], strides = [1, 1]} : vector<8x64xf32> to vector<1x64xf32>
    %c1_165 = arith.constant 1 : index
    %c320_166 = arith.constant 320 : index
    %178 = vector.load %arg11[%c1_165, %c320_166] : memref<2x512xf32, #tpu.memory_space<vmem>>, vector<1x64xf32>
    tpu.vector_store %arg11[%c1_165, %c320_166], %177 {strides = array<i32>} : memref<2x512xf32, #tpu.memory_space<vmem>>, vector<1x64xf32>,
    %179 = vector.extract_strided_slice %166 {offsets = [6, 0], sizes = [1, 64], strides = [1, 1]} : vector<8x64xf32> to vector<1x64xf32>
    %c1_167 = arith.constant 1 : index
    %c384_168 = arith.constant 384 : index
    %180 = vector.load %arg11[%c1_167, %c384_168] : memref<2x512xf32, #tpu.memory_space<vmem>>, vector<1x64xf32>
    tpu.vector_store %arg11[%c1_167, %c384_168], %179 {strides = array<i32>} : memref<2x512xf32, #tpu.memory_space<vmem>>, vector<1x64xf32>,
    %181 = vector.extract_strided_slice %166 {offsets = [7, 0], sizes = [1, 64], strides = [1, 1]} : vector<8x64xf32> to vector<1x64xf32>
    %c1_169 = arith.constant 1 : index
    %c448_170 = arith.constant 448 : index
    %182 = vector.load %arg11[%c1_169, %c448_170] : memref<2x512xf32, #tpu.memory_space<vmem>>, vector<1x64xf32>
    tpu.vector_store %arg11[%c1_169, %c448_170], %181 {strides = array<i32>} : memref<2x512xf32, #tpu.memory_space<vmem>>, vector<1x64xf32>,
    %c0_171 = arith.constant 0 : index
    %c0_172 = arith.constant 0 : index
    %183 = vector.load %arg11[%c0_171, %c0_172] : memref<2x512xf32, #tpu.memory_space<vmem>>, vector<2x512xf32>
    %c0_173 = arith.constant 0 : index
    %c0_174 = arith.constant 0 : index
    %184 = vector.load %arg5[%c0_173, %c0_174] : memref<512x32xf32, #tpu.memory_space<vmem>>, vector<512x32xf32>
    %cst_175 = arith.constant dense<0.000000e+00> : vector<2x32xf32>
    %185 = tpu.matmul %183, %184, %cst_175 {dimension_numbers = #tpu.dot_dimension_numbers<[1], [0], [0], [1], [0, 0, 1, 1], [], []>} : vector<2x512xf32>, vector<512x32xf32>, vector<2x32xf32> -> vector<2x32xf32>
    %c0_176 = arith.constant 0 : index
    %c0_177 = arith.constant 0 : index
    %186 = vector.load %arg6[%c0_176, %c0_177] : memref<1x32xf32, #tpu.memory_space<vmem>>, vector<1x32xf32>
    %187 = vector.broadcast %186 : vector<1x32xf32> to vector<2x32xf32>
    %188 = arith.addf %185, %187 : vector<2x32xf32>
    %cst_178 = arith.constant 0.000000e+00 : f32
    %189 = vector.broadcast %cst_178 : f32 to vector<2x32xf32>
    %190 = arith.maximumf %188, %189 : vector<2x32xf32>
    %c0_179 = arith.constant 0 : index
    %c0_180 = arith.constant 0 : index
    %191 = vector.load %arg7[%c0_179, %c0_180] : memref<32x10xf32, #tpu.memory_space<vmem>>, vector<32x10xf32>
    %cst_181 = arith.constant dense<0.000000e+00> : vector<2x10xf32>
    %192 = tpu.matmul %190, %191, %cst_181 {dimension_numbers = #tpu.dot_dimension_numbers<[1], [0], [0], [1], [0, 0, 1, 1], [], []>} : vector<2x32xf32>, vector<32x10xf32>, vector<2x10xf32> -> vector<2x10xf32>
    %c0_182 = arith.constant 0 : index
    %c0_183 = arith.constant 0 : index
    %193 = vector.load %arg8[%c0_182, %c0_183] : memref<1x10xf32, #tpu.memory_space<vmem>>, vector<1x10xf32>
    %194 = vector.broadcast %193 : vector<1x10xf32> to vector<2x10xf32>
    %195 = arith.addf %192, %194 : vector<2x10xf32>
    %c0_184 = arith.constant 0 : index
    %c0_185 = arith.constant 0 : index
    %196 = vector.load %arg9[%c0_184, %c0_185] : memref<2x10xf32, #tpu.memory_space<vmem>>, vector<2x10xf32>
    tpu.vector_store %arg9[%c0_184, %c0_185], %195 {strides = array<i32>} : memref<2x10xf32, #tpu.memory_space<vmem>>, vector<2x10xf32>,
    return
  }
}

</mosaic_0001>

<llo_original>
// kernel: tile.13
$region0: #{tile.13}
  #allocation0 [shape = 's32[1]{0}', space=sflag, size = 0x4, scoped, tag = 'scoped memory for tile.13']
  %s0 = inlined_call_operand.vmem [shape: f32[8], index: 0, kind: input, shape index: {}]
  %s1 = inlined_call_operand.vmem [shape: f32[16,8], index: 1, kind: output, shape index: {}]
  // Predicated region
  $region2: #{tile.13} parent=0 // pred_check
    _
  $region3: #{tile.13} parent=0 // pred_check_branch
    %3 = sbr.rel (0) target = $region5
  $region4: #{tile.13} parent=0 // pred_region
    _
  $region5: #{tile.13} parent=0 // pred_fallthru
    _
  %v4 = vld [vmem:[%s0] ss:$0 sm:$0xff]
  %5 = vst [vmem:[%s1] sm:$0xff] %v4
  %s6 = scalar_lea.vmem %s1, 8
  %7 = vst [vmem:[%s6] sm:$0xff] %v4

// kernel: tile.14
$region0: #{tile.14}
  %s0 = inlined_call_operand.vmem [shape: f32[16,8], index: 0, kind: input, shape index: {}]
  %s1 = inlined_call_operand.vmem [shape: f32[128], index: 1, kind: output, shape index: {}]
  $region1: #{tile.14} parent=0
    #allocation0 [shape = 'u8[4096]{0}', space=vmem, size = 0x1000, scoped, tag = 'scoped mem for output reshape']
    %v2 = vld [vmem:[%s0] sm:$0x1]
    %vm3 = vcmask 64512
    %4 = vst.msk [vmem:[#allocation0] sm:$0x1] %vm3, %v2
    %s5 = scalar_lea.vmem %s0, 15
    %v6 = vld [vmem:[%s5] sm:$0x1]
    %7 = vrot.lane.b32.xlu0 %v6, 120
    %v8 = vpop.permute.xlu0 %7
    %vm9 = vcmask 1048512
    %10 = vst.msk [vmem:[#allocation0] sm:$0x1] %vm9, %v8
    %s11 = scalar_lea.vmem %s0, 14
    %v12 = vld [vmem:[%s11] sm:$0x1]
    %13 = vrot.lane.b32.xlu0 %v12, 112
    %v14 = vpop.permute.xlu0 %13
    %vm15 = vcmask 982912
    %16 = vst.msk [vmem:[#allocation0] sm:$0x1] %vm15, %v14
    %s17 = scalar_lea.vmem %s0, 13
    %v18 = vld [vmem:[%s17] sm:$0x1]
    %19 = vrot.lane.b32.xlu0 %v18, 104
    %v20 = vpop.permute.xlu0 %19
    %vm21 = vcmask 917312
    %22 = vst.msk [vmem:[#allocation0] sm:$0x1] %vm21, %v20
    %s23 = scalar_lea.vmem %s0, 12
    %v24 = vld [vmem:[%s23] sm:$0x1]
    %25 = vrot.lane.b32.xlu0 %v24, 96
    %v26 = vpop.permute.xlu0 %25
    %vm27 = vcmask 851712
    %28 = vst.msk [vmem:[#allocation0] sm:$0x1] %vm27, %v26
    %s29 = scalar_lea.vmem %s0, 11
    %v30 = vld [vmem:[%s29] sm:$0x1]
    %31 = vrot.lane.b32.xlu0 %v30, 88
    %v32 = vpop.permute.xlu0 %31
    %vm33 = vcmask 786112
    %34 = vst.msk [vmem:[#allocation0] sm:$0x1] %vm33, %v32
    %s35 = scalar_lea.vmem %s0, 10
    %v36 = vld [vmem:[%s35] sm:$0x1]
    %37 = vrot.lane.b32.xlu0 %v36, 80
    %v38 = vpop.permute.xlu0 %37
    %vm39 = vcmask 720512
    %40 = vst.msk [vmem:[#allocation0] sm:$0x1] %vm39, %v38
    %s41 = scalar_lea.vmem %s0, 9
    %v42 = vld [vmem:[%s41] sm:$0x1]
    %43 = vrot.lane.b32.xlu0 %v42, 72
    %v44 = vpop.permute.xlu0 %43
    %vm45 = vcmask 654912
    %46 = vst.msk [vmem:[#allocation0] sm:$0x1] %vm45, %v44
    %s47 = scalar_lea.vmem %s0, 8
    %v48 = vld [vmem:[%s47] sm:$0x1]
    %49 = vrot.lane.b32.xlu0 %v48, 64
    %v50 = vpop.permute.xlu0 %49
    %vm51 = vcmask 589312
    %52 = vst.msk [vmem:[#allocation0] sm:$0x1] %vm51, %v50
    %s53 = scalar_lea.vmem %s0, 7
    %v54 = vld [vmem:[%s53] sm:$0x1]
    %55 = vrot.lane.b32.xlu0 %v54, 56
    %v56 = vpop.permute.xlu0 %55
    %vm57 = vcmask 523712
    %58 = vst.msk [vmem:[#allocation0] sm:$0x1] %vm57, %v56
    %s59 = scalar_lea.vmem %s0, 6
    %v60 = vld [vmem:[%s59] sm:$0x1]
    %61 = vrot.lane.b32.xlu0 %v60, 48
    %v62 = vpop.permute.xlu0 %61
    %vm63 = vcmask 458112
    %64 = vst.msk [vmem:[#allocation0] sm:$0x1] %vm63, %v62
    %s65 = scalar_lea.vmem %s0, 5
    %v66 = vld [vmem:[%s65] sm:$0x1]
    %67 = vrot.lane.b32.xlu0 %v66, 40
    %v68 = vpop.permute.xlu0 %67
    %vm69 = vcmask 392512
    %70 = vst.msk [vmem:[#allocation0] sm:$0x1] %vm69, %v68
    %s71 = scalar_lea.vmem %s0, 4
    %v72 = vld [vmem:[%s71] sm:$0x1]
    %73 = vrot.lane.b32.xlu0 %v72, 32
    %v74 = vpop.permute.xlu0 %73
    %vm75 = vcmask 326912
    %76 = vst.msk [vmem:[#allocation0] sm:$0x1] %vm75, %v74
    %s77 = scalar_lea.vmem %s0, 3
    %v78 = vld [vmem:[%s77] sm:$0x1]
    %79 = vrot.lane.b32.xlu0 %v78, 24
    %v80 = vpop.permute.xlu0 %79
    %vm81 = vcmask 261312
    %82 = vst.msk [vmem:[#allocation0] sm:$0x1] %vm81, %v80
    %s83 = scalar_lea.vmem %s0, 2
    %v84 = vld [vmem:[%s83] sm:$0x1]
    %85 = vrot.lane.b32.xlu0 %v84, 16
    %v86 = vpop.permute.xlu0 %85
    %vm87 = vcmask 195712
    %88 = vst.msk [vmem:[#allocation0] sm:$0x1] %vm87, %v86
    %s89 = scalar_lea.vmem %s0, 1
    %v90 = vld [vmem:[%s89] sm:$0x1]
    %91 = vrot.lane.b32.xlu0 %v90, 8
    %v92 = vpop.permute.xlu0 %91
    %vm93 = vcmask 130112
    %94 = vst.msk [vmem:[#allocation0] sm:$0x1] %vm93, %v92
    %s96 = sshllo.u32 0, 1
    %v98 = vld [vmem:[#allocation0] sm:%s96]
    %s99 = sshllo.u32 0, 1
    %100 = vst [vmem:[%s1] sm:%s99] %v98

// kernel: tile.19
$region0: #{tile.19}
  %s0 = inlined_call_operand.vmem [shape: f32[16,8], index: 0, kind: input, shape index: {}]
  %s1 = inlined_call_operand.vmem [shape: f32[1,128], index: 1, kind: output, shape index: {}]
  $region1: #{tile.19} parent=0
    #allocation0 [shape = 'u8[4096]{0}', space=vmem, size = 0x1000, scoped, tag = 'scoped mem for output reshape']
    %v2 = vld [vmem:[%s0] sm:$0x1]
    %vm3 = vcmask 64512
    %4 = vst.msk [vmem:[#allocation0] sm:$0x1] %vm3, %v2
    %s5 = scalar_lea.vmem %s0, 15
    %v6 = vld [vmem:[%s5] sm:$0x1]
    %7 = vrot.lane.b32.xlu0 %v6, 120
    %v8 = vpop.permute.xlu0 %7
    %vm9 = vcmask 1048512
    %10 = vst.msk [vmem:[#allocation0] sm:$0x1] %vm9, %v8
    %s11 = scalar_lea.vmem %s0, 14
    %v12 = vld [vmem:[%s11] sm:$0x1]
    %13 = vrot.lane.b32.xlu0 %v12, 112
    %v14 = vpop.permute.xlu0 %13
    %vm15 = vcmask 982912
    %16 = vst.msk [vmem:[#allocation0] sm:$0x1] %vm15, %v14
    %s17 = scalar_lea.vmem %s0, 13
    %v18 = vld [vmem:[%s17] sm:$0x1]
    %19 = vrot.lane.b32.xlu0 %v18, 104
    %v20 = vpop.permute.xlu0 %19
    %vm21 = vcmask 917312
    %22 = vst.msk [vmem:[#allocation0] sm:$0x1] %vm21, %v20
    %s23 = scalar_lea.vmem %s0, 12
    %v24 = vld [vmem:[%s23] sm:$0x1]
    %25 = vrot.lane.b32.xlu0 %v24, 96
    %v26 = vpop.permute.xlu0 %25
    %vm27 = vcmask 851712
    %28 = vst.msk [vmem:[#allocation0] sm:$0x1] %vm27, %v26
    %s29 = scalar_lea.vmem %s0, 11
    %v30 = vld [vmem:[%s29] sm:$0x1]
    %31 = vrot.lane.b32.xlu0 %v30, 88
    %v32 = vpop.permute.xlu0 %31
    %vm33 = vcmask 786112
    %34 = vst.msk [vmem:[#allocation0] sm:$0x1] %vm33, %v32
    %s35 = scalar_lea.vmem %s0, 10
    %v36 = vld [vmem:[%s35] sm:$0x1]
    %37 = vrot.lane.b32.xlu0 %v36, 80
    %v38 = vpop.permute.xlu0 %37
    %vm39 = vcmask 720512
    %40 = vst.msk [vmem:[#allocation0] sm:$0x1] %vm39, %v38
    %s41 = scalar_lea.vmem %s0, 9
    %v42 = vld [vmem:[%s41] sm:$0x1]
    %43 = vrot.lane.b32.xlu0 %v42, 72
    %v44 = vpop.permute.xlu0 %43
    %vm45 = vcmask 654912
    %46 = vst.msk [vmem:[#allocation0] sm:$0x1] %vm45, %v44
    %s47 = scalar_lea.vmem %s0, 8
    %v48 = vld [vmem:[%s47] sm:$0x1]
    %49 = vrot.lane.b32.xlu0 %v48, 64
    %v50 = vpop.permute.xlu0 %49
    %vm51 = vcmask 589312
    %52 = vst.msk [vmem:[#allocation0] sm:$0x1] %vm51, %v50
    %s53 = scalar_lea.vmem %s0, 7
    %v54 = vld [vmem:[%s53] sm:$0x1]
    %55 = vrot.lane.b32.xlu0 %v54, 56
    %v56 = vpop.permute.xlu0 %55
    %vm57 = vcmask 523712
    %58 = vst.msk [vmem:[#allocation0] sm:$0x1] %vm57, %v56
    %s59 = scalar_lea.vmem %s0, 6
    %v60 = vld [vmem:[%s59] sm:$0x1]
    %61 = vrot.lane.b32.xlu0 %v60, 48
    %v62 = vpop.permute.xlu0 %61
    %vm63 = vcmask 458112
    %64 = vst.msk [vmem:[#allocation0] sm:$0x1] %vm63, %v62
    %s65 = scalar_lea.vmem %s0, 5
    %v66 = vld [vmem:[%s65] sm:$0x1]
    %67 = vrot.lane.b32.xlu0 %v66, 40
    %v68 = vpop.permute.xlu0 %67
    %vm69 = vcmask 392512
    %70 = vst.msk [vmem:[#allocation0] sm:$0x1] %vm69, %v68
    %s71 = scalar_lea.vmem %s0, 4
    %v72 = vld [vmem:[%s71] sm:$0x1]
    %73 = vrot.lane.b32.xlu0 %v72, 32
    %v74 = vpop.permute.xlu0 %73
    %vm75 = vcmask 326912
    %76 = vst.msk [vmem:[#allocation0] sm:$0x1] %vm75, %v74
    %s77 = scalar_lea.vmem %s0, 3
    %v78 = vld [vmem:[%s77] sm:$0x1]
    %79 = vrot.lane.b32.xlu0 %v78, 24
    %v80 = vpop.permute.xlu0 %79
    %vm81 = vcmask 261312
    %82 = vst.msk [vmem:[#allocation0] sm:$0x1] %vm81, %v80
    %s83 = scalar_lea.vmem %s0, 2
    %v84 = vld [vmem:[%s83] sm:$0x1]
    %85 = vrot.lane.b32.xlu0 %v84, 16
    %v86 = vpop.permute.xlu0 %85
    %vm87 = vcmask 195712
    %88 = vst.msk [vmem:[#allocation0] sm:$0x1] %vm87, %v86
    %s89 = scalar_lea.vmem %s0, 1
    %v90 = vld [vmem:[%s89] sm:$0x1]
    %91 = vrot.lane.b32.xlu0 %v90, 8
    %v92 = vpop.permute.xlu0 %91
    %vm93 = vcmask 130112
    %94 = vst.msk [vmem:[#allocation0] sm:$0x1] %vm93, %v92
    %s96 = sshllo.u32 0, 1
    %v98 = vld [vmem:[#allocation0] sm:%s96]
    %s99 = sshllo.u32 0, 1
    %100 = vst [vmem:[%s1] sm:%s99] %v98

// kernel: cnn_forward.1
$region0: #{cnn_forward.1}
  #allocation0 [shape = 'u32[]', space=smem, size = 0x4, offset = 0x4, fixed_abs, tag = 'smem constant byte address 0x4 - core index']
  #allocation1 [shape = 'u32[144,128]{1,0:T(1,128)}', space=vmem, size = 0x12000, scoped, tag = 'internal scratch']
  #allocation2 [shape = 'f32[2,2,9,144]{3,2,1,0:T(8,128)}', space=vmem, size = 0x10000, scoped, tag = 'scratch operand']
  #allocation3 [shape = 'f32[2,512]{1,0:T(2,128)}', space=vmem, size = 0x1000, scoped, tag = 'scratch operand']
  %s0 = inlined_call_operand.vmem [shape: f32[2,2,9,72], index: 0, kind: input, shape index: {}]
  %s1 = inlined_call_operand.vmem [shape: f32[3,72,144], index: 1, kind: input, shape index: {}]
  %s2 = inlined_call_operand.vmem [shape: f32[1,144], index: 2, kind: input, shape index: {}]
  %s3 = inlined_call_operand.vmem [shape: f32[3,144,128], index: 3, kind: input, shape index: {}]
  %s4 = inlined_call_operand.vmem [shape: f32[1,128], index: 4, kind: input, shape index: {}]
  %s5 = inlined_call_operand.vmem [shape: f32[512,32], index: 5, kind: input, shape index: {}]
  %s6 = inlined_call_operand.vmem [shape: f32[1,32], index: 6, kind: input, shape index: {}]
  %s7 = inlined_call_operand.vmem [shape: f32[32,10], index: 7, kind: input, shape index: {}]
  %s8 = inlined_call_operand.vmem [shape: f32[1,10], index: 8, kind: input, shape index: {}]
  %s9 = inlined_call_operand.hbm [shape: f32[2,10], index: 9, kind: output, shape index: {}]
  %s10 = sld [smem:[#allocation0]]
  $region46: #{cnn_forward.1} parent=0
    _
  %s12 = ssub.s32 1, %s10
  %s13 = scalar_select 0, %s12, %s10
  $region1: #{cnn_forward.1} parent=0
    #allocation4 [shape = 'u8[1024]{0}', space=vmem, size = 0x400, scoped, tag = 'output window, operand 0, single buffered']
    #allocation5 [shape = 's32[1]{0}', space=sflag, size = 0x4, scoped, tag = 'scoped memory for cnn_forward.1']
    %14 = vsyncpa [#allocation5], 0
    // Predicated region
    $region2: #{cnn_forward.1} parent=1 // pred_check
      _
    $region3: #{cnn_forward.1} parent=1 // pred_check_branch
      %16 = sbr.rel (0) target = $region5
    $region4: #{cnn_forward.1} parent=1 // pred_region
      _
    $region5: #{cnn_forward.1} parent=1 // pred_fallthru
      _
    // Predicated region
    $region6: #{cnn_forward.1} parent=1 // pred_check
      _
    $region7: #{cnn_forward.1} parent=1 // pred_check_branch
      %18 = sbr.rel (0) target = $region9
    $region8: #{cnn_forward.1} parent=1 // pred_region
      _
    $region9: #{cnn_forward.1} parent=1 // pred_fallthru
      _
    // Predicated region
    $region10: #{cnn_forward.1} parent=1 // pred_check
      _
    $region11: #{cnn_forward.1} parent=1 // pred_check_branch
      %20 = sbr.rel (0) target = $region13
    $region12: #{cnn_forward.1} parent=1 // pred_region
      _
    $region13: #{cnn_forward.1} parent=1 // pred_fallthru
      _
    // Predicated region
    $region14: #{cnn_forward.1} parent=1 // pred_check
      _
    $region15: #{cnn_forward.1} parent=1 // pred_check_branch
      %22 = sbr.rel (0) target = $region17
    $region16: #{cnn_forward.1} parent=1 // pred_region
      _
    $region17: #{cnn_forward.1} parent=1 // pred_fallthru
      _
    // Predicated region
    $region18: #{cnn_forward.1} parent=1 // pred_check
      _
    $region19: #{cnn_forward.1} parent=1 // pred_check_branch
      %24 = sbr.rel (0) target = $region21
    $region20: #{cnn_forward.1} parent=1 // pred_region
      _
    $region21: #{cnn_forward.1} parent=1 // pred_fallthru
      _
    // Predicated region
    $region22: #{cnn_forward.1} parent=1 // pred_check
      _
    $region23: #{cnn_forward.1} parent=1 // pred_check_branch
      %26 = sbr.rel (0) target = $region25
    $region24: #{cnn_forward.1} parent=1 // pred_region
      _
    $region25: #{cnn_forward.1} parent=1 // pred_fallthru
      _
    // Predicated region
    $region26: #{cnn_forward.1} parent=1 // pred_check
      _
    $region27: #{cnn_forward.1} parent=1 // pred_check_branch
      %28 = sbr.rel (0) target = $region29
    $region28: #{cnn_forward.1} parent=1 // pred_region
      _
    $region29: #{cnn_forward.1} parent=1 // pred_fallthru
      _
    // Predicated region
    $region30: #{cnn_forward.1} parent=1 // pred_check
      _
    $region31: #{cnn_forward.1} parent=1 // pred_check_branch
      %30 = sbr.rel (0) target = $region33
    $region32: #{cnn_forward.1} parent=1 // pred_region
      _
    $region33: #{cnn_forward.1} parent=1 // pred_fallthru
      _
    // Predicated region
    $region34: #{cnn_forward.1} parent=1 // pred_check
      _
    $region35: #{cnn_forward.1} parent=1 // pred_check_branch
      %32 = sbr.rel (0) target = $region37
    $region36: #{cnn_forward.1} parent=1 // pred_region
      _
    $region37: #{cnn_forward.1} parent=1 // pred_fallthru
      _
    %v33 = vld [vmem:[%s1] sm:$0xff]
    %v34 = vld [vmem:[%s1 + $0x8] sm:$0xff]
    %v35 = vld [vmem:[%s1 + $0x10] sm:$0xff]
    %v36 = vld [vmem:[%s1 + $0x18] sm:$0xff]
    %v37 = vld [vmem:[%s1 + $0x20] sm:$0xff]
    %v38 = vld [vmem:[%s1 + $0x28] sm:$0xff]
    %v39 = vld [vmem:[%s1 + $0x30] sm:$0xff]
    %v40 = vld [vmem:[%s1 + $0x38] sm:$0xff]
    %v41 = vld [vmem:[%s1 + $0x40] sm:$0xff]
    %v42 = vld [vmem:[%s1 + $0x48] sm:$0xff]
    %v43 = vld [vmem:[%s1 + $0x50] sm:$0xff]
    %v44 = vld [vmem:[%s1 + $0x58] sm:$0xff]
    %v45 = vld [vmem:[%s1 + $0x60] sm:$0xff]
    %v46 = vld [vmem:[%s1 + $0x68] sm:$0xff]
    %v47 = vld [vmem:[%s1 + $0x70] sm:$0xff]
    %v48 = vld [vmem:[%s1 + $0x78] sm:$0xff]
    %v49 = vld [vmem:[%s1 + $0x80] sm:$0xff]
    %v50 = vld [vmem:[%s1 + $0x88] sm:$0xff]
    %s51 = scalar_lea.vmem %s1, 144
    %v52 = vld [vmem:[%s51] sm:$0xff]
    %v53 = vld [vmem:[%s51 + $0x8] sm:$0xff]
    %v54 = vld [vmem:[%s51 + $0x10] sm:$0xff]
    %v55 = vld [vmem:[%s51 + $0x18] sm:$0xff]
    %v56 = vld [vmem:[%s51 + $0x20] sm:$0xff]
    %v57 = vld [vmem:[%s51 + $0x28] sm:$0xff]
    %v58 = vld [vmem:[%s51 + $0x30] sm:$0xff]
    %v59 = vld [vmem:[%s51 + $0x38] sm:$0xff]
    %v60 = vld [vmem:[%s51 + $0x40] sm:$0xff]
    %v61 = vld [vmem:[%s51 + $0x48] sm:$0xff]
    %v62 = vld [vmem:[%s51 + $0x50] sm:$0xff]
    %v63 = vld [vmem:[%s51 + $0x58] sm:$0xff]
    %v64 = vld [vmem:[%s51 + $0x60] sm:$0xff]
    %v65 = vld [vmem:[%s51 + $0x68] sm:$0xff]
    %v66 = vld [vmem:[%s51 + $0x70] sm:$0xff]
    %v67 = vld [vmem:[%s51 + $0x78] sm:$0xff]
    %v68 = vld [vmem:[%s51 + $0x80] sm:$0xff]
    %v69 = vld [vmem:[%s51 + $0x88] sm:$0xff]
    %s70 = scalar_lea.vmem %s1, 288
    %v71 = vld [vmem:[%s70] sm:$0xff]
    %v72 = vld [vmem:[%s70 + $0x8] sm:$0xff]
    %v73 = vld [vmem:[%s70 + $0x10] sm:$0xff]
    %v74 = vld [vmem:[%s70 + $0x18] sm:$0xff]
    %v75 = vld [vmem:[%s70 + $0x20] sm:$0xff]
    %v76 = vld [vmem:[%s70 + $0x28] sm:$0xff]
    %v77 = vld [vmem:[%s70 + $0x30] sm:$0xff]
    %v78 = vld [vmem:[%s70 + $0x38] sm:$0xff]
    %v79 = vld [vmem:[%s70 + $0x40] sm:$0xff]
    %v80 = vld [vmem:[%s70 + $0x48] sm:$0xff]
    %v81 = vld [vmem:[%s70 + $0x50] sm:$0xff]
    %v82 = vld [vmem:[%s70 + $0x58] sm:$0xff]
    %v83 = vld [vmem:[%s70 + $0x60] sm:$0xff]
    %v84 = vld [vmem:[%s70 + $0x68] sm:$0xff]
    %v85 = vld [vmem:[%s70 + $0x70] sm:$0xff]
    %v86 = vld [vmem:[%s70 + $0x78] sm:$0xff]
    %v87 = vld [vmem:[%s70 + $0x80] sm:$0xff]
    %v88 = vld [vmem:[%s70 + $0x88] sm:$0xff]
    %v89 = vld [vmem:[%s3] sm:$0xff]
    %v90 = vld [vmem:[%s3 + $0x8] sm:$0xff]
    %v91 = vld [vmem:[%s3 + $0x10] sm:$0xff]
    %v92 = vld [vmem:[%s3 + $0x18] sm:$0xff]
    %v93 = vld [vmem:[%s3 + $0x20] sm:$0xff]
    %v94 = vld [vmem:[%s3 + $0x28] sm:$0xff]
    %v95 = vld [vmem:[%s3 + $0x30] sm:$0xff]
    %v96 = vld [vmem:[%s3 + $0x38] sm:$0xff]
    %v97 = vld [vmem:[%s3 + $0x40] sm:$0xff]
    %v98 = vld [vmem:[%s3 + $0x48] sm:$0xff]
    %v99 = vld [vmem:[%s3 + $0x50] sm:$0xff]
    %v100 = vld [vmem:[%s3 + $0x58] sm:$0xff]
    %v101 = vld [vmem:[%s3 + $0x60] sm:$0xff]
    %v102 = vld [vmem:[%s3 + $0x68] sm:$0xff]
    %v103 = vld [vmem:[%s3 + $0x70] sm:$0xff]
    %v104 = vld [vmem:[%s3 + $0x78] sm:$0xff]
    %v105 = vld [vmem:[%s3 + $0x80] sm:$0xff]
    %v106 = vld [vmem:[%s3 + $0x88] sm:$0xff]
    %s107 = scalar_lea.vmem %s3, 144
    %v108 = vld [vmem:[%s107] sm:$0xff]
    %v109 = vld [vmem:[%s107 + $0x8] sm:$0xff]
    %v110 = vld [vmem:[%s107 + $0x10] sm:$0xff]
    %v111 = vld [vmem:[%s107 + $0x18] sm:$0xff]
    %v112 = vld [vmem:[%s107 + $0x20] sm:$0xff]
    %v113 = vld [vmem:[%s107 + $0x28] sm:$0xff]
    %v114 = vld [vmem:[%s107 + $0x30] sm:$0xff]
    %v115 = vld [vmem:[%s107 + $0x38] sm:$0xff]
    %v116 = vld [vmem:[%s107 + $0x40] sm:$0xff]
    %v117 = vld [vmem:[%s107 + $0x48] sm:$0xff]
    %v118 = vld [vmem:[%s107 + $0x50] sm:$0xff]
    %v119 = vld [vmem:[%s107 + $0x58] sm:$0xff]
    %v120 = vld [vmem:[%s107 + $0x60] sm:$0xff]
    %v121 = vld [vmem:[%s107 + $0x68] sm:$0xff]
    %v122 = vld [vmem:[%s107 + $0x70] sm:$0xff]
    %v123 = vld [vmem:[%s107 + $0x78] sm:$0xff]
    %v124 = vld [vmem:[%s107 + $0x80] sm:$0xff]
    %v125 = vld [vmem:[%s107 + $0x88] sm:$0xff]
    %s126 = scalar_lea.vmem %s3, 288
    %v127 = vld [vmem:[%s126] sm:$0xff]
    %v128 = vld [vmem:[%s126 + $0x8] sm:$0xff]
    %v129 = vld [vmem:[%s126 + $0x10] sm:$0xff]
    %v130 = vld [vmem:[%s126 + $0x18] sm:$0xff]
    %v131 = vld [vmem:[%s126 + $0x20] sm:$0xff]
    %v132 = vld [vmem:[%s126 + $0x28] sm:$0xff]
    %v133 = vld [vmem:[%s126 + $0x30] sm:$0xff]
    %v134 = vld [vmem:[%s126 + $0x38] sm:$0xff]
    %v135 = vld [vmem:[%s126 + $0x40] sm:$0xff]
    %v136 = vld [vmem:[%s126 + $0x48] sm:$0xff]
    %v137 = vld [vmem:[%s126 + $0x50] sm:$0xff]
    %v138 = vld [vmem:[%s126 + $0x58] sm:$0xff]
    %v139 = vld [vmem:[%s126 + $0x60] sm:$0xff]
    %v140 = vld [vmem:[%s126 + $0x68] sm:$0xff]
    %v141 = vld [vmem:[%s126 + $0x70] sm:$0xff]
    %v142 = vld [vmem:[%s126 + $0x78] sm:$0xff]
    %v143 = vld [vmem:[%s126 + $0x80] sm:$0xff]
    %v144 = vld [vmem:[%s126 + $0x88] sm:$0xff]
    %v145 = vld [vmem:[%s2] sm:$0x3]
    %v146 = vld [vmem:[%s4] sm:$0x1]
    %v147 = vld [vmem:[%s0] sm:$0xff]
    %s148 = scalar_lea.vmem %s0, 32
    %v149 = vld [vmem:[%s148] sm:$0xff]
    %v150 = vld [vmem:[%s0 + $0x1] sm:$0xff]
    %v151 = vld [vmem:[%s148 + $0x1] sm:$0xff]
    %vm152 = vcmask 588800
    %v154 = vsel %vm152, %v149, 0
    %156 = vmatprep.subr.mxu0 %v53
    %157 = vmatpush1.msra.mxu0 %v52
    %158 = vmatprep.subr.mxu0 %v55
    %159 = vmatpush1.msra.mxu0 %v54
    %160 = vmatprep.subr.mxu0 %v57
    %161 = vmatpush1.msra.mxu0 %v56
    %162 = vmatprep.subr.mxu0 %v59
    %163 = vmatpush1.msra.mxu0 %v58
    %164 = vmatprep.subr.mxu0 %v61
    %165 = vmatpush1.msra.mxu0 %v60
    %166 = vmatprep.subr.mxu0 %v63
    %167 = vmatpush1.msra.mxu0 %v62
    %168 = vmatprep.subr.mxu0 %v65
    %169 = vmatpush1.msra.mxu0 %v64
    %170 = vmatprep.subr.mxu0 %v67
    %171 = vmatpush1.msra.mxu0 %v66
    %172 = vmatprep.subr.mxu0 %v69
    %173 = vmatpush1.msra.mxu0 %v68
    %174 = vmatprep.subr.mxu0 0.0
    %175 = vmatpush1.msra.mxu0 0.0
    %176 = vmatprep.subr.mxu0 0.0
    %177 = vmatpush1.msra.mxu0 0.0
    %178 = vmatprep.subr.mxu0 0.0
    %179 = vmatpush1.msra.mxu0 0.0
    %180 = vmatprep.subr.mxu0 0.0
    %181 = vmatpush1.msra.mxu0 0.0
    %182 = vmatprep.subr.mxu0 0.0
    %183 = vmatpush1.msra.mxu0 0.0
    %184 = vmatprep.subr.mxu0 0.0
    %185 = vmatpush1.msra.mxu0 0.0
    %186 = vmatprep.subr.mxu0 0.0
    %187 = vmatpush1.msra.mxu0 0.0
    %188 = vmatprep.subr.mxu0 0.0
    %189 = vmatpush1.msra.mxu0 0.0
    %190 = vmatprep.subr.mxu0 0.0
    %191 = vmatpush1.msra.mxu0 0.0
    %192 = vmatprep.subr.mxu0 0.0
    %193 = vmatpush1.msra.mxu0 0.0
    %194 = vmatprep.subr.mxu0 0.0
    %195 = vmatpush1.msra.mxu0 0.0
    %196 = vmatprep.subr.mxu0 0.0
    %197 = vmatpush1.msra.mxu0 0.0
    %198 = vmatprep.subr.mxu0 0.0
    %199 = vmatpush1.msra.mxu0 0.0
    %200 = vmatprep.subr.mxu0 0.0
    %201 = vmatpush1.msra.mxu0 0.0
    %202 = vmatprep.subr.mxu0 0.0
    %203 = vmatpush1.msra.mxu0 0.0
    %204 = vmatprep.subr.mxu0 0.0
    %205 = vmatpush1.msra.mxu0 0.0
    %206 = vmatprep.subr.mxu0 0.0
    %207 = vmatpush1.msra.mxu0 0.0
    %208 = vmatprep.subr.mxu0 0.0
    %209 = vmatpush1.msra.mxu0 0.0
    %210 = vmatprep.subr.mxu0 0.0
    %211 = vmatpush1.msra.mxu0 0.0
    %212 = vmatprep.subr.mxu0 0.0
    %213 = vmatpush1.msra.mxu0 0.0
    %214 = vmatprep.subr.mxu0 0.0
    %215 = vmatpush1.msra.mxu0 0.0
    %216 = vmatprep.subr.mxu0 0.0
    %217 = vmatpush1.msra.mxu0 0.0
    %218 = vmatprep.subr.mxu0 0.0
    %219 = vmatpush1.msra.mxu0 0.0
    %220 = vmatprep.mubr.f32.mxu0 0.0
    %221 = vmatmul.mubr.f32.gmra.mrb[0].mxu0 %v154
    %v222 = vpop.f32.mrb[0].mxu0
    %v223 = vadd.f32 0.0, %v222
    %v224 = vpop.f32.mrb[0].mxu0
    %v225 = vadd.f32 0.0, %v224
    %226 = vdwg.mxu0
    %v228 = vsel %vm152, %v147, 0
    %230 = vmatprep.subr.mxu0 %v34
    %231 = vmatpush1.msra.mxu0 %v33
    %232 = vmatprep.subr.mxu0 %v36
    %233 = vmatpush1.msra.mxu0 %v35
    %234 = vmatprep.subr.mxu0 %v38
    %235 = vmatpush1.msra.mxu0 %v37
    %236 = vmatprep.subr.mxu0 %v40
    %237 = vmatpush1.msra.mxu0 %v39
    %238 = vmatprep.subr.mxu0 %v42
    %239 = vmatpush1.msra.mxu0 %v41
    %240 = vmatprep.subr.mxu0 %v44
    %241 = vmatpush1.msra.mxu0 %v43
    %242 = vmatprep.subr.mxu0 %v46
    %243 = vmatpush1.msra.mxu0 %v45
    %244 = vmatprep.subr.mxu0 %v48
    %245 = vmatpush1.msra.mxu0 %v47
    %246 = vmatprep.subr.mxu0 %v50
    %247 = vmatpush1.msra.mxu0 %v49
    %248 = vmatprep.subr.mxu0 0.0
    %249 = vmatpush1.msra.mxu0 0.0
    %250 = vmatprep.subr.mxu0 0.0
    %251 = vmatpush1.msra.mxu0 0.0
    %252 = vmatprep.subr.mxu0 0.0
    %253 = vmatpush1.msra.mxu0 0.0
    %254 = vmatprep.subr.mxu0 0.0
    %255 = vmatpush1.msra.mxu0 0.0
    %256 = vmatprep.subr.mxu0 0.0
    %257 = vmatpush1.msra.mxu0 0.0
    %258 = vmatprep.subr.mxu0 0.0
    %259 = vmatpush1.msra.mxu0 0.0
    %260 = vmatprep.subr.mxu0 0.0
    %261 = vmatpush1.msra.mxu0 0.0
    %262 = vmatprep.subr.mxu0 0.0
    %263 = vmatpush1.msra.mxu0 0.0
    %264 = vmatprep.subr.mxu0 0.0
    %265 = vmatpush1.msra.mxu0 0.0
    %266 = vmatprep.subr.mxu0 0.0
    %267 = vmatpush1.msra.mxu0 0.0
    %268 = vmatprep.subr.mxu0 0.0
    %269 = vmatpush1.msra.mxu0 0.0
    %270 = vmatprep.subr.mxu0 0.0
    %271 = vmatpush1.msra.mxu0 0.0
    %272 = vmatprep.subr.mxu0 0.0
    %273 = vmatpush1.msra.mxu0 0.0
    %274 = vmatprep.subr.mxu0 0.0
    %275 = vmatpush1.msra.mxu0 0.0
    %276 = vmatprep.subr.mxu0 0.0
    %277 = vmatpush1.msra.mxu0 0.0
    %278 = vmatprep.subr.mxu0 0.0
    %279 = vmatpush1.msra.mxu0 0.0
    %280 = vmatprep.subr.mxu0 0.0
    %281 = vmatpush1.msra.mxu0 0.0
    %282 = vmatprep.subr.mxu0 0.0
    %283 = vmatpush1.msra.mxu0 0.0
    %284 = vmatprep.subr.mxu0 0.0
    %285 = vmatpush1.msra.mxu0 0.0
    %286 = vmatprep.subr.mxu0 0.0
    %287 = vmatpush1.msra.mxu0 0.0
    %288 = vmatprep.subr.mxu0 0.0
    %289 = vmatpush1.msra.mxu0 0.0
    %290 = vmatprep.subr.mxu0 0.0
    %291 = vmatpush1.msra.mxu0 0.0
    %292 = vmatprep.subr.mxu0 0.0
    %293 = vmatpush1.msra.mxu0 0.0
    %294 = vmatprep.mubr.f32.mxu0 0.0
    %295 = vmatmul.mubr.f32.gmra.mrb[0].mxu0 %v228
    %v296 = vpop.f32.mrb[0].mxu0
    %v297 = vadd.f32 %v223, %v296
    %v298 = vpop.f32.mrb[0].mxu0
    %v299 = vadd.f32 %v225, %v298
    %300 = vdwg.mxu0
    %v302 = vsel %vm152, %v150, 0
    %304 = vmatprep.subr.mxu0 %v72
    %305 = vmatpush1.msra.mxu0 %v71
    %306 = vmatprep.subr.mxu0 %v74
    %307 = vmatpush1.msra.mxu0 %v73
    %308 = vmatprep.subr.mxu0 %v76
    %309 = vmatpush1.msra.mxu0 %v75
    %310 = vmatprep.subr.mxu0 %v78
    %311 = vmatpush1.msra.mxu0 %v77
    %312 = vmatprep.subr.mxu0 %v80
    %313 = vmatpush1.msra.mxu0 %v79
    %314 = vmatprep.subr.mxu0 %v82
    %315 = vmatpush1.msra.mxu0 %v81
    %316 = vmatprep.subr.mxu0 %v84
    %317 = vmatpush1.msra.mxu0 %v83
    %318 = vmatprep.subr.mxu0 %v86
    %319 = vmatpush1.msra.mxu0 %v85
    %320 = vmatprep.subr.mxu0 %v88
    %321 = vmatpush1.msra.mxu0 %v87
    %322 = vmatprep.subr.mxu0 0.0
    %323 = vmatpush1.msra.mxu0 0.0
    %324 = vmatprep.subr.mxu0 0.0
    %325 = vmatpush1.msra.mxu0 0.0
    %326 = vmatprep.subr.mxu0 0.0
    %327 = vmatpush1.msra.mxu0 0.0
    %328 = vmatprep.subr.mxu0 0.0
    %329 = vmatpush1.msra.mxu0 0.0
    %330 = vmatprep.subr.mxu0 0.0
    %331 = vmatpush1.msra.mxu0 0.0
    %332 = vmatprep.subr.mxu0 0.0
    %333 = vmatpush1.msra.mxu0 0.0
    %334 = vmatprep.subr.mxu0 0.0
    %335 = vmatpush1.msra.mxu0 0.0
    %336 = vmatprep.subr.mxu0 0.0
    %337 = vmatpush1.msra.mxu0 0.0
    %338 = vmatprep.subr.mxu0 0.0
    %339 = vmatpush1.msra.mxu0 0.0
    %340 = vmatprep.subr.mxu0 0.0
    %341 = vmatpush1.msra.mxu0 0.0
    %342 = vmatprep.subr.mxu0 0.0
    %343 = vmatpush1.msra.mxu0 0.0
    %344 = vmatprep.subr.mxu0 0.0
    %345 = vmatpush1.msra.mxu0 0.0
    %346 = vmatprep.subr.mxu0 0.0
    %347 = vmatpush1.msra.mxu0 0.0
    %348 = vmatprep.subr.mxu0 0.0
    %349 = vmatpush1.msra.mxu0 0.0
    %350 = vmatprep.subr.mxu0 0.0
    %351 = vmatpush1.msra.mxu0 0.0
    %352 = vmatprep.subr.mxu0 0.0
    %353 = vmatpush1.msra.mxu0 0.0
    %354 = vmatprep.subr.mxu0 0.0
    %355 = vmatpush1.msra.mxu0 0.0
    %356 = vmatprep.subr.mxu0 0.0
    %357 = vmatpush1.msra.mxu0 0.0
    %358 = vmatprep.subr.mxu0 0.0
    %359 = vmatpush1.msra.mxu0 0.0
    %360 = vmatprep.subr.mxu0 0.0
    %361 = vmatpush1.msra.mxu0 0.0
    %362 = vmatprep.subr.mxu0 0.0
    %363 = vmatpush1.msra.mxu0 0.0
    %364 = vmatprep.subr.mxu0 0.0
    %365 = vmatpush1.msra.mxu0 0.0
    %366 = vmatprep.subr.mxu0 0.0
    %367 = vmatpush1.msra.mxu0 0.0
    %368 = vmatprep.mubr.f32.mxu0 0.0
    %369 = vmatmul.mubr.f32.gmra.mrb[0].mxu0 %v302
    %v370 = vpop.f32.mrb[0].mxu0
    %v371 = vadd.f32 0.0, %v370
    %v372 = vpop.f32.mrb[0].mxu0
    %v373 = vadd.f32 0.0, %v372
    %374 = vdwg.mxu0
    %v375 = vadd.f32 %v297, %v371
    %v376 = vadd.f32 %v299, %v373
    %v378 = vlaneseq
    %v379 = vshrl.u32 %v378, 7
    %v380 = vsub.s32 0, %v379
    %v381 = vrot.slane %v145, %v380
    %v382 = vlaneseq
    %v383 = vshrl.u32 %v382, 7
    %v384 = vsub.s32 1, %v383
    %v385 = vrot.slane %v145, %v384
    %v388 = vadd.f32 %v375, %v381
    %v389 = vadd.f32 %v376, %v385
    %v390 = vmax.f32 %v388, 0.0
    %v391 = vmax.f32 %v389, 0.0
    %392 = vmatprep.subr.mxu0 %v53
    %393 = vmatpush1.msra.mxu0 %v52
    %394 = vmatprep.subr.mxu0 %v55
    %395 = vmatpush1.msra.mxu0 %v54
    %396 = vmatprep.subr.mxu0 %v57
    %397 = vmatpush1.msra.mxu0 %v56
    %398 = vmatprep.subr.mxu0 %v59
    %399 = vmatpush1.msra.mxu0 %v58
    %400 = vmatprep.subr.mxu0 %v61
    %401 = vmatpush1.msra.mxu0 %v60
    %402 = vmatprep.subr.mxu0 %v63
    %403 = vmatpush1.msra.mxu0 %v62
    %404 = vmatprep.subr.mxu0 %v65
    %405 = vmatpush1.msra.mxu0 %v64
    %406 = vmatprep.subr.mxu0 %v67
    %407 = vmatpush1.msra.mxu0 %v66
    %408 = vmatprep.subr.mxu0 %v69
    %409 = vmatpush1.msra.mxu0 %v68
    %410 = vmatprep.subr.mxu0 0.0
    %411 = vmatpush1.msra.mxu0 0.0
    %412 = vmatprep.subr.mxu0 0.0
    %413 = vmatpush1.msra.mxu0 0.0
    %414 = vmatprep.subr.mxu0 0.0
    %415 = vmatpush1.msra.mxu0 0.0
    %416 = vmatprep.subr.mxu0 0.0
    %417 = vmatpush1.msra.mxu0 0.0
    %418 = vmatprep.subr.mxu0 0.0
    %419 = vmatpush1.msra.mxu0 0.0
    %420 = vmatprep.subr.mxu0 0.0
    %421 = vmatpush1.msra.mxu0 0.0
    %422 = vmatprep.subr.mxu0 0.0
    %423 = vmatpush1.msra.mxu0 0.0
    %424 = vmatprep.subr.mxu0 0.0
    %425 = vmatpush1.msra.mxu0 0.0
    %426 = vmatprep.subr.mxu0 0.0
    %427 = vmatpush1.msra.mxu0 0.0
    %428 = vmatprep.subr.mxu0 0.0
    %429 = vmatpush1.msra.mxu0 0.0
    %430 = vmatprep.subr.mxu0 0.0
    %431 = vmatpush1.msra.mxu0 0.0
    %432 = vmatprep.subr.mxu0 0.0
    %433 = vmatpush1.msra.mxu0 0.0
    %434 = vmatprep.subr.mxu0 0.0
    %435 = vmatpush1.msra.mxu0 0.0
    %436 = vmatprep.subr.mxu0 0.0
    %437 = vmatpush1.msra.mxu0 0.0
    %438 = vmatprep.subr.mxu0 0.0
    %439 = vmatpush1.msra.mxu0 0.0
    %440 = vmatprep.subr.mxu0 0.0
    %441 = vmatpush1.msra.mxu0 0.0
    %442 = vmatprep.subr.mxu0 0.0
    %443 = vmatpush1.msra.mxu0 0.0
    %444 = vmatprep.subr.mxu0 0.0
    %445 = vmatpush1.msra.mxu0 0.0
    %446 = vmatprep.subr.mxu0 0.0
    %447 = vmatpush1.msra.mxu0 0.0
    %448 = vmatprep.subr.mxu0 0.0
    %449 = vmatpush1.msra.mxu0 0.0
    %450 = vmatprep.subr.mxu0 0.0
    %451 = vmatpush1.msra.mxu0 0.0
    %452 = vmatprep.subr.mxu0 0.0
    %453 = vmatpush1.msra.mxu0 0.0
    %454 = vmatprep.subr.mxu0 0.0
    %455 = vmatpush1.msra.mxu0 0.0
    %456 = vmatprep.mubr.f32.mxu0 0.0
    %457 = vmatmul.mubr.f32.gmra.mrb[0].mxu0 %v302
    %v458 = vpop.f32.mrb[0].mxu0
    %v459 = vadd.f32 0.0, %v458
    %v460 = vpop.f32.mrb[0].mxu0
    %v461 = vadd.f32 0.0, %v460
    %462 = vdwg.mxu0
    %463 = vmatprep.subr.mxu0 %v34
    %464 = vmatpush1.msra.mxu0 %v33
    %465 = vmatprep.subr.mxu0 %v36
    %466 = vmatpush1.msra.mxu0 %v35
    %467 = vmatprep.subr.mxu0 %v38
    %468 = vmatpush1.msra.mxu0 %v37
    %469 = vmatprep.subr.mxu0 %v40
    %470 = vmatpush1.msra.mxu0 %v39
    %471 = vmatprep.subr.mxu0 %v42
    %472 = vmatpush1.msra.mxu0 %v41
    %473 = vmatprep.subr.mxu0 %v44
    %474 = vmatpush1.msra.mxu0 %v43
    %475 = vmatprep.subr.mxu0 %v46
    %476 = vmatpush1.msra.mxu0 %v45
    %477 = vmatprep.subr.mxu0 %v48
    %478 = vmatpush1.msra.mxu0 %v47
    %479 = vmatprep.subr.mxu0 %v50
    %480 = vmatpush1.msra.mxu0 %v49
    %481 = vmatprep.subr.mxu0 0.0
    %482 = vmatpush1.msra.mxu0 0.0
    %483 = vmatprep.subr.mxu0 0.0
    %484 = vmatpush1.msra.mxu0 0.0
    %485 = vmatprep.subr.mxu0 0.0
    %486 = vmatpush1.msra.mxu0 0.0
    %487 = vmatprep.subr.mxu0 0.0
    %488 = vmatpush1.msra.mxu0 0.0
    %489 = vmatprep.subr.mxu0 0.0
    %490 = vmatpush1.msra.mxu0 0.0
    %491 = vmatprep.subr.mxu0 0.0
    %492 = vmatpush1.msra.mxu0 0.0
    %493 = vmatprep.subr.mxu0 0.0
    %494 = vmatpush1.msra.mxu0 0.0
    %495 = vmatprep.subr.mxu0 0.0
    %496 = vmatpush1.msra.mxu0 0.0
    %497 = vmatprep.subr.mxu0 0.0
    %498 = vmatpush1.msra.mxu0 0.0
    %499 = vmatprep.subr.mxu0 0.0
    %500 = vmatpush1.msra.mxu0 0.0
    %501 = vmatprep.subr.mxu0 0.0
    %502 = vmatpush1.msra.mxu0 0.0
    %503 = vmatprep.subr.mxu0 0.0
    %504 = vmatpush1.msra.mxu0 0.0
    %505 = vmatprep.subr.mxu0 0.0
    %506 = vmatpush1.msra.mxu0 0.0
    %507 = vmatprep.subr.mxu0 0.0
    %508 = vmatpush1.msra.mxu0 0.0
    %509 = vmatprep.subr.mxu0 0.0
    %510 = vmatpush1.msra.mxu0 0.0
    %511 = vmatprep.subr.mxu0 0.0
    %512 = vmatpush1.msra.mxu0 0.0
    %513 = vmatprep.subr.mxu0 0.0
    %514 = vmatpush1.msra.mxu0 0.0
    %515 = vmatprep.subr.mxu0 0.0
    %516 = vmatpush1.msra.mxu0 0.0
    %517 = vmatprep.subr.mxu0 0.0
    %518 = vmatpush1.msra.mxu0 0.0
    %519 = vmatprep.subr.mxu0 0.0
    %520 = vmatpush1.msra.mxu0 0.0
    %521 = vmatprep.subr.mxu0 0.0
    %522 = vmatpush1.msra.mxu0 0.0
    %523 = vmatprep.subr.mxu0 0.0
    %524 = vmatpush1.msra.mxu0 0.0
    %525 = vmatprep.subr.mxu0 0.0
    %526 = vmatpush1.msra.mxu0 0.0
    %527 = vmatprep.mubr.f32.mxu0 0.0
    %528 = vmatmul.mubr.f32.gmra.mrb[0].mxu0 %v154
    %v529 = vpop.f32.mrb[0].mxu0
    %v530 = vadd.f32 %v459, %v529
    %v531 = vpop.f32.mrb[0].mxu0
    %v532 = vadd.f32 %v461, %v531
    %533 = vdwg.mxu0
    %v535 = vsel %vm152, %v151, 0
    %537 = vmatprep.subr.mxu0 %v72
    %538 = vmatpush1.msra.mxu0 %v71
    %539 = vmatprep.subr.mxu0 %v74
    %540 = vmatpush1.msra.mxu0 %v73
    %541 = vmatprep.subr.mxu0 %v76
    %542 = vmatpush1.msra.mxu0 %v75
    %543 = vmatprep.subr.mxu0 %v78
    %544 = vmatpush1.msra.mxu0 %v77
    %545 = vmatprep.subr.mxu0 %v80
    %546 = vmatpush1.msra.mxu0 %v79
    %547 = vmatprep.subr.mxu0 %v82
    %548 = vmatpush1.msra.mxu0 %v81
    %549 = vmatprep.subr.mxu0 %v84
    %550 = vmatpush1.msra.mxu0 %v83
    %551 = vmatprep.subr.mxu0 %v86
    %552 = vmatpush1.msra.mxu0 %v85
    %553 = vmatprep.subr.mxu0 %v88
    %554 = vmatpush1.msra.mxu0 %v87
    %555 = vmatprep.subr.mxu0 0.0
    %556 = vmatpush1.msra.mxu0 0.0
    %557 = vmatprep.subr.mxu0 0.0
    %558 = vmatpush1.msra.mxu0 0.0
    %559 = vmatprep.subr.mxu0 0.0
    %560 = vmatpush1.msra.mxu0 0.0
    %561 = vmatprep.subr.mxu0 0.0
    %562 = vmatpush1.msra.mxu0 0.0
    %563 = vmatprep.subr.mxu0 0.0
    %564 = vmatpush1.msra.mxu0 0.0
    %565 = vmatprep.subr.mxu0 0.0
    %566 = vmatpush1.msra.mxu0 0.0
    %567 = vmatprep.subr.mxu0 0.0
    %568 = vmatpush1.msra.mxu0 0.0
    %569 = vmatprep.subr.mxu0 0.0
    %570 = vmatpush1.msra.mxu0 0.0
    %571 = vmatprep.subr.mxu0 0.0
    %572 = vmatpush1.msra.mxu0 0.0
    %573 = vmatprep.subr.mxu0 0.0
    %574 = vmatpush1.msra.mxu0 0.0
    %575 = vmatprep.subr.mxu0 0.0
    %576 = vmatpush1.msra.mxu0 0.0
    %577 = vmatprep.subr.mxu0 0.0
    %578 = vmatpush1.msra.mxu0 0.0
    %579 = vmatprep.subr.mxu0 0.0
    %580 = vmatpush1.msra.mxu0 0.0
    %581 = vmatprep.subr.mxu0 0.0
    %582 = vmatpush1.msra.mxu0 0.0
    %583 = vmatprep.subr.mxu0 0.0
    %584 = vmatpush1.msra.mxu0 0.0
    %585 = vmatprep.subr.mxu0 0.0
    %586 = vmatpush1.msra.mxu0 0.0
    %587 = vmatprep.subr.mxu0 0.0
    %588 = vmatpush1.msra.mxu0 0.0
    %589 = vmatprep.subr.mxu0 0.0
    %590 = vmatpush1.msra.mxu0 0.0
    %591 = vmatprep.subr.mxu0 0.0
    %592 = vmatpush1.msra.mxu0 0.0
    %593 = vmatprep.subr.mxu0 0.0
    %594 = vmatpush1.msra.mxu0 0.0
    %595 = vmatprep.subr.mxu0 0.0
    %596 = vmatpush1.msra.mxu0 0.0
    %597 = vmatprep.subr.mxu0 0.0
    %598 = vmatpush1.msra.mxu0 0.0
    %599 = vmatprep.subr.mxu0 0.0
    %600 = vmatpush1.msra.mxu0 0.0
    %601 = vmatprep.mubr.f32.mxu0 0.0
    %602 = vmatmul.mubr.f32.gmra.mrb[0].mxu0 %v535
    %v603 = vpop.f32.mrb[0].mxu0
    %v604 = vadd.f32 0.0, %v603
    %v605 = vpop.f32.mrb[0].mxu0
    %v606 = vadd.f32 0.0, %v605
    %607 = vdwg.mxu0
    %v608 = vadd.f32 %v530, %v604
    %v609 = vadd.f32 %v532, %v606
    %v610 = vadd.f32 %v608, %v381
    %v611 = vadd.f32 %v609, %v385
    %v612 = vmax.f32 %v610, 0.0
    %v613 = vmax.f32 %v611, 0.0
    %s614 = scalar_lea.vmem [#allocation2], 64
    %615 = vst [vmem:[%s614] sm:$0xff] %v390
    %vm616 = vcmask 130048
    %617 = vst.msk [vmem:[%s614 + $0x8] sm:$0xff] %vm616, %v391
    %v620 = vrot.slane %v612, 7
    %v621 = vrot.slane %v613, 7
    %624 = vst [vmem:[#allocation2] sm:$0xfe] %v620
    %vm625 = vcmask 130049
    %626 = vst.msk [vmem:[#allocation2 + $0x8] sm:$0xfe] %vm625, %v621
    %627 = vst [vmem:[#allocation2 + $0x10] sm:$0x1] %v620
    %vm628 = vcmask 122880
    %629 = vst.msk [vmem:[#allocation2 + $0x18] sm:$0x1] %vm628, %v621
    %v630 = vlaneseq
    %vm631 = vcmp.ge.s32.totalorder %v630, 0
    %vm632 = vcmp.lt.s32.totalorder %v630, 144
    %vm633 = vmand %vm631, %vm632
    %634 = vst.msk [vmem:[#allocation2] ss:$8 sm:$0x3] %vm633, 0.0
    %635 = vst.msk [vmem:[#allocation2] ss:$8 sm:$0x0] %vm633, 0.0
    %s636 = scalar_lea.vmem %s614, 16 [#allocation2]
    %637 = vst.msk [vmem:[%s636] ss:$8 sm:$0x3] %vm633, 0.0
    %638 = vst.msk [vmem:[%s636] ss:$8 sm:$0x0] %vm633, 0.0
    %v639 = vld [vmem:[#allocation2] sm:$0xff]
    %v640 = vld [vmem:[#allocation2 + $0x8] sm:$0xff]
    %v641 = vld [vmem:[%s614] sm:$0xff]
    %v642 = vld [vmem:[%s614 + $0x8] sm:$0xff]
    %v643 = vld [vmem:[#allocation2] sm:$0xfe]
    %v644 = vld [vmem:[#allocation2 + $0x8] sm:$0xfe]
    %v645 = vld [vmem:[#allocation2 + $0x10] sm:$0x1]
    %v646 = vld [vmem:[#allocation2 + $0x18] sm:$0x1]
    %v647 = vld [vmem:[%s614] sm:$0xfe]
    %v648 = vld [vmem:[%s614 + $0x8] sm:$0xfe]
    %v649 = vld [vmem:[%s614 + $0x10] sm:$0x1]
    %v650 = vld [vmem:[%s614 + $0x18] sm:$0x1]
    %v652 = vsel %vm616, %v642, 0
    %654 = vmatprep.subr.mxu0 0.0
    %655 = vmatpush1.msra.mxu0 %v108
    %656 = vmatprep.subr.mxu0 0.0
    %657 = vmatpush1.msra.mxu0 %v109
    %658 = vmatprep.subr.mxu0 0.0
    %659 = vmatpush1.msra.mxu0 %v110
    %660 = vmatprep.subr.mxu0 0.0
    %661 = vmatpush1.msra.mxu0 %v111
    %662 = vmatprep.subr.mxu0 0.0
    %663 = vmatpush1.msra.mxu0 %v112
    %664 = vmatprep.subr.mxu0 0.0
    %665 = vmatpush1.msra.mxu0 %v113
    %666 = vmatprep.subr.mxu0 0.0
    %667 = vmatpush1.msra.mxu0 %v114
    %668 = vmatprep.subr.mxu0 0.0
    %669 = vmatpush1.msra.mxu0 %v115
    %670 = vmatprep.subr.mxu0 0.0
    %671 = vmatpush1.msra.mxu0 %v116
    %672 = vmatprep.subr.mxu0 0.0
    %673 = vmatpush1.msra.mxu0 %v117
    %674 = vmatprep.subr.mxu0 0.0
    %675 = vmatpush1.msra.mxu0 %v118
    %676 = vmatprep.subr.mxu0 0.0
    %677 = vmatpush1.msra.mxu0 %v119
    %678 = vmatprep.subr.mxu0 0.0
    %679 = vmatpush1.msra.mxu0 %v120
    %680 = vmatprep.subr.mxu0 0.0
    %681 = vmatpush1.msra.mxu0 %v121
    %682 = vmatprep.subr.mxu0 0.0
    %683 = vmatpush1.msra.mxu0 %v122
    %684 = vmatprep.subr.mxu0 0.0
    %685 = vmatpush1.msra.mxu0 %v123
    %686 = vmatprep.subr.mxu0 0.0
    %687 = vmatpush1.msra.mxu0 %v124
    %688 = vmatprep.subr.mxu0 0.0
    %689 = vmatpush1.msra.mxu0 %v125
    %690 = vmatprep.subr.mxu0 0.0
    %691 = vmatpush1.msra.mxu0 0.0
    %692 = vmatprep.subr.mxu0 0.0
    %693 = vmatpush1.msra.mxu0 0.0
    %694 = vmatprep.subr.mxu0 0.0
    %695 = vmatpush1.msra.mxu0 0.0
    %696 = vmatprep.subr.mxu0 0.0
    %697 = vmatpush1.msra.mxu0 0.0
    %698 = vmatprep.subr.mxu0 0.0
    %699 = vmatpush1.msra.mxu0 0.0
    %700 = vmatprep.subr.mxu0 0.0
    %701 = vmatpush1.msra.mxu0 0.0
    %702 = vmatprep.subr.mxu0 0.0
    %703 = vmatpush1.msra.mxu0 0.0
    %704 = vmatprep.subr.mxu0 0.0
    %705 = vmatpush1.msra.mxu0 0.0
    %706 = vmatprep.subr.mxu0 0.0
    %707 = vmatpush1.msra.mxu0 0.0
    %708 = vmatprep.subr.mxu0 0.0
    %709 = vmatpush1.msra.mxu0 0.0
    %710 = vmatprep.subr.mxu0 0.0
    %711 = vmatpush1.msra.mxu0 0.0
    %712 = vmatprep.subr.mxu0 0.0
    %713 = vmatpush1.msra.mxu0 0.0
    %714 = vmatprep.subr.mxu0 0.0
    %715 = vmatpush1.msra.mxu0 0.0
    %716 = vmatprep.subr.mxu0 0.0
    %717 = vmatpush1.msra.mxu0 0.0
    %718 = vmatprep.mubr.f32.mxu0 %v652
    %719 = vmatmul.mubr.f32.gmra.mrb[0].mxu0 %v641
    %v720 = vpop.f32.mrb[0].mxu0
    %v721 = vadd.f32 0.0, %v720
    %v722 = vpop.f32.mrb[0].mxu0
    %723 = vdwg.mxu0
    %v725 = vsel %vm616, %v640, 0
    %727 = vmatprep.subr.mxu0 0.0
    %728 = vmatpush1.msra.mxu0 %v89
    %729 = vmatprep.subr.mxu0 0.0
    %730 = vmatpush1.msra.mxu0 %v90
    %731 = vmatprep.subr.mxu0 0.0
    %732 = vmatpush1.msra.mxu0 %v91
    %733 = vmatprep.subr.mxu0 0.0
    %734 = vmatpush1.msra.mxu0 %v92
    %735 = vmatprep.subr.mxu0 0.0
    %736 = vmatpush1.msra.mxu0 %v93
    %737 = vmatprep.subr.mxu0 0.0
    %738 = vmatpush1.msra.mxu0 %v94
    %739 = vmatprep.subr.mxu0 0.0
    %740 = vmatpush1.msra.mxu0 %v95
    %741 = vmatprep.subr.mxu0 0.0
    %742 = vmatpush1.msra.mxu0 %v96
    %743 = vmatprep.subr.mxu0 0.0
    %744 = vmatpush1.msra.mxu0 %v97
    %745 = vmatprep.subr.mxu0 0.0
    %746 = vmatpush1.msra.mxu0 %v98
    %747 = vmatprep.subr.mxu0 0.0
    %748 = vmatpush1.msra.mxu0 %v99
    %749 = vmatprep.subr.mxu0 0.0
    %750 = vmatpush1.msra.mxu0 %v100
    %751 = vmatprep.subr.mxu0 0.0
    %752 = vmatpush1.msra.mxu0 %v101
    %753 = vmatprep.subr.mxu0 0.0
    %754 = vmatpush1.msra.mxu0 %v102
    %755 = vmatprep.subr.mxu0 0.0
    %756 = vmatpush1.msra.mxu0 %v103
    %757 = vmatprep.subr.mxu0 0.0
    %758 = vmatpush1.msra.mxu0 %v104
    %759 = vmatprep.subr.mxu0 0.0
    %760 = vmatpush1.msra.mxu0 %v105
    %761 = vmatprep.subr.mxu0 0.0
    %762 = vmatpush1.msra.mxu0 %v106
    %763 = vmatprep.subr.mxu0 0.0
    %764 = vmatpush1.msra.mxu0 0.0
    %765 = vmatprep.subr.mxu0 0.0
    %766 = vmatpush1.msra.mxu0 0.0
    %767 = vmatprep.subr.mxu0 0.0
    %768 = vmatpush1.msra.mxu0 0.0
    %769 = vmatprep.subr.mxu0 0.0
    %770 = vmatpush1.msra.mxu0 0.0
    %771 = vmatprep.subr.mxu0 0.0
    %772 = vmatpush1.msra.mxu0 0.0
    %773 = vmatprep.subr.mxu0 0.0
    %774 = vmatpush1.msra.mxu0 0.0
    %775 = vmatprep.subr.mxu0 0.0
    %776 = vmatpush1.msra.mxu0 0.0
    %777 = vmatprep.subr.mxu0 0.0
    %778 = vmatpush1.msra.mxu0 0.0
    %779 = vmatprep.subr.mxu0 0.0
    %780 = vmatpush1.msra.mxu0 0.0
    %781 = vmatprep.subr.mxu0 0.0
    %782 = vmatpush1.msra.mxu0 0.0
    %783 = vmatprep.subr.mxu0 0.0
    %784 = vmatpush1.msra.mxu0 0.0
    %785 = vmatprep.subr.mxu0 0.0
    %786 = vmatpush1.msra.mxu0 0.0
    %787 = vmatprep.subr.mxu0 0.0
    %788 = vmatpush1.msra.mxu0 0.0
    %789 = vmatprep.subr.mxu0 0.0
    %790 = vmatpush1.msra.mxu0 0.0
    %791 = vmatprep.mubr.f32.mxu0 %v725
    %792 = vmatmul.mubr.f32.gmra.mrb[0].mxu0 %v639
    %v793 = vpop.f32.mrb[0].mxu0
    %v794 = vadd.f32 %v721, %v793
    %v795 = vpop.f32.mrb[0].mxu0
    %796 = vdwg.mxu0
    %vm801 = vcmask 1046528
    %v802 = vrot.slane %v643, 1
    %v803 = vrot.slane %v645, 1
    %v804 = vsel %vm801, %v802, %v803
    %v805 = vrot.slane %v644, 1
    %v806 = vrot.slane %v646, 1
    %v807 = vsel %vm801, %v805, %v806
    %v809 = vsel %vm616, %v807, 0
    %811 = vmatprep.subr.mxu0 0.0
    %812 = vmatpush1.msra.mxu0 %v127
    %813 = vmatprep.subr.mxu0 0.0
    %814 = vmatpush1.msra.mxu0 %v128
    %815 = vmatprep.subr.mxu0 0.0
    %816 = vmatpush1.msra.mxu0 %v129
    %817 = vmatprep.subr.mxu0 0.0
    %818 = vmatpush1.msra.mxu0 %v130
    %819 = vmatprep.subr.mxu0 0.0
    %820 = vmatpush1.msra.mxu0 %v131
    %821 = vmatprep.subr.mxu0 0.0
    %822 = vmatpush1.msra.mxu0 %v132
    %823 = vmatprep.subr.mxu0 0.0
    %824 = vmatpush1.msra.mxu0 %v133
    %825 = vmatprep.subr.mxu0 0.0
    %826 = vmatpush1.msra.mxu0 %v134
    %827 = vmatprep.subr.mxu0 0.0
    %828 = vmatpush1.msra.mxu0 %v135
    %829 = vmatprep.subr.mxu0 0.0
    %830 = vmatpush1.msra.mxu0 %v136
    %831 = vmatprep.subr.mxu0 0.0
    %832 = vmatpush1.msra.mxu0 %v137
    %833 = vmatprep.subr.mxu0 0.0
    %834 = vmatpush1.msra.mxu0 %v138
    %835 = vmatprep.subr.mxu0 0.0
    %836 = vmatpush1.msra.mxu0 %v139
    %837 = vmatprep.subr.mxu0 0.0
    %838 = vmatpush1.msra.mxu0 %v140
    %839 = vmatprep.subr.mxu0 0.0
    %840 = vmatpush1.msra.mxu0 %v141
    %841 = vmatprep.subr.mxu0 0.0
    %842 = vmatpush1.msra.mxu0 %v142
    %843 = vmatprep.subr.mxu0 0.0
    %844 = vmatpush1.msra.mxu0 %v143
    %845 = vmatprep.subr.mxu0 0.0
    %846 = vmatpush1.msra.mxu0 %v144
    %847 = vmatprep.subr.mxu0 0.0
    %848 = vmatpush1.msra.mxu0 0.0
    %849 = vmatprep.subr.mxu0 0.0
    %850 = vmatpush1.msra.mxu0 0.0
    %851 = vmatprep.subr.mxu0 0.0
    %852 = vmatpush1.msra.mxu0 0.0
    %853 = vmatprep.subr.mxu0 0.0
    %854 = vmatpush1.msra.mxu0 0.0
    %855 = vmatprep.subr.mxu0 0.0
    %856 = vmatpush1.msra.mxu0 0.0
    %857 = vmatprep.subr.mxu0 0.0
    %858 = vmatpush1.msra.mxu0 0.0
    %859 = vmatprep.subr.mxu0 0.0
    %860 = vmatpush1.msra.mxu0 0.0
    %861 = vmatprep.subr.mxu0 0.0
    %862 = vmatpush1.msra.mxu0 0.0
    %863 = vmatprep.subr.mxu0 0.0
    %864 = vmatpush1.msra.mxu0 0.0
    %865 = vmatprep.subr.mxu0 0.0
    %866 = vmatpush1.msra.mxu0 0.0
    %867 = vmatprep.subr.mxu0 0.0
    %868 = vmatpush1.msra.mxu0 0.0
    %869 = vmatprep.subr.mxu0 0.0
    %870 = vmatpush1.msra.mxu0 0.0
    %871 = vmatprep.subr.mxu0 0.0
    %872 = vmatpush1.msra.mxu0 0.0
    %873 = vmatprep.subr.mxu0 0.0
    %874 = vmatpush1.msra.mxu0 0.0
    %875 = vmatprep.mubr.f32.mxu0 %v809
    %876 = vmatmul.mubr.f32.gmra.mrb[0].mxu0 %v804
    %v877 = vpop.f32.mrb[0].mxu0
    %v878 = vadd.f32 0.0, %v877
    %v879 = vpop.f32.mrb[0].mxu0
    %880 = vdwg.mxu0
    %v881 = vadd.f32 %v794, %v878
    %v883 = vlaneseq
    %v884 = vshrl.u32 %v883, 7
    %v885 = vsub.s32 0, %v884
    %v886 = vrot.slane %v146, %v885
    %v888 = vadd.f32 %v881, %v886
    %v889 = vmax.f32 %v888, 0.0
    %890 = vmatprep.subr.mxu0 0.0
    %891 = vmatpush1.msra.mxu0 %v108
    %892 = vmatprep.subr.mxu0 0.0
    %893 = vmatpush1.msra.mxu0 %v109
    %894 = vmatprep.subr.mxu0 0.0
    %895 = vmatpush1.msra.mxu0 %v110
    %896 = vmatprep.subr.mxu0 0.0
    %897 = vmatpush1.msra.mxu0 %v111
    %898 = vmatprep.subr.mxu0 0.0
    %899 = vmatpush1.msra.mxu0 %v112
    %900 = vmatprep.subr.mxu0 0.0
    %901 = vmatpush1.msra.mxu0 %v113
    %902 = vmatprep.subr.mxu0 0.0
    %903 = vmatpush1.msra.mxu0 %v114
    %904 = vmatprep.subr.mxu0 0.0
    %905 = vmatpush1.msra.mxu0 %v115
    %906 = vmatprep.subr.mxu0 0.0
    %907 = vmatpush1.msra.mxu0 %v116
    %908 = vmatprep.subr.mxu0 0.0
    %909 = vmatpush1.msra.mxu0 %v117
    %910 = vmatprep.subr.mxu0 0.0
    %911 = vmatpush1.msra.mxu0 %v118
    %912 = vmatprep.subr.mxu0 0.0
    %913 = vmatpush1.msra.mxu0 %v119
    %914 = vmatprep.subr.mxu0 0.0
    %915 = vmatpush1.msra.mxu0 %v120
    %916 = vmatprep.subr.mxu0 0.0
    %917 = vmatpush1.msra.mxu0 %v121
    %918 = vmatprep.subr.mxu0 0.0
    %919 = vmatpush1.msra.mxu0 %v122
    %920 = vmatprep.subr.mxu0 0.0
    %921 = vmatpush1.msra.mxu0 %v123
    %922 = vmatprep.subr.mxu0 0.0
    %923 = vmatpush1.msra.mxu0 %v124
    %924 = vmatprep.subr.mxu0 0.0
    %925 = vmatpush1.msra.mxu0 %v125
    %926 = vmatprep.subr.mxu0 0.0
    %927 = vmatpush1.msra.mxu0 0.0
    %928 = vmatprep.subr.mxu0 0.0
    %929 = vmatpush1.msra.mxu0 0.0
    %930 = vmatprep.subr.mxu0 0.0
    %931 = vmatpush1.msra.mxu0 0.0
    %932 = vmatprep.subr.mxu0 0.0
    %933 = vmatpush1.msra.mxu0 0.0
    %934 = vmatprep.subr.mxu0 0.0
    %935 = vmatpush1.msra.mxu0 0.0
    %936 = vmatprep.subr.mxu0 0.0
    %937 = vmatpush1.msra.mxu0 0.0
    %938 = vmatprep.subr.mxu0 0.0
    %939 = vmatpush1.msra.mxu0 0.0
    %940 = vmatprep.subr.mxu0 0.0
    %941 = vmatpush1.msra.mxu0 0.0
    %942 = vmatprep.subr.mxu0 0.0
    %943 = vmatpush1.msra.mxu0 0.0
    %944 = vmatprep.subr.mxu0 0.0
    %945 = vmatpush1.msra.mxu0 0.0
    %946 = vmatprep.subr.mxu0 0.0
    %947 = vmatpush1.msra.mxu0 0.0
    %948 = vmatprep.subr.mxu0 0.0
    %949 = vmatpush1.msra.mxu0 0.0
    %950 = vmatprep.subr.mxu0 0.0
    %951 = vmatpush1.msra.mxu0 0.0
    %952 = vmatprep.subr.mxu0 0.0
    %953 = vmatpush1.msra.mxu0 0.0
    %954 = vmatprep.mubr.f32.mxu0 %v809
    %955 = vmatmul.mubr.f32.gmra.mrb[0].mxu0 %v804
    %v956 = vpop.f32.mrb[0].mxu0
    %v957 = vadd.f32 0.0, %v956
    %v958 = vpop.f32.mrb[0].mxu0
    %959 = vdwg.mxu0
    %960 = vmatprep.subr.mxu0 0.0
    %961 = vmatpush1.msra.mxu0 %v89
    %962 = vmatprep.subr.mxu0 0.0
    %963 = vmatpush1.msra.mxu0 %v90
    %964 = vmatprep.subr.mxu0 0.0
    %965 = vmatpush1.msra.mxu0 %v91
    %966 = vmatprep.subr.mxu0 0.0
    %967 = vmatpush1.msra.mxu0 %v92
    %968 = vmatprep.subr.mxu0 0.0
    %969 = vmatpush1.msra.mxu0 %v93
    %970 = vmatprep.subr.mxu0 0.0
    %971 = vmatpush1.msra.mxu0 %v94
    %972 = vmatprep.subr.mxu0 0.0
    %973 = vmatpush1.msra.mxu0 %v95
    %974 = vmatprep.subr.mxu0 0.0
    %975 = vmatpush1.msra.mxu0 %v96
    %976 = vmatprep.subr.mxu0 0.0
    %977 = vmatpush1.msra.mxu0 %v97
    %978 = vmatprep.subr.mxu0 0.0
    %979 = vmatpush1.msra.mxu0 %v98
    %980 = vmatprep.subr.mxu0 0.0
    %981 = vmatpush1.msra.mxu0 %v99
    %982 = vmatprep.subr.mxu0 0.0
    %983 = vmatpush1.msra.mxu0 %v100
    %984 = vmatprep.subr.mxu0 0.0
    %985 = vmatpush1.msra.mxu0 %v101
    %986 = vmatprep.subr.mxu0 0.0
    %987 = vmatpush1.msra.mxu0 %v102
    %988 = vmatprep.subr.mxu0 0.0
    %989 = vmatpush1.msra.mxu0 %v103
    %990 = vmatprep.subr.mxu0 0.0
    %991 = vmatpush1.msra.mxu0 %v104
    %992 = vmatprep.subr.mxu0 0.0
    %993 = vmatpush1.msra.mxu0 %v105
    %994 = vmatprep.subr.mxu0 0.0
    %995 = vmatpush1.msra.mxu0 %v106
    %996 = vmatprep.subr.mxu0 0.0
    %997 = vmatpush1.msra.mxu0 0.0
    %998 = vmatprep.subr.mxu0 0.0
    %999 = vmatpush1.msra.mxu0 0.0
    %1000 = vmatprep.subr.mxu0 0.0
    %1001 = vmatpush1.msra.mxu0 0.0
    %1002 = vmatprep.subr.mxu0 0.0
    %1003 = vmatpush1.msra.mxu0 0.0
    %1004 = vmatprep.subr.mxu0 0.0
    %1005 = vmatpush1.msra.mxu0 0.0
    %1006 = vmatprep.subr.mxu0 0.0
    %1007 = vmatpush1.msra.mxu0 0.0
    %1008 = vmatprep.subr.mxu0 0.0
    %1009 = vmatpush1.msra.mxu0 0.0
    %1010 = vmatprep.subr.mxu0 0.0
    %1011 = vmatpush1.msra.mxu0 0.0
    %1012 = vmatprep.subr.mxu0 0.0
    %1013 = vmatpush1.msra.mxu0 0.0
    %1014 = vmatprep.subr.mxu0 0.0
    %1015 = vmatpush1.msra.mxu0 0.0
    %1016 = vmatprep.subr.mxu0 0.0
    %1017 = vmatpush1.msra.mxu0 0.0
    %1018 = vmatprep.subr.mxu0 0.0
    %1019 = vmatpush1.msra.mxu0 0.0
    %1020 = vmatprep.subr.mxu0 0.0
    %1021 = vmatpush1.msra.mxu0 0.0
    %1022 = vmatprep.subr.mxu0 0.0
    %1023 = vmatpush1.msra.mxu0 0.0
    %1024 = vmatprep.mubr.f32.mxu0 %v652
    %1025 = vmatmul.mubr.f32.gmra.mrb[0].mxu0 %v641
    %v1026 = vpop.f32.mrb[0].mxu0
    %v1027 = vadd.f32 %v957, %v1026
    %v1028 = vpop.f32.mrb[0].mxu0
    %1029 = vdwg.mxu0
    %v1034 = vrot.slane %v647, 1
    %v1035 = vrot.slane %v649, 1
    %v1036 = vsel %vm801, %v1034, %v1035
    %v1037 = vrot.slane %v648, 1
    %v1038 = vrot.slane %v650, 1
    %v1039 = vsel %vm801, %v1037, %v1038
    %v1041 = vsel %vm616, %v1039, 0
    %1043 = vmatprep.subr.mxu0 0.0
    %1044 = vmatpush1.msra.mxu0 %v127
    %1045 = vmatprep.subr.mxu0 0.0
    %1046 = vmatpush1.msra.mxu0 %v128
    %1047 = vmatprep.subr.mxu0 0.0
    %1048 = vmatpush1.msra.mxu0 %v129
    %1049 = vmatprep.subr.mxu0 0.0
    %1050 = vmatpush1.msra.mxu0 %v130
    %1051 = vmatprep.subr.mxu0 0.0
    %1052 = vmatpush1.msra.mxu0 %v131
    %1053 = vmatprep.subr.mxu0 0.0
    %1054 = vmatpush1.msra.mxu0 %v132
    %1055 = vmatprep.subr.mxu0 0.0
    %1056 = vmatpush1.msra.mxu0 %v133
    %1057 = vmatprep.subr.mxu0 0.0
    %1058 = vmatpush1.msra.mxu0 %v134
    %1059 = vmatprep.subr.mxu0 0.0
    %1060 = vmatpush1.msra.mxu0 %v135
    %1061 = vmatprep.subr.mxu0 0.0
    %1062 = vmatpush1.msra.mxu0 %v136
    %1063 = vmatprep.subr.mxu0 0.0
    %1064 = vmatpush1.msra.mxu0 %v137
    %1065 = vmatprep.subr.mxu0 0.0
    %1066 = vmatpush1.msra.mxu0 %v138
    %1067 = vmatprep.subr.mxu0 0.0
    %1068 = vmatpush1.msra.mxu0 %v139
    %1069 = vmatprep.subr.mxu0 0.0
    %1070 = vmatpush1.msra.mxu0 %v140
    %1071 = vmatprep.subr.mxu0 0.0
    %1072 = vmatpush1.msra.mxu0 %v141
    %1073 = vmatprep.subr.mxu0 0.0
    %1074 = vmatpush1.msra.mxu0 %v142
    %1075 = vmatprep.subr.mxu0 0.0
    %1076 = vmatpush1.msra.mxu0 %v143
    %1077 = vmatprep.subr.mxu0 0.0
    %1078 = vmatpush1.msra.mxu0 %v144
    %1079 = vmatprep.subr.mxu0 0.0
    %1080 = vmatpush1.msra.mxu0 0.0
    %1081 = vmatprep.subr.mxu0 0.0
    %1082 = vmatpush1.msra.mxu0 0.0
    %1083 = vmatprep.subr.mxu0 0.0
    %1084 = vmatpush1.msra.mxu0 0.0
    %1085 = vmatprep.subr.mxu0 0.0
    %1086 = vmatpush1.msra.mxu0 0.0
    %1087 = vmatprep.subr.mxu0 0.0
    %1088 = vmatpush1.msra.mxu0 0.0
    %1089 = vmatprep.subr.mxu0 0.0
    %1090 = vmatpush1.msra.mxu0 0.0
    %1091 = vmatprep.subr.mxu0 0.0
    %1092 = vmatpush1.msra.mxu0 0.0
    %1093 = vmatprep.subr.mxu0 0.0
    %1094 = vmatpush1.msra.mxu0 0.0
    %1095 = vmatprep.subr.mxu0 0.0
    %1096 = vmatpush1.msra.mxu0 0.0
    %1097 = vmatprep.subr.mxu0 0.0
    %1098 = vmatpush1.msra.mxu0 0.0
    %1099 = vmatprep.subr.mxu0 0.0
    %1100 = vmatpush1.msra.mxu0 0.0
    %1101 = vmatprep.subr.mxu0 0.0
    %1102 = vmatpush1.msra.mxu0 0.0
    %1103 = vmatprep.subr.mxu0 0.0
    %1104 = vmatpush1.msra.mxu0 0.0
    %1105 = vmatprep.subr.mxu0 0.0
    %1106 = vmatpush1.msra.mxu0 0.0
    %1107 = vmatprep.mubr.f32.mxu0 %v1041
    %1108 = vmatmul.mubr.f32.gmra.mrb[0].mxu0 %v1036
    %v1109 = vpop.f32.mrb[0].mxu0
    %v1110 = vadd.f32 0.0, %v1109
    %v1111 = vpop.f32.mrb[0].mxu0
    %1112 = vdwg.mxu0
    %v1113 = vadd.f32 %v1027, %v1110
    %v1114 = vadd.f32 %v1113, %v886
    %v1115 = vmax.f32 %v1114, 0.0
    %v1116 = vmax.f32 %v889, %v1115
    %1118 = vrot.lane.b32.xlu0 %v1116, 64
    %v1119 = vpop.permute.xlu0 %1118
    %v1121 = vmax.f32 %v1116, %v1119
    %vm1122 = vcmask 516096
    %1123 = vst.msk [vmem:[#allocation3] sm:$0x1] %vm1122, %v1121
    %v1126 = vunpack.c.l.s4 1983009808
    %v1127 = vunpack.c.0.s8 %v1126
    %v1128 = vlaneseq
    %v1129 = vshrl.u32 %v1128, 7
    %v1130 = vsub.s32 %v1127, %v1129
    %v1131 = vrot.slane %v1121, %v1130
    %v1132 = vrot.slane %v1131, 7
    %v1133 = vrot.slane %v1132, 2
    %1134 = vrot.lane.b32.xlu0 %v1133, 64
    %v1135 = vpop.permute.xlu0 %1134
    %vm1137 = vcmask 1040896
    %1138 = vst.msk [vmem:[#allocation3] sm:$0x1] %vm1137, %v1135
    %v1139 = vcombine.high %v1131, %v1131
    %1141 = vst.msk [vmem:[#allocation3 + $0x2] sm:$0x1] %vm1122, %v1139
    %v1142 = vrot.slane %v1139, 7
    %v1143 = vrot.slane %v1142, 2
    %1144 = vrot.lane.b32.xlu0 %v1143, 64
    %v1145 = vpop.permute.xlu0 %1144
    %1147 = vst.msk [vmem:[#allocation3 + $0x2] sm:$0x1] %vm1137, %v1145
    %v1148 = vcombine.high %v1121, %v1121
    %v1150 = vunpack.c.l.s4 1983009808
    %v1151 = vunpack.c.0.s8 %v1150
    %v1152 = vlaneseq
    %v1153 = vshrl.u32 %v1152, 7
    %v1154 = vsub.s32 %v1151, %v1153
    %v1155 = vrot.slane %v1148, %v1154
    %1157 = vst.msk [vmem:[#allocation3 + $0x4] sm:$0x1] %vm1122, %v1155
    %v1158 = vrot.slane %v1155, 7
    %v1159 = vrot.slane %v1158, 2
    %1160 = vrot.lane.b32.xlu0 %v1159, 64
    %v1161 = vpop.permute.xlu0 %1160
    %1163 = vst.msk [vmem:[#allocation3 + $0x4] sm:$0x1] %vm1137, %v1161
    %v1164 = vcombine.high %v1155, %v1155
    %1166 = vst.msk [vmem:[#allocation3 + $0x6] sm:$0x1] %vm1122, %v1164
    %v1167 = vrot.slane %v1164, 7
    %v1168 = vrot.slane %v1167, 2
    %1169 = vrot.lane.b32.xlu0 %v1168, 64
    %v1170 = vpop.permute.xlu0 %1169
    %1172 = vst.msk [vmem:[#allocation3 + $0x6] sm:$0x1] %vm1137, %v1170
    %s1173 = scalar_lea.vmem %s0, 16
    %v1174 = vld [vmem:[%s1173] sm:$0xff]
    %s1175 = scalar_lea.vmem %s0, 48
    %v1176 = vld [vmem:[%s1175] sm:$0xff]
    %v1177 = vld [vmem:[%s1173 + $0x1] sm:$0xff]
    %v1178 = vld [vmem:[%s1175 + $0x1] sm:$0xff]
    %v1180 = vsel %vm152, %v1176, 0
    %1182 = vmatprep.subr.mxu0 %v53
    %1183 = vmatpush1.msra.mxu0 %v52
    %1184 = vmatprep.subr.mxu0 %v55
    %1185 = vmatpush1.msra.mxu0 %v54
    %1186 = vmatprep.subr.mxu0 %v57
    %1187 = vmatpush1.msra.mxu0 %v56
    %1188 = vmatprep.subr.mxu0 %v59
    %1189 = vmatpush1.msra.mxu0 %v58
    %1190 = vmatprep.subr.mxu0 %v61
    %1191 = vmatpush1.msra.mxu0 %v60
    %1192 = vmatprep.subr.mxu0 %v63
    %1193 = vmatpush1.msra.mxu0 %v62
    %1194 = vmatprep.subr.mxu0 %v65
    %1195 = vmatpush1.msra.mxu0 %v64
    %1196 = vmatprep.subr.mxu0 %v67
    %1197 = vmatpush1.msra.mxu0 %v66
    %1198 = vmatprep.subr.mxu0 %v69
    %1199 = vmatpush1.msra.mxu0 %v68
    %1200 = vmatprep.subr.mxu0 0.0
    %1201 = vmatpush1.msra.mxu0 0.0
    %1202 = vmatprep.subr.mxu0 0.0
    %1203 = vmatpush1.msra.mxu0 0.0
    %1204 = vmatprep.subr.mxu0 0.0
    %1205 = vmatpush1.msra.mxu0 0.0
    %1206 = vmatprep.subr.mxu0 0.0
    %1207 = vmatpush1.msra.mxu0 0.0
    %1208 = vmatprep.subr.mxu0 0.0
    %1209 = vmatpush1.msra.mxu0 0.0
    %1210 = vmatprep.subr.mxu0 0.0
    %1211 = vmatpush1.msra.mxu0 0.0
    %1212 = vmatprep.subr.mxu0 0.0
    %1213 = vmatpush1.msra.mxu0 0.0
    %1214 = vmatprep.subr.mxu0 0.0
    %1215 = vmatpush1.msra.mxu0 0.0
    %1216 = vmatprep.subr.mxu0 0.0
    %1217 = vmatpush1.msra.mxu0 0.0
    %1218 = vmatprep.subr.mxu0 0.0
    %1219 = vmatpush1.msra.mxu0 0.0
    %1220 = vmatprep.subr.mxu0 0.0
    %1221 = vmatpush1.msra.mxu0 0.0
    %1222 = vmatprep.subr.mxu0 0.0
    %1223 = vmatpush1.msra.mxu0 0.0
    %1224 = vmatprep.subr.mxu0 0.0
    %1225 = vmatpush1.msra.mxu0 0.0
    %1226 = vmatprep.subr.mxu0 0.0
    %1227 = vmatpush1.msra.mxu0 0.0
    %1228 = vmatprep.subr.mxu0 0.0
    %1229 = vmatpush1.msra.mxu0 0.0
    %1230 = vmatprep.subr.mxu0 0.0
    %1231 = vmatpush1.msra.mxu0 0.0
    %1232 = vmatprep.subr.mxu0 0.0
    %1233 = vmatpush1.msra.mxu0 0.0
    %1234 = vmatprep.subr.mxu0 0.0
    %1235 = vmatpush1.msra.mxu0 0.0
    %1236 = vmatprep.subr.mxu0 0.0
    %1237 = vmatpush1.msra.mxu0 0.0
    %1238 = vmatprep.subr.mxu0 0.0
    %1239 = vmatpush1.msra.mxu0 0.0
    %1240 = vmatprep.subr.mxu0 0.0
    %1241 = vmatpush1.msra.mxu0 0.0
    %1242 = vmatprep.subr.mxu0 0.0
    %1243 = vmatpush1.msra.mxu0 0.0
    %1244 = vmatprep.subr.mxu0 0.0
    %1245 = vmatpush1.msra.mxu0 0.0
    %1246 = vmatprep.mubr.f32.mxu0 0.0
    %1247 = vmatmul.mubr.f32.gmra.mrb[0].mxu0 %v1180
    %v1248 = vpop.f32.mrb[0].mxu0
    %v1249 = vadd.f32 0.0, %v1248
    %v1250 = vpop.f32.mrb[0].mxu0
    %v1251 = vadd.f32 0.0, %v1250
    %1252 = vdwg.mxu0
    %v1254 = vsel %vm152, %v1174, 0
    %1256 = vmatprep.subr.mxu0 %v34
    %1257 = vmatpush1.msra.mxu0 %v33
    %1258 = vmatprep.subr.mxu0 %v36
    %1259 = vmatpush1.msra.mxu0 %v35
    %1260 = vmatprep.subr.mxu0 %v38
    %1261 = vmatpush1.msra.mxu0 %v37
    %1262 = vmatprep.subr.mxu0 %v40
    %1263 = vmatpush1.msra.mxu0 %v39
    %1264 = vmatprep.subr.mxu0 %v42
    %1265 = vmatpush1.msra.mxu0 %v41
    %1266 = vmatprep.subr.mxu0 %v44
    %1267 = vmatpush1.msra.mxu0 %v43
    %1268 = vmatprep.subr.mxu0 %v46
    %1269 = vmatpush1.msra.mxu0 %v45
    %1270 = vmatprep.subr.mxu0 %v48
    %1271 = vmatpush1.msra.mxu0 %v47
    %1272 = vmatprep.subr.mxu0 %v50
    %1273 = vmatpush1.msra.mxu0 %v49
    %1274 = vmatprep.subr.mxu0 0.0
    %1275 = vmatpush1.msra.mxu0 0.0
    %1276 = vmatprep.subr.mxu0 0.0
    %1277 = vmatpush1.msra.mxu0 0.0
    %1278 = vmatprep.subr.mxu0 0.0
    %1279 = vmatpush1.msra.mxu0 0.0
    %1280 = vmatprep.subr.mxu0 0.0
    %1281 = vmatpush1.msra.mxu0 0.0
    %1282 = vmatprep.subr.mxu0 0.0
    %1283 = vmatpush1.msra.mxu0 0.0
    %1284 = vmatprep.subr.mxu0 0.0
    %1285 = vmatpush1.msra.mxu0 0.0
    %1286 = vmatprep.subr.mxu0 0.0
    %1287 = vmatpush1.msra.mxu0 0.0
    %1288 = vmatprep.subr.mxu0 0.0
    %1289 = vmatpush1.msra.mxu0 0.0
    %1290 = vmatprep.subr.mxu0 0.0
    %1291 = vmatpush1.msra.mxu0 0.0
    %1292 = vmatprep.subr.mxu0 0.0
    %1293 = vmatpush1.msra.mxu0 0.0
    %1294 = vmatprep.subr.mxu0 0.0
    %1295 = vmatpush1.msra.mxu0 0.0
    %1296 = vmatprep.subr.mxu0 0.0
    %1297 = vmatpush1.msra.mxu0 0.0
    %1298 = vmatprep.subr.mxu0 0.0
    %1299 = vmatpush1.msra.mxu0 0.0
    %1300 = vmatprep.subr.mxu0 0.0
    %1301 = vmatpush1.msra.mxu0 0.0
    %1302 = vmatprep.subr.mxu0 0.0
    %1303 = vmatpush1.msra.mxu0 0.0
    %1304 = vmatprep.subr.mxu0 0.0
    %1305 = vmatpush1.msra.mxu0 0.0
    %1306 = vmatprep.subr.mxu0 0.0
    %1307 = vmatpush1.msra.mxu0 0.0
    %1308 = vmatprep.subr.mxu0 0.0
    %1309 = vmatpush1.msra.mxu0 0.0
    %1310 = vmatprep.subr.mxu0 0.0
    %1311 = vmatpush1.msra.mxu0 0.0
    %1312 = vmatprep.subr.mxu0 0.0
    %1313 = vmatpush1.msra.mxu0 0.0
    %1314 = vmatprep.subr.mxu0 0.0
    %1315 = vmatpush1.msra.mxu0 0.0
    %1316 = vmatprep.subr.mxu0 0.0
    %1317 = vmatpush1.msra.mxu0 0.0
    %1318 = vmatprep.subr.mxu0 0.0
    %1319 = vmatpush1.msra.mxu0 0.0
    %1320 = vmatprep.mubr.f32.mxu0 0.0
    %1321 = vmatmul.mubr.f32.gmra.mrb[0].mxu0 %v1254
    %v1322 = vpop.f32.mrb[0].mxu0
    %v1323 = vadd.f32 %v1249, %v1322
    %v1324 = vpop.f32.mrb[0].mxu0
    %v1325 = vadd.f32 %v1251, %v1324
    %1326 = vdwg.mxu0
    %v1328 = vsel %vm152, %v1177, 0
    %1330 = vmatprep.subr.mxu0 %v72
    %1331 = vmatpush1.msra.mxu0 %v71
    %1332 = vmatprep.subr.mxu0 %v74
    %1333 = vmatpush1.msra.mxu0 %v73
    %1334 = vmatprep.subr.mxu0 %v76
    %1335 = vmatpush1.msra.mxu0 %v75
    %1336 = vmatprep.subr.mxu0 %v78
    %1337 = vmatpush1.msra.mxu0 %v77
    %1338 = vmatprep.subr.mxu0 %v80
    %1339 = vmatpush1.msra.mxu0 %v79
    %1340 = vmatprep.subr.mxu0 %v82
    %1341 = vmatpush1.msra.mxu0 %v81
    %1342 = vmatprep.subr.mxu0 %v84
    %1343 = vmatpush1.msra.mxu0 %v83
    %1344 = vmatprep.subr.mxu0 %v86
    %1345 = vmatpush1.msra.mxu0 %v85
    %1346 = vmatprep.subr.mxu0 %v88
    %1347 = vmatpush1.msra.mxu0 %v87
    %1348 = vmatprep.subr.mxu0 0.0
    %1349 = vmatpush1.msra.mxu0 0.0
    %1350 = vmatprep.subr.mxu0 0.0
    %1351 = vmatpush1.msra.mxu0 0.0
    %1352 = vmatprep.subr.mxu0 0.0
    %1353 = vmatpush1.msra.mxu0 0.0
    %1354 = vmatprep.subr.mxu0 0.0
    %1355 = vmatpush1.msra.mxu0 0.0
    %1356 = vmatprep.subr.mxu0 0.0
    %1357 = vmatpush1.msra.mxu0 0.0
    %1358 = vmatprep.subr.mxu0 0.0
    %1359 = vmatpush1.msra.mxu0 0.0
    %1360 = vmatprep.subr.mxu0 0.0
    %1361 = vmatpush1.msra.mxu0 0.0
    %1362 = vmatprep.subr.mxu0 0.0
    %1363 = vmatpush1.msra.mxu0 0.0
    %1364 = vmatprep.subr.mxu0 0.0
    %1365 = vmatpush1.msra.mxu0 0.0
    %1366 = vmatprep.subr.mxu0 0.0
    %1367 = vmatpush1.msra.mxu0 0.0
    %1368 = vmatprep.subr.mxu0 0.0
    %1369 = vmatpush1.msra.mxu0 0.0
    %1370 = vmatprep.subr.mxu0 0.0
    %1371 = vmatpush1.msra.mxu0 0.0
    %1372 = vmatprep.subr.mxu0 0.0
    %1373 = vmatpush1.msra.mxu0 0.0
    %1374 = vmatprep.subr.mxu0 0.0
    %1375 = vmatpush1.msra.mxu0 0.0
    %1376 = vmatprep.subr.mxu0 0.0
    %1377 = vmatpush1.msra.mxu0 0.0
    %1378 = vmatprep.subr.mxu0 0.0
    %1379 = vmatpush1.msra.mxu0 0.0
    %1380 = vmatprep.subr.mxu0 0.0
    %1381 = vmatpush1.msra.mxu0 0.0
    %1382 = vmatprep.subr.mxu0 0.0
    %1383 = vmatpush1.msra.mxu0 0.0
    %1384 = vmatprep.subr.mxu0 0.0
    %1385 = vmatpush1.msra.mxu0 0.0
    %1386 = vmatprep.subr.mxu0 0.0
    %1387 = vmatpush1.msra.mxu0 0.0
    %1388 = vmatprep.subr.mxu0 0.0
    %1389 = vmatpush1.msra.mxu0 0.0
    %1390 = vmatprep.subr.mxu0 0.0
    %1391 = vmatpush1.msra.mxu0 0.0
    %1392 = vmatprep.subr.mxu0 0.0
    %1393 = vmatpush1.msra.mxu0 0.0
    %1394 = vmatprep.mubr.f32.mxu0 0.0
    %1395 = vmatmul.mubr.f32.gmra.mrb[0].mxu0 %v1328
    %v1396 = vpop.f32.mrb[0].mxu0
    %v1397 = vadd.f32 0.0, %v1396
    %v1398 = vpop.f32.mrb[0].mxu0
    %v1399 = vadd.f32 0.0, %v1398
    %1400 = vdwg.mxu0
    %v1401 = vadd.f32 %v1323, %v1397
    %v1402 = vadd.f32 %v1325, %v1399
    %v1403 = vadd.f32 %v1401, %v381
    %v1404 = vadd.f32 %v1402, %v385
    %v1405 = vmax.f32 %v1403, 0.0
    %v1406 = vmax.f32 %v1404, 0.0
    %1407 = vmatprep.subr.mxu0 %v53
    %1408 = vmatpush1.msra.mxu0 %v52
    %1409 = vmatprep.subr.mxu0 %v55
    %1410 = vmatpush1.msra.mxu0 %v54
    %1411 = vmatprep.subr.mxu0 %v57
    %1412 = vmatpush1.msra.mxu0 %v56
    %1413 = vmatprep.subr.mxu0 %v59
    %1414 = vmatpush1.msra.mxu0 %v58
    %1415 = vmatprep.subr.mxu0 %v61
    %1416 = vmatpush1.msra.mxu0 %v60
    %1417 = vmatprep.subr.mxu0 %v63
    %1418 = vmatpush1.msra.mxu0 %v62
    %1419 = vmatprep.subr.mxu0 %v65
    %1420 = vmatpush1.msra.mxu0 %v64
    %1421 = vmatprep.subr.mxu0 %v67
    %1422 = vmatpush1.msra.mxu0 %v66
    %1423 = vmatprep.subr.mxu0 %v69
    %1424 = vmatpush1.msra.mxu0 %v68
    %1425 = vmatprep.subr.mxu0 0.0
    %1426 = vmatpush1.msra.mxu0 0.0
    %1427 = vmatprep.subr.mxu0 0.0
    %1428 = vmatpush1.msra.mxu0 0.0
    %1429 = vmatprep.subr.mxu0 0.0
    %1430 = vmatpush1.msra.mxu0 0.0
    %1431 = vmatprep.subr.mxu0 0.0
    %1432 = vmatpush1.msra.mxu0 0.0
    %1433 = vmatprep.subr.mxu0 0.0
    %1434 = vmatpush1.msra.mxu0 0.0
    %1435 = vmatprep.subr.mxu0 0.0
    %1436 = vmatpush1.msra.mxu0 0.0
    %1437 = vmatprep.subr.mxu0 0.0
    %1438 = vmatpush1.msra.mxu0 0.0
    %1439 = vmatprep.subr.mxu0 0.0
    %1440 = vmatpush1.msra.mxu0 0.0
    %1441 = vmatprep.subr.mxu0 0.0
    %1442 = vmatpush1.msra.mxu0 0.0
    %1443 = vmatprep.subr.mxu0 0.0
    %1444 = vmatpush1.msra.mxu0 0.0
    %1445 = vmatprep.subr.mxu0 0.0
    %1446 = vmatpush1.msra.mxu0 0.0
    %1447 = vmatprep.subr.mxu0 0.0
    %1448 = vmatpush1.msra.mxu0 0.0
    %1449 = vmatprep.subr.mxu0 0.0
    %1450 = vmatpush1.msra.mxu0 0.0
    %1451 = vmatprep.subr.mxu0 0.0
    %1452 = vmatpush1.msra.mxu0 0.0
    %1453 = vmatprep.subr.mxu0 0.0
    %1454 = vmatpush1.msra.mxu0 0.0
    %1455 = vmatprep.subr.mxu0 0.0
    %1456 = vmatpush1.msra.mxu0 0.0
    %1457 = vmatprep.subr.mxu0 0.0
    %1458 = vmatpush1.msra.mxu0 0.0
    %1459 = vmatprep.subr.mxu0 0.0
    %1460 = vmatpush1.msra.mxu0 0.0
    %1461 = vmatprep.subr.mxu0 0.0
    %1462 = vmatpush1.msra.mxu0 0.0
    %1463 = vmatprep.subr.mxu0 0.0
    %1464 = vmatpush1.msra.mxu0 0.0
    %1465 = vmatprep.subr.mxu0 0.0
    %1466 = vmatpush1.msra.mxu0 0.0
    %1467 = vmatprep.subr.mxu0 0.0
    %1468 = vmatpush1.msra.mxu0 0.0
    %1469 = vmatprep.subr.mxu0 0.0
    %1470 = vmatpush1.msra.mxu0 0.0
    %1471 = vmatprep.mubr.f32.mxu0 0.0
    %1472 = vmatmul.mubr.f32.gmra.mrb[0].mxu0 %v1328
    %v1473 = vpop.f32.mrb[0].mxu0
    %v1474 = vadd.f32 0.0, %v1473
    %v1475 = vpop.f32.mrb[0].mxu0
    %v1476 = vadd.f32 0.0, %v1475
    %1477 = vdwg.mxu0
    %1478 = vmatprep.subr.mxu0 %v34
    %1479 = vmatpush1.msra.mxu0 %v33
    %1480 = vmatprep.subr.mxu0 %v36
    %1481 = vmatpush1.msra.mxu0 %v35
    %1482 = vmatprep.subr.mxu0 %v38
    %1483 = vmatpush1.msra.mxu0 %v37
    %1484 = vmatprep.subr.mxu0 %v40
    %1485 = vmatpush1.msra.mxu0 %v39
    %1486 = vmatprep.subr.mxu0 %v42
    %1487 = vmatpush1.msra.mxu0 %v41
    %1488 = vmatprep.subr.mxu0 %v44
    %1489 = vmatpush1.msra.mxu0 %v43
    %1490 = vmatprep.subr.mxu0 %v46
    %1491 = vmatpush1.msra.mxu0 %v45
    %1492 = vmatprep.subr.mxu0 %v48
    %1493 = vmatpush1.msra.mxu0 %v47
    %1494 = vmatprep.subr.mxu0 %v50
    %1495 = vmatpush1.msra.mxu0 %v49
    %1496 = vmatprep.subr.mxu0 0.0
    %1497 = vmatpush1.msra.mxu0 0.0
    %1498 = vmatprep.subr.mxu0 0.0
    %1499 = vmatpush1.msra.mxu0 0.0
    %1500 = vmatprep.subr.mxu0 0.0
    %1501 = vmatpush1.msra.mxu0 0.0
    %1502 = vmatprep.subr.mxu0 0.0
    %1503 = vmatpush1.msra.mxu0 0.0
    %1504 = vmatprep.subr.mxu0 0.0
    %1505 = vmatpush1.msra.mxu0 0.0
    %1506 = vmatprep.subr.mxu0 0.0
    %1507 = vmatpush1.msra.mxu0 0.0
    %1508 = vmatprep.subr.mxu0 0.0
    %1509 = vmatpush1.msra.mxu0 0.0
    %1510 = vmatprep.subr.mxu0 0.0
    %1511 = vmatpush1.msra.mxu0 0.0
    %1512 = vmatprep.subr.mxu0 0.0
    %1513 = vmatpush1.msra.mxu0 0.0
    %1514 = vmatprep.subr.mxu0 0.0
    %1515 = vmatpush1.msra.mxu0 0.0
    %1516 = vmatprep.subr.mxu0 0.0
    %1517 = vmatpush1.msra.mxu0 0.0
    %1518 = vmatprep.subr.mxu0 0.0
    %1519 = vmatpush1.msra.mxu0 0.0
    %1520 = vmatprep.subr.mxu0 0.0
    %1521 = vmatpush1.msra.mxu0 0.0
    %1522 = vmatprep.subr.mxu0 0.0
    %1523 = vmatpush1.msra.mxu0 0.0
    %1524 = vmatprep.subr.mxu0 0.0
    %1525 = vmatpush1.msra.mxu0 0.0
    %1526 = vmatprep.subr.mxu0 0.0
    %1527 = vmatpush1.msra.mxu0 0.0
    %1528 = vmatprep.subr.mxu0 0.0
    %1529 = vmatpush1.msra.mxu0 0.0
    %1530 = vmatprep.subr.mxu0 0.0
    %1531 = vmatpush1.msra.mxu0 0.0
    %1532 = vmatprep.subr.mxu0 0.0
    %1533 = vmatpush1.msra.mxu0 0.0
    %1534 = vmatprep.subr.mxu0 0.0
    %1535 = vmatpush1.msra.mxu0 0.0
    %1536 = vmatprep.subr.mxu0 0.0
    %1537 = vmatpush1.msra.mxu0 0.0
    %1538 = vmatprep.subr.mxu0 0.0
    %1539 = vmatpush1.msra.mxu0 0.0
    %1540 = vmatprep.subr.mxu0 0.0
    %1541 = vmatpush1.msra.mxu0 0.0
    %1542 = vmatprep.mubr.f32.mxu0 0.0
    %1543 = vmatmul.mubr.f32.gmra.mrb[0].mxu0 %v1180
    %v1544 = vpop.f32.mrb[0].mxu0
    %v1545 = vadd.f32 %v1474, %v1544
    %v1546 = vpop.f32.mrb[0].mxu0
    %v1547 = vadd.f32 %v1476, %v1546
    %1548 = vdwg.mxu0
    %v1550 = vsel %vm152, %v1178, 0
    %1552 = vmatprep.subr.mxu0 %v72
    %1553 = vmatpush1.msra.mxu0 %v71
    %1554 = vmatprep.subr.mxu0 %v74
    %1555 = vmatpush1.msra.mxu0 %v73
    %1556 = vmatprep.subr.mxu0 %v76
    %1557 = vmatpush1.msra.mxu0 %v75
    %1558 = vmatprep.subr.mxu0 %v78
    %1559 = vmatpush1.msra.mxu0 %v77
    %1560 = vmatprep.subr.mxu0 %v80
    %1561 = vmatpush1.msra.mxu0 %v79
    %1562 = vmatprep.subr.mxu0 %v82
    %1563 = vmatpush1.msra.mxu0 %v81
    %1564 = vmatprep.subr.mxu0 %v84
    %1565 = vmatpush1.msra.mxu0 %v83
    %1566 = vmatprep.subr.mxu0 %v86
    %1567 = vmatpush1.msra.mxu0 %v85
    %1568 = vmatprep.subr.mxu0 %v88
    %1569 = vmatpush1.msra.mxu0 %v87
    %1570 = vmatprep.subr.mxu0 0.0
    %1571 = vmatpush1.msra.mxu0 0.0
    %1572 = vmatprep.subr.mxu0 0.0
    %1573 = vmatpush1.msra.mxu0 0.0
    %1574 = vmatprep.subr.mxu0 0.0
    %1575 = vmatpush1.msra.mxu0 0.0
    %1576 = vmatprep.subr.mxu0 0.0
    %1577 = vmatpush1.msra.mxu0 0.0
    %1578 = vmatprep.subr.mxu0 0.0
    %1579 = vmatpush1.msra.mxu0 0.0
    %1580 = vmatprep.subr.mxu0 0.0
    %1581 = vmatpush1.msra.mxu0 0.0
    %1582 = vmatprep.subr.mxu0 0.0
    %1583 = vmatpush1.msra.mxu0 0.0
    %1584 = vmatprep.subr.mxu0 0.0
    %1585 = vmatpush1.msra.mxu0 0.0
    %1586 = vmatprep.subr.mxu0 0.0
    %1587 = vmatpush1.msra.mxu0 0.0
    %1588 = vmatprep.subr.mxu0 0.0
    %1589 = vmatpush1.msra.mxu0 0.0
    %1590 = vmatprep.subr.mxu0 0.0
    %1591 = vmatpush1.msra.mxu0 0.0
    %1592 = vmatprep.subr.mxu0 0.0
    %1593 = vmatpush1.msra.mxu0 0.0
    %1594 = vmatprep.subr.mxu0 0.0
    %1595 = vmatpush1.msra.mxu0 0.0
    %1596 = vmatprep.subr.mxu0 0.0
    %1597 = vmatpush1.msra.mxu0 0.0
    %1598 = vmatprep.subr.mxu0 0.0
    %1599 = vmatpush1.msra.mxu0 0.0
    %1600 = vmatprep.subr.mxu0 0.0
    %1601 = vmatpush1.msra.mxu0 0.0
    %1602 = vmatprep.subr.mxu0 0.0
    %1603 = vmatpush1.msra.mxu0 0.0
    %1604 = vmatprep.subr.mxu0 0.0
    %1605 = vmatpush1.msra.mxu0 0.0
    %1606 = vmatprep.subr.mxu0 0.0
    %1607 = vmatpush1.msra.mxu0 0.0
    %1608 = vmatprep.subr.mxu0 0.0
    %1609 = vmatpush1.msra.mxu0 0.0
    %1610 = vmatprep.subr.mxu0 0.0
    %1611 = vmatpush1.msra.mxu0 0.0
    %1612 = vmatprep.subr.mxu0 0.0
    %1613 = vmatpush1.msra.mxu0 0.0
    %1614 = vmatprep.subr.mxu0 0.0
    %1615 = vmatpush1.msra.mxu0 0.0
    %1616 = vmatprep.mubr.f32.mxu0 0.0
    %1617 = vmatmul.mubr.f32.gmra.mrb[0].mxu0 %v1550
    %v1618 = vpop.f32.mrb[0].mxu0
    %v1619 = vadd.f32 0.0, %v1618
    %v1620 = vpop.f32.mrb[0].mxu0
    %v1621 = vadd.f32 0.0, %v1620
    %1622 = vdwg.mxu0
    %v1623 = vadd.f32 %v1545, %v1619
    %v1624 = vadd.f32 %v1547, %v1621
    %v1625 = vadd.f32 %v1623, %v381
    %v1626 = vadd.f32 %v1624, %v385
    %v1627 = vmax.f32 %v1625, 0.0
    %v1628 = vmax.f32 %v1626, 0.0
    %s1629 = scalar_lea.vmem [#allocation2], 96
    %1630 = vst [vmem:[%s1629] sm:$0xff] %v1405
    %1631 = vst.msk [vmem:[%s1629 + $0x8] sm:$0xff] %vm616, %v1406
    %v1634 = vrot.slane %v1627, 7
    %v1635 = vrot.slane %v1628, 7
    %s1638 = scalar_lea.vmem [#allocation2], 32
    %1639 = vst [vmem:[%s1638] sm:$0xfe] %v1634
    %1640 = vst.msk [vmem:[%s1638 + $0x8] sm:$0xfe] %vm625, %v1635
    %1641 = vst [vmem:[%s1638 + $0x10] sm:$0x1] %v1634
    %1642 = vst.msk [vmem:[%s1638 + $0x18] sm:$0x1] %vm628, %v1635
    %1643 = vst.msk [vmem:[%s1638] ss:$8 sm:$0x3] %vm633, 0.0
    %1644 = vst.msk [vmem:[%s1638] ss:$8 sm:$0x0] %vm633, 0.0
    %s1645 = scalar_lea.vmem %s1629, 16 [#allocation2]
    %1646 = vst.msk [vmem:[%s1645] ss:$8 sm:$0x3] %vm633, 0.0
    %1647 = vst.msk [vmem:[%s1645] ss:$8 sm:$0x0] %vm633, 0.0
    %v1648 = vld [vmem:[%s1638] sm:$0xff]
    %v1649 = vld [vmem:[%s1638 + $0x8] sm:$0xff]
    %v1650 = vld [vmem:[%s1629] sm:$0xff]
    %v1651 = vld [vmem:[%s1629 + $0x8] sm:$0xff]
    %v1652 = vld [vmem:[%s1638] sm:$0xfe]
    %v1653 = vld [vmem:[%s1638 + $0x8] sm:$0xfe]
    %v1654 = vld [vmem:[%s1638 + $0x10] sm:$0x1]
    %v1655 = vld [vmem:[%s1638 + $0x18] sm:$0x1]
    %v1656 = vld [vmem:[%s1629] sm:$0xfe]
    %v1657 = vld [vmem:[%s1629 + $0x8] sm:$0xfe]
    %v1658 = vld [vmem:[%s1629 + $0x10] sm:$0x1]
    %v1659 = vld [vmem:[%s1629 + $0x18] sm:$0x1]
    %v1661 = vsel %vm616, %v1651, 0
    %1663 = vmatprep.subr.mxu0 0.0
    %1664 = vmatpush1.msra.mxu0 %v108
    %1665 = vmatprep.subr.mxu0 0.0
    %1666 = vmatpush1.msra.mxu0 %v109
    %1667 = vmatprep.subr.mxu0 0.0
    %1668 = vmatpush1.msra.mxu0 %v110
    %1669 = vmatprep.subr.mxu0 0.0
    %1670 = vmatpush1.msra.mxu0 %v111
    %1671 = vmatprep.subr.mxu0 0.0
    %1672 = vmatpush1.msra.mxu0 %v112
    %1673 = vmatprep.subr.mxu0 0.0
    %1674 = vmatpush1.msra.mxu0 %v113
    %1675 = vmatprep.subr.mxu0 0.0
    %1676 = vmatpush1.msra.mxu0 %v114
    %1677 = vmatprep.subr.mxu0 0.0
    %1678 = vmatpush1.msra.mxu0 %v115
    %1679 = vmatprep.subr.mxu0 0.0
    %1680 = vmatpush1.msra.mxu0 %v116
    %1681 = vmatprep.subr.mxu0 0.0
    %1682 = vmatpush1.msra.mxu0 %v117
    %1683 = vmatprep.subr.mxu0 0.0
    %1684 = vmatpush1.msra.mxu0 %v118
    %1685 = vmatprep.subr.mxu0 0.0
    %1686 = vmatpush1.msra.mxu0 %v119
    %1687 = vmatprep.subr.mxu0 0.0
    %1688 = vmatpush1.msra.mxu0 %v120
    %1689 = vmatprep.subr.mxu0 0.0
    %1690 = vmatpush1.msra.mxu0 %v121
    %1691 = vmatprep.subr.mxu0 0.0
    %1692 = vmatpush1.msra.mxu0 %v122
    %1693 = vmatprep.subr.mxu0 0.0
    %1694 = vmatpush1.msra.mxu0 %v123
    %1695 = vmatprep.subr.mxu0 0.0
    %1696 = vmatpush1.msra.mxu0 %v124
    %1697 = vmatprep.subr.mxu0 0.0
    %1698 = vmatpush1.msra.mxu0 %v125
    %1699 = vmatprep.subr.mxu0 0.0
    %1700 = vmatpush1.msra.mxu0 0.0
    %1701 = vmatprep.subr.mxu0 0.0
    %1702 = vmatpush1.msra.mxu0 0.0
    %1703 = vmatprep.subr.mxu0 0.0
    %1704 = vmatpush1.msra.mxu0 0.0
    %1705 = vmatprep.subr.mxu0 0.0
    %1706 = vmatpush1.msra.mxu0 0.0
    %1707 = vmatprep.subr.mxu0 0.0
    %1708 = vmatpush1.msra.mxu0 0.0
    %1709 = vmatprep.subr.mxu0 0.0
    %1710 = vmatpush1.msra.mxu0 0.0
    %1711 = vmatprep.subr.mxu0 0.0
    %1712 = vmatpush1.msra.mxu0 0.0
    %1713 = vmatprep.subr.mxu0 0.0
    %1714 = vmatpush1.msra.mxu0 0.0
    %1715 = vmatprep.subr.mxu0 0.0
    %1716 = vmatpush1.msra.mxu0 0.0
    %1717 = vmatprep.subr.mxu0 0.0
    %1718 = vmatpush1.msra.mxu0 0.0
    %1719 = vmatprep.subr.mxu0 0.0
    %1720 = vmatpush1.msra.mxu0 0.0
    %1721 = vmatprep.subr.mxu0 0.0
    %1722 = vmatpush1.msra.mxu0 0.0
    %1723 = vmatprep.subr.mxu0 0.0
    %1724 = vmatpush1.msra.mxu0 0.0
    %1725 = vmatprep.subr.mxu0 0.0
    %1726 = vmatpush1.msra.mxu0 0.0
    %1727 = vmatprep.mubr.f32.mxu0 %v1661
    %1728 = vmatmul.mubr.f32.gmra.mrb[0].mxu0 %v1650
    %v1729 = vpop.f32.mrb[0].mxu0
    %v1730 = vadd.f32 0.0, %v1729
    %v1731 = vpop.f32.mrb[0].mxu0
    %1732 = vdwg.mxu0
    %v1734 = vsel %vm616, %v1649, 0
    %1736 = vmatprep.subr.mxu0 0.0
    %1737 = vmatpush1.msra.mxu0 %v89
    %1738 = vmatprep.subr.mxu0 0.0
    %1739 = vmatpush1.msra.mxu0 %v90
    %1740 = vmatprep.subr.mxu0 0.0
    %1741 = vmatpush1.msra.mxu0 %v91
    %1742 = vmatprep.subr.mxu0 0.0
    %1743 = vmatpush1.msra.mxu0 %v92
    %1744 = vmatprep.subr.mxu0 0.0
    %1745 = vmatpush1.msra.mxu0 %v93
    %1746 = vmatprep.subr.mxu0 0.0
    %1747 = vmatpush1.msra.mxu0 %v94
    %1748 = vmatprep.subr.mxu0 0.0
    %1749 = vmatpush1.msra.mxu0 %v95
    %1750 = vmatprep.subr.mxu0 0.0
    %1751 = vmatpush1.msra.mxu0 %v96
    %1752 = vmatprep.subr.mxu0 0.0
    %1753 = vmatpush1.msra.mxu0 %v97
    %1754 = vmatprep.subr.mxu0 0.0
    %1755 = vmatpush1.msra.mxu0 %v98
    %1756 = vmatprep.subr.mxu0 0.0
    %1757 = vmatpush1.msra.mxu0 %v99
    %1758 = vmatprep.subr.mxu0 0.0
    %1759 = vmatpush1.msra.mxu0 %v100
    %1760 = vmatprep.subr.mxu0 0.0
    %1761 = vmatpush1.msra.mxu0 %v101
    %1762 = vmatprep.subr.mxu0 0.0
    %1763 = vmatpush1.msra.mxu0 %v102
    %1764 = vmatprep.subr.mxu0 0.0
    %1765 = vmatpush1.msra.mxu0 %v103
    %1766 = vmatprep.subr.mxu0 0.0
    %1767 = vmatpush1.msra.mxu0 %v104
    %1768 = vmatprep.subr.mxu0 0.0
    %1769 = vmatpush1.msra.mxu0 %v105
    %1770 = vmatprep.subr.mxu0 0.0
    %1771 = vmatpush1.msra.mxu0 %v106
    %1772 = vmatprep.subr.mxu0 0.0
    %1773 = vmatpush1.msra.mxu0 0.0
    %1774 = vmatprep.subr.mxu0 0.0
    %1775 = vmatpush1.msra.mxu0 0.0
    %1776 = vmatprep.subr.mxu0 0.0
    %1777 = vmatpush1.msra.mxu0 0.0
    %1778 = vmatprep.subr.mxu0 0.0
    %1779 = vmatpush1.msra.mxu0 0.0
    %1780 = vmatprep.subr.mxu0 0.0
    %1781 = vmatpush1.msra.mxu0 0.0
    %1782 = vmatprep.subr.mxu0 0.0
    %1783 = vmatpush1.msra.mxu0 0.0
    %1784 = vmatprep.subr.mxu0 0.0
    %1785 = vmatpush1.msra.mxu0 0.0
    %1786 = vmatprep.subr.mxu0 0.0
    %1787 = vmatpush1.msra.mxu0 0.0
    %1788 = vmatprep.subr.mxu0 0.0
    %1789 = vmatpush1.msra.mxu0 0.0
    %1790 = vmatprep.subr.mxu0 0.0
    %1791 = vmatpush1.msra.mxu0 0.0
    %1792 = vmatprep.subr.mxu0 0.0
    %1793 = vmatpush1.msra.mxu0 0.0
    %1794 = vmatprep.subr.mxu0 0.0
    %1795 = vmatpush1.msra.mxu0 0.0
    %1796 = vmatprep.subr.mxu0 0.0
    %1797 = vmatpush1.msra.mxu0 0.0
    %1798 = vmatprep.subr.mxu0 0.0
    %1799 = vmatpush1.msra.mxu0 0.0
    %1800 = vmatprep.mubr.f32.mxu0 %v1734
    %1801 = vmatmul.mubr.f32.gmra.mrb[0].mxu0 %v1648
    %v1802 = vpop.f32.mrb[0].mxu0
    %v1803 = vadd.f32 %v1730, %v1802
    %v1804 = vpop.f32.mrb[0].mxu0
    %1805 = vdwg.mxu0
    %v1810 = vrot.slane %v1652, 1
    %v1811 = vrot.slane %v1654, 1
    %v1812 = vsel %vm801, %v1810, %v1811
    %v1813 = vrot.slane %v1653, 1
    %v1814 = vrot.slane %v1655, 1
    %v1815 = vsel %vm801, %v1813, %v1814
    %v1817 = vsel %vm616, %v1815, 0
    %1819 = vmatprep.subr.mxu0 0.0
    %1820 = vmatpush1.msra.mxu0 %v127
    %1821 = vmatprep.subr.mxu0 0.0
    %1822 = vmatpush1.msra.mxu0 %v128
    %1823 = vmatprep.subr.mxu0 0.0
    %1824 = vmatpush1.msra.mxu0 %v129
    %1825 = vmatprep.subr.mxu0 0.0
    %1826 = vmatpush1.msra.mxu0 %v130
    %1827 = vmatprep.subr.mxu0 0.0
    %1828 = vmatpush1.msra.mxu0 %v131
    %1829 = vmatprep.subr.mxu0 0.0
    %1830 = vmatpush1.msra.mxu0 %v132
    %1831 = vmatprep.subr.mxu0 0.0
    %1832 = vmatpush1.msra.mxu0 %v133
    %1833 = vmatprep.subr.mxu0 0.0
    %1834 = vmatpush1.msra.mxu0 %v134
    %1835 = vmatprep.subr.mxu0 0.0
    %1836 = vmatpush1.msra.mxu0 %v135
    %1837 = vmatprep.subr.mxu0 0.0
    %1838 = vmatpush1.msra.mxu0 %v136
    %1839 = vmatprep.subr.mxu0 0.0
    %1840 = vmatpush1.msra.mxu0 %v137
    %1841 = vmatprep.subr.mxu0 0.0
    %1842 = vmatpush1.msra.mxu0 %v138
    %1843 = vmatprep.subr.mxu0 0.0
    %1844 = vmatpush1.msra.mxu0 %v139
    %1845 = vmatprep.subr.mxu0 0.0
    %1846 = vmatpush1.msra.mxu0 %v140
    %1847 = vmatprep.subr.mxu0 0.0
    %1848 = vmatpush1.msra.mxu0 %v141
    %1849 = vmatprep.subr.mxu0 0.0
    %1850 = vmatpush1.msra.mxu0 %v142
    %1851 = vmatprep.subr.mxu0 0.0
    %1852 = vmatpush1.msra.mxu0 %v143
    %1853 = vmatprep.subr.mxu0 0.0
    %1854 = vmatpush1.msra.mxu0 %v144
    %1855 = vmatprep.subr.mxu0 0.0
    %1856 = vmatpush1.msra.mxu0 0.0
    %1857 = vmatprep.subr.mxu0 0.0
    %1858 = vmatpush1.msra.mxu0 0.0
    %1859 = vmatprep.subr.mxu0 0.0
    %1860 = vmatpush1.msra.mxu0 0.0
    %1861 = vmatprep.subr.mxu0 0.0
    %1862 = vmatpush1.msra.mxu0 0.0
    %1863 = vmatprep.subr.mxu0 0.0
    %1864 = vmatpush1.msra.mxu0 0.0
    %1865 = vmatprep.subr.mxu0 0.0
    %1866 = vmatpush1.msra.mxu0 0.0
    %1867 = vmatprep.subr.mxu0 0.0
    %1868 = vmatpush1.msra.mxu0 0.0
    %1869 = vmatprep.subr.mxu0 0.0
    %1870 = vmatpush1.msra.mxu0 0.0
    %1871 = vmatprep.subr.mxu0 0.0
    %1872 = vmatpush1.msra.mxu0 0.0
    %1873 = vmatprep.subr.mxu0 0.0
    %1874 = vmatpush1.msra.mxu0 0.0
    %1875 = vmatprep.subr.mxu0 0.0
    %1876 = vmatpush1.msra.mxu0 0.0
    %1877 = vmatprep.subr.mxu0 0.0
    %1878 = vmatpush1.msra.mxu0 0.0
    %1879 = vmatprep.subr.mxu0 0.0
    %1880 = vmatpush1.msra.mxu0 0.0
    %1881 = vmatprep.subr.mxu0 0.0
    %1882 = vmatpush1.msra.mxu0 0.0
    %1883 = vmatprep.mubr.f32.mxu0 %v1817
    %1884 = vmatmul.mubr.f32.gmra.mrb[0].mxu0 %v1812
    %v1885 = vpop.f32.mrb[0].mxu0
    %v1886 = vadd.f32 0.0, %v1885
    %v1887 = vpop.f32.mrb[0].mxu0
    %1888 = vdwg.mxu0
    %v1889 = vadd.f32 %v1803, %v1886
    %v1890 = vadd.f32 %v1889, %v886
    %v1891 = vmax.f32 %v1890, 0.0
    %1892 = vmatprep.subr.mxu0 0.0
    %1893 = vmatpush1.msra.mxu0 %v108
    %1894 = vmatprep.subr.mxu0 0.0
    %1895 = vmatpush1.msra.mxu0 %v109
    %1896 = vmatprep.subr.mxu0 0.0
    %1897 = vmatpush1.msra.mxu0 %v110
    %1898 = vmatprep.subr.mxu0 0.0
    %1899 = vmatpush1.msra.mxu0 %v111
    %1900 = vmatprep.subr.mxu0 0.0
    %1901 = vmatpush1.msra.mxu0 %v112
    %1902 = vmatprep.subr.mxu0 0.0
    %1903 = vmatpush1.msra.mxu0 %v113
    %1904 = vmatprep.subr.mxu0 0.0
    %1905 = vmatpush1.msra.mxu0 %v114
    %1906 = vmatprep.subr.mxu0 0.0
    %1907 = vmatpush1.msra.mxu0 %v115
    %1908 = vmatprep.subr.mxu0 0.0
    %1909 = vmatpush1.msra.mxu0 %v116
    %1910 = vmatprep.subr.mxu0 0.0
    %1911 = vmatpush1.msra.mxu0 %v117
    %1912 = vmatprep.subr.mxu0 0.0
    %1913 = vmatpush1.msra.mxu0 %v118
    %1914 = vmatprep.subr.mxu0 0.0
    %1915 = vmatpush1.msra.mxu0 %v119
    %1916 = vmatprep.subr.mxu0 0.0
    %1917 = vmatpush1.msra.mxu0 %v120
    %1918 = vmatprep.subr.mxu0 0.0
    %1919 = vmatpush1.msra.mxu0 %v121
    %1920 = vmatprep.subr.mxu0 0.0
    %1921 = vmatpush1.msra.mxu0 %v122
    %1922 = vmatprep.subr.mxu0 0.0
    %1923 = vmatpush1.msra.mxu0 %v123
    %1924 = vmatprep.subr.mxu0 0.0
    %1925 = vmatpush1.msra.mxu0 %v124
    %1926 = vmatprep.subr.mxu0 0.0
    %1927 = vmatpush1.msra.mxu0 %v125
    %1928 = vmatprep.subr.mxu0 0.0
    %1929 = vmatpush1.msra.mxu0 0.0
    %1930 = vmatprep.subr.mxu0 0.0
    %1931 = vmatpush1.msra.mxu0 0.0
    %1932 = vmatprep.subr.mxu0 0.0
    %1933 = vmatpush1.msra.mxu0 0.0
    %1934 = vmatprep.subr.mxu0 0.0
    %1935 = vmatpush1.msra.mxu0 0.0
    %1936 = vmatprep.subr.mxu0 0.0
    %1937 = vmatpush1.msra.mxu0 0.0
    %1938 = vmatprep.subr.mxu0 0.0
    %1939 = vmatpush1.msra.mxu0 0.0
    %1940 = vmatprep.subr.mxu0 0.0
    %1941 = vmatpush1.msra.mxu0 0.0
    %1942 = vmatprep.subr.mxu0 0.0
    %1943 = vmatpush1.msra.mxu0 0.0
    %1944 = vmatprep.subr.mxu0 0.0
    %1945 = vmatpush1.msra.mxu0 0.0
    %1946 = vmatprep.subr.mxu0 0.0
    %1947 = vmatpush1.msra.mxu0 0.0
    %1948 = vmatprep.subr.mxu0 0.0
    %1949 = vmatpush1.msra.mxu0 0.0
    %1950 = vmatprep.subr.mxu0 0.0
    %1951 = vmatpush1.msra.mxu0 0.0
    %1952 = vmatprep.subr.mxu0 0.0
    %1953 = vmatpush1.msra.mxu0 0.0
    %1954 = vmatprep.subr.mxu0 0.0
    %1955 = vmatpush1.msra.mxu0 0.0
    %1956 = vmatprep.mubr.f32.mxu0 %v1817
    %1957 = vmatmul.mubr.f32.gmra.mrb[0].mxu0 %v1812
    %v1958 = vpop.f32.mrb[0].mxu0
    %v1959 = vadd.f32 0.0, %v1958
    %v1960 = vpop.f32.mrb[0].mxu0
    %1961 = vdwg.mxu0
    %1962 = vmatprep.subr.mxu0 0.0
    %1963 = vmatpush1.msra.mxu0 %v89
    %1964 = vmatprep.subr.mxu0 0.0
    %1965 = vmatpush1.msra.mxu0 %v90
    %1966 = vmatprep.subr.mxu0 0.0
    %1967 = vmatpush1.msra.mxu0 %v91
    %1968 = vmatprep.subr.mxu0 0.0
    %1969 = vmatpush1.msra.mxu0 %v92
    %1970 = vmatprep.subr.mxu0 0.0
    %1971 = vmatpush1.msra.mxu0 %v93
    %1972 = vmatprep.subr.mxu0 0.0
    %1973 = vmatpush1.msra.mxu0 %v94
    %1974 = vmatprep.subr.mxu0 0.0
    %1975 = vmatpush1.msra.mxu0 %v95
    %1976 = vmatprep.subr.mxu0 0.0
    %1977 = vmatpush1.msra.mxu0 %v96
    %1978 = vmatprep.subr.mxu0 0.0
    %1979 = vmatpush1.msra.mxu0 %v97
    %1980 = vmatprep.subr.mxu0 0.0
    %1981 = vmatpush1.msra.mxu0 %v98
    %1982 = vmatprep.subr.mxu0 0.0
    %1983 = vmatpush1.msra.mxu0 %v99
    %1984 = vmatprep.subr.mxu0 0.0
    %1985 = vmatpush1.msra.mxu0 %v100
    %1986 = vmatprep.subr.mxu0 0.0
    %1987 = vmatpush1.msra.mxu0 %v101
    %1988 = vmatprep.subr.mxu0 0.0
    %1989 = vmatpush1.msra.mxu0 %v102
    %1990 = vmatprep.subr.mxu0 0.0
    %1991 = vmatpush1.msra.mxu0 %v103
    %1992 = vmatprep.subr.mxu0 0.0
    %1993 = vmatpush1.msra.mxu0 %v104
    %1994 = vmatprep.subr.mxu0 0.0
    %1995 = vmatpush1.msra.mxu0 %v105
    %1996 = vmatprep.subr.mxu0 0.0
    %1997 = vmatpush1.msra.mxu0 %v106
    %1998 = vmatprep.subr.mxu0 0.0
    %1999 = vmatpush1.msra.mxu0 0.0
    %2000 = vmatprep.subr.mxu0 0.0
    %2001 = vmatpush1.msra.mxu0 0.0
    %2002 = vmatprep.subr.mxu0 0.0
    %2003 = vmatpush1.msra.mxu0 0.0
    %2004 = vmatprep.subr.mxu0 0.0
    %2005 = vmatpush1.msra.mxu0 0.0
    %2006 = vmatprep.subr.mxu0 0.0
    %2007 = vmatpush1.msra.mxu0 0.0
    %2008 = vmatprep.subr.mxu0 0.0
    %2009 = vmatpush1.msra.mxu0 0.0
    %2010 = vmatprep.subr.mxu0 0.0
    %2011 = vmatpush1.msra.mxu0 0.0
    %2012 = vmatprep.subr.mxu0 0.0
    %2013 = vmatpush1.msra.mxu0 0.0
    %2014 = vmatprep.subr.mxu0 0.0
    %2015 = vmatpush1.msra.mxu0 0.0
    %2016 = vmatprep.subr.mxu0 0.0
    %2017 = vmatpush1.msra.mxu0 0.0
    %2018 = vmatprep.subr.mxu0 0.0
    %2019 = vmatpush1.msra.mxu0 0.0
    %2020 = vmatprep.subr.mxu0 0.0
    %2021 = vmatpush1.msra.mxu0 0.0
    %2022 = vmatprep.subr.mxu0 0.0
    %2023 = vmatpush1.msra.mxu0 0.0
    %2024 = vmatprep.subr.mxu0 0.0
    %2025 = vmatpush1.msra.mxu0 0.0
    %2026 = vmatprep.mubr.f32.mxu0 %v1661
    %2027 = vmatmul.mubr.f32.gmra.mrb[0].mxu0 %v1650
    %v2028 = vpop.f32.mrb[0].mxu0
    %v2029 = vadd.f32 %v1959, %v2028
    %v2030 = vpop.f32.mrb[0].mxu0
    %2031 = vdwg.mxu0
    %v2036 = vrot.slane %v1656, 1
    %v2037 = vrot.slane %v1658, 1
    %v2038 = vsel %vm801, %v2036, %v2037
    %v2039 = vrot.slane %v1657, 1
    %v2040 = vrot.slane %v1659, 1
    %v2041 = vsel %vm801, %v2039, %v2040
    %v2043 = vsel %vm616, %v2041, 0
    %2045 = vmatprep.subr.mxu0 0.0
    %2046 = vmatpush1.msra.mxu0 %v127
    %2047 = vmatprep.subr.mxu0 0.0
    %2048 = vmatpush1.msra.mxu0 %v128
    %2049 = vmatprep.subr.mxu0 0.0
    %2050 = vmatpush1.msra.mxu0 %v129
    %2051 = vmatprep.subr.mxu0 0.0
    %2052 = vmatpush1.msra.mxu0 %v130
    %2053 = vmatprep.subr.mxu0 0.0
    %2054 = vmatpush1.msra.mxu0 %v131
    %2055 = vmatprep.subr.mxu0 0.0
    %2056 = vmatpush1.msra.mxu0 %v132
    %2057 = vmatprep.subr.mxu0 0.0
    %2058 = vmatpush1.msra.mxu0 %v133
    %2059 = vmatprep.subr.mxu0 0.0
    %2060 = vmatpush1.msra.mxu0 %v134
    %2061 = vmatprep.subr.mxu0 0.0
    %2062 = vmatpush1.msra.mxu0 %v135
    %2063 = vmatprep.subr.mxu0 0.0
    %2064 = vmatpush1.msra.mxu0 %v136
    %2065 = vmatprep.subr.mxu0 0.0
    %2066 = vmatpush1.msra.mxu0 %v137
    %2067 = vmatprep.subr.mxu0 0.0
    %2068 = vmatpush1.msra.mxu0 %v138
    %2069 = vmatprep.subr.mxu0 0.0
    %2070 = vmatpush1.msra.mxu0 %v139
    %2071 = vmatprep.subr.mxu0 0.0
    %2072 = vmatpush1.msra.mxu0 %v140
    %2073 = vmatprep.subr.mxu0 0.0
    %2074 = vmatpush1.msra.mxu0 %v141
    %2075 = vmatprep.subr.mxu0 0.0
    %2076 = vmatpush1.msra.mxu0 %v142
    %2077 = vmatprep.subr.mxu0 0.0
    %2078 = vmatpush1.msra.mxu0 %v143
    %2079 = vmatprep.subr.mxu0 0.0
    %2080 = vmatpush1.msra.mxu0 %v144
    %2081 = vmatprep.subr.mxu0 0.0
    %2082 = vmatpush1.msra.mxu0 0.0
    %2083 = vmatprep.subr.mxu0 0.0
    %2084 = vmatpush1.msra.mxu0 0.0
    %2085 = vmatprep.subr.mxu0 0.0
    %2086 = vmatpush1.msra.mxu0 0.0
    %2087 = vmatprep.subr.mxu0 0.0
    %2088 = vmatpush1.msra.mxu0 0.0
    %2089 = vmatprep.subr.mxu0 0.0
    %2090 = vmatpush1.msra.mxu0 0.0
    %2091 = vmatprep.subr.mxu0 0.0
    %2092 = vmatpush1.msra.mxu0 0.0
    %2093 = vmatprep.subr.mxu0 0.0
    %2094 = vmatpush1.msra.mxu0 0.0
    %2095 = vmatprep.subr.mxu0 0.0
    %2096 = vmatpush1.msra.mxu0 0.0
    %2097 = vmatprep.subr.mxu0 0.0
    %2098 = vmatpush1.msra.mxu0 0.0
    %2099 = vmatprep.subr.mxu0 0.0
    %2100 = vmatpush1.msra.mxu0 0.0
    %2101 = vmatprep.subr.mxu0 0.0
    %2102 = vmatpush1.msra.mxu0 0.0
    %2103 = vmatprep.subr.mxu0 0.0
    %2104 = vmatpush1.msra.mxu0 0.0
    %2105 = vmatprep.subr.mxu0 0.0
    %2106 = vmatpush1.msra.mxu0 0.0
    %2107 = vmatprep.subr.mxu0 0.0
    %2108 = vmatpush1.msra.mxu0 0.0
    %2109 = vmatprep.mubr.f32.mxu0 %v2043
    %2110 = vmatmul.mubr.f32.gmra.mrb[0].mxu0 %v2038
    %v2111 = vpop.f32.mrb[0].mxu0
    %v2112 = vadd.f32 0.0, %v2111
    %v2113 = vpop.f32.mrb[0].mxu0
    %2114 = vdwg.mxu0
    %v2115 = vadd.f32 %v2029, %v2112
    %v2116 = vadd.f32 %v2115, %v886
    %v2117 = vmax.f32 %v2116, 0.0
    %v2118 = vmax.f32 %v1891, %v2117
    %2120 = vrot.lane.b32.xlu0 %v2118, 64
    %v2121 = vpop.permute.xlu0 %2120
    %v2123 = vmax.f32 %v2118, %v2121
    %2124 = vst.msk [vmem:[#allocation3 + $0x1] sm:$0x1] %vm1122, %v2123
    %v2127 = vunpack.c.l.s4 1983009808
    %v2128 = vunpack.c.0.s8 %v2127
    %v2129 = vlaneseq
    %v2130 = vshrl.u32 %v2129, 7
    %v2131 = vsub.s32 %v2128, %v2130
    %v2132 = vrot.slane %v2123, %v2131
    %v2133 = vrot.slane %v2132, 7
    %v2134 = vrot.slane %v2133, 2
    %2135 = vrot.lane.b32.xlu0 %v2134, 64
    %v2136 = vpop.permute.xlu0 %2135
    %2138 = vst.msk [vmem:[#allocation3 + $0x1] sm:$0x1] %vm1137, %v2136
    %v2139 = vcombine.high %v2132, %v2132
    %2141 = vst.msk [vmem:[#allocation3 + $0x3] sm:$0x1] %vm1122, %v2139
    %v2142 = vrot.slane %v2139, 7
    %v2143 = vrot.slane %v2142, 2
    %2144 = vrot.lane.b32.xlu0 %v2143, 64
    %v2145 = vpop.permute.xlu0 %2144
    %2147 = vst.msk [vmem:[#allocation3 + $0x3] sm:$0x1] %vm1137, %v2145
    %v2148 = vcombine.high %v2123, %v2123
    %v2150 = vunpack.c.l.s4 1983009808
    %v2151 = vunpack.c.0.s8 %v2150
    %v2152 = vlaneseq
    %v2153 = vshrl.u32 %v2152, 7
    %v2154 = vsub.s32 %v2151, %v2153
    %v2155 = vrot.slane %v2148, %v2154
    %2157 = vst.msk [vmem:[#allocation3 + $0x5] sm:$0x1] %vm1122, %v2155
    %v2158 = vrot.slane %v2155, 7
    %v2159 = vrot.slane %v2158, 2
    %2160 = vrot.lane.b32.xlu0 %v2159, 64
    %v2161 = vpop.permute.xlu0 %2160
    %2163 = vst.msk [vmem:[#allocation3 + $0x5] sm:$0x1] %vm1137, %v2161
    %v2164 = vcombine.high %v2155, %v2155
    %2166 = vst.msk [vmem:[#allocation3 + $0x7] sm:$0x1] %vm1122, %v2164
    %v2167 = vrot.slane %v2164, 7
    %v2168 = vrot.slane %v2167, 2
    %2169 = vrot.lane.b32.xlu0 %v2168, 64
    %v2170 = vpop.permute.xlu0 %2169
    %2172 = vst.msk [vmem:[#allocation3 + $0x7] sm:$0x1] %vm1137, %v2170
    %v2173 = vld [vmem:[#allocation3] sm:$0xff]
    %v2174 = vld [vmem:[%s5] sm:$0xff]
    %v2175 = vld [vmem:[%s5 + $0x8] sm:$0xff]
    %v2176 = vld [vmem:[%s5 + $0x10] sm:$0xff]
    %v2177 = vld [vmem:[%s5 + $0x18] sm:$0xff]
    %v2178 = vld [vmem:[%s5 + $0x20] sm:$0xff]
    %v2179 = vld [vmem:[%s5 + $0x28] sm:$0xff]
    %v2180 = vld [vmem:[%s5 + $0x30] sm:$0xff]
    %v2181 = vld [vmem:[%s5 + $0x38] sm:$0xff]
    %v2182 = vld [vmem:[%s5 + $0x40] sm:$0xff]
    %v2183 = vld [vmem:[%s5 + $0x48] sm:$0xff]
    %v2184 = vld [vmem:[%s5 + $0x50] sm:$0xff]
    %v2185 = vld [vmem:[%s5 + $0x58] sm:$0xff]
    %v2186 = vld [vmem:[%s5 + $0x60] sm:$0xff]
    %v2187 = vld [vmem:[%s5 + $0x68] sm:$0xff]
    %v2188 = vld [vmem:[%s5 + $0x70] sm:$0xff]
    %v2189 = vld [vmem:[%s5 + $0x78] sm:$0xff]
    %v2190 = vld [vmem:[%s5 + $0x80] sm:$0xff]
    %v2191 = vld [vmem:[%s5 + $0x88] sm:$0xff]
    %v2192 = vld [vmem:[%s5 + $0x90] sm:$0xff]
    %v2193 = vld [vmem:[%s5 + $0x98] sm:$0xff]
    %v2194 = vld [vmem:[%s5 + $0xa0] sm:$0xff]
    %v2195 = vld [vmem:[%s5 + $0xa8] sm:$0xff]
    %v2196 = vld [vmem:[%s5 + $0xb0] sm:$0xff]
    %v2197 = vld [vmem:[%s5 + $0xb8] sm:$0xff]
    %v2198 = vld [vmem:[%s5 + $0xc0] sm:$0xff]
    %v2199 = vld [vmem:[%s5 + $0xc8] sm:$0xff]
    %v2200 = vld [vmem:[%s5 + $0xd0] sm:$0xff]
    %v2201 = vld [vmem:[%s5 + $0xd8] sm:$0xff]
    %v2202 = vld [vmem:[%s5 + $0xe0] sm:$0xff]
    %v2203 = vld [vmem:[%s5 + $0xe8] sm:$0xff]
    %v2204 = vld [vmem:[%s5 + $0xf0] sm:$0xff]
    %v2205 = vld [vmem:[%s5 + $0xf8] sm:$0xff]
    %v2206 = vld [vmem:[%s5 + $0x100] sm:$0xff]
    %v2207 = vld [vmem:[%s5 + $0x108] sm:$0xff]
    %v2208 = vld [vmem:[%s5 + $0x110] sm:$0xff]
    %v2209 = vld [vmem:[%s5 + $0x118] sm:$0xff]
    %v2210 = vld [vmem:[%s5 + $0x120] sm:$0xff]
    %v2211 = vld [vmem:[%s5 + $0x128] sm:$0xff]
    %v2212 = vld [vmem:[%s5 + $0x130] sm:$0xff]
    %v2213 = vld [vmem:[%s5 + $0x138] sm:$0xff]
    %v2214 = vld [vmem:[%s5 + $0x140] sm:$0xff]
    %v2215 = vld [vmem:[%s5 + $0x148] sm:$0xff]
    %v2216 = vld [vmem:[%s5 + $0x150] sm:$0xff]
    %v2217 = vld [vmem:[%s5 + $0x158] sm:$0xff]
    %v2218 = vld [vmem:[%s5 + $0x160] sm:$0xff]
    %v2219 = vld [vmem:[%s5 + $0x168] sm:$0xff]
    %v2220 = vld [vmem:[%s5 + $0x170] sm:$0xff]
    %v2221 = vld [vmem:[%s5 + $0x178] sm:$0xff]
    %v2222 = vld [vmem:[%s5 + $0x180] sm:$0xff]
    %v2223 = vld [vmem:[%s5 + $0x188] sm:$0xff]
    %v2224 = vld [vmem:[%s5 + $0x190] sm:$0xff]
    %v2225 = vld [vmem:[%s5 + $0x198] sm:$0xff]
    %v2226 = vld [vmem:[%s5 + $0x1a0] sm:$0xff]
    %v2227 = vld [vmem:[%s5 + $0x1a8] sm:$0xff]
    %v2228 = vld [vmem:[%s5 + $0x1b0] sm:$0xff]
    %v2229 = vld [vmem:[%s5 + $0x1b8] sm:$0xff]
    %v2230 = vld [vmem:[%s5 + $0x1c0] sm:$0xff]
    %v2231 = vld [vmem:[%s5 + $0x1c8] sm:$0xff]
    %v2232 = vld [vmem:[%s5 + $0x1d0] sm:$0xff]
    %v2233 = vld [vmem:[%s5 + $0x1d8] sm:$0xff]
    %v2234 = vld [vmem:[%s5 + $0x1e0] sm:$0xff]
    %v2235 = vld [vmem:[%s5 + $0x1e8] sm:$0xff]
    %v2236 = vld [vmem:[%s5 + $0x1f0] sm:$0xff]
    %v2237 = vld [vmem:[%s5 + $0x1f8] sm:$0xff]
    %v2238 = vld [vmem:[%s6] sm:$0x1]
    %v2240 = vlaneseq
    %v2241 = vshrl.u32 %v2240, 7
    %v2242 = vsub.s32 0, %v2241
    %v2243 = vrot.slane %v2238, %v2242
    %v2246 = vcombine.high %v2173, %v2173
    %v2248 = vunpack.c.l.s4 1983009808
    %v2249 = vunpack.c.0.s8 %v2248
    %v2250 = vlaneseq
    %v2251 = vshrl.u32 %v2250, 7
    %v2252 = vsub.s32 %v2249, %v2251
    %v2253 = vrot.slane %v2173, %v2252
    %v2255 = vunpack.c.l.s4 1983009808
    %v2256 = vunpack.c.0.s8 %v2255
    %v2257 = vlaneseq
    %v2258 = vshrl.u32 %v2257, 7
    %v2259 = vsub.s32 %v2256, %v2258
    %v2260 = vrot.slane %v2246, %v2259
    %v2261 = vcombine.high %v2253, %v2253
    %v2262 = vcombine.high %v2260, %v2260
    %2267 = vmatprep.subr.mxu0 0.0
    %2268 = vmatpush1.msra.mxu0 %v2174
    %2269 = vmatprep.subr.mxu0 0.0
    %2270 = vmatpush1.msra.mxu0 %v2175
    %2271 = vmatprep.subr.mxu0 0.0
    %2272 = vmatpush1.msra.mxu0 %v2176
    %2273 = vmatprep.subr.mxu0 0.0
    %2274 = vmatpush1.msra.mxu0 %v2177
    %2275 = vmatprep.subr.mxu0 0.0
    %2276 = vmatpush1.msra.mxu0 %v2178
    %2277 = vmatprep.subr.mxu0 0.0
    %2278 = vmatpush1.msra.mxu0 %v2179
    %2279 = vmatprep.subr.mxu0 0.0
    %2280 = vmatpush1.msra.mxu0 %v2180
    %2281 = vmatprep.subr.mxu0 0.0
    %2282 = vmatpush1.msra.mxu0 %v2181
    %2283 = vmatprep.subr.mxu0 0.0
    %2284 = vmatpush1.msra.mxu0 %v2182
    %2285 = vmatprep.subr.mxu0 0.0
    %2286 = vmatpush1.msra.mxu0 %v2183
    %2287 = vmatprep.subr.mxu0 0.0
    %2288 = vmatpush1.msra.mxu0 %v2184
    %2289 = vmatprep.subr.mxu0 0.0
    %2290 = vmatpush1.msra.mxu0 %v2185
    %2291 = vmatprep.subr.mxu0 0.0
    %2292 = vmatpush1.msra.mxu0 %v2186
    %2293 = vmatprep.subr.mxu0 0.0
    %2294 = vmatpush1.msra.mxu0 %v2187
    %2295 = vmatprep.subr.mxu0 0.0
    %2296 = vmatpush1.msra.mxu0 %v2188
    %2297 = vmatprep.subr.mxu0 0.0
    %2298 = vmatpush1.msra.mxu0 %v2189
    %2299 = vmatprep.subr.mxu0 0.0
    %2300 = vmatpush1.msra.mxu0 %v2190
    %2301 = vmatprep.subr.mxu0 0.0
    %2302 = vmatpush1.msra.mxu0 %v2191
    %2303 = vmatprep.subr.mxu0 0.0
    %2304 = vmatpush1.msra.mxu0 %v2192
    %2305 = vmatprep.subr.mxu0 0.0
    %2306 = vmatpush1.msra.mxu0 %v2193
    %2307 = vmatprep.subr.mxu0 0.0
    %2308 = vmatpush1.msra.mxu0 %v2194
    %2309 = vmatprep.subr.mxu0 0.0
    %2310 = vmatpush1.msra.mxu0 %v2195
    %2311 = vmatprep.subr.mxu0 0.0
    %2312 = vmatpush1.msra.mxu0 %v2196
    %2313 = vmatprep.subr.mxu0 0.0
    %2314 = vmatpush1.msra.mxu0 %v2197
    %2315 = vmatprep.subr.mxu0 0.0
    %2316 = vmatpush1.msra.mxu0 %v2198
    %2317 = vmatprep.subr.mxu0 0.0
    %2318 = vmatpush1.msra.mxu0 %v2199
    %2319 = vmatprep.subr.mxu0 0.0
    %2320 = vmatpush1.msra.mxu0 %v2200
    %2321 = vmatprep.subr.mxu0 0.0
    %2322 = vmatpush1.msra.mxu0 %v2201
    %2323 = vmatprep.subr.mxu0 0.0
    %2324 = vmatpush1.msra.mxu0 %v2202
    %2325 = vmatprep.subr.mxu0 0.0
    %2326 = vmatpush1.msra.mxu0 %v2203
    %2327 = vmatprep.subr.mxu0 0.0
    %2328 = vmatpush1.msra.mxu0 %v2204
    %2329 = vmatprep.subr.mxu0 0.0
    %2330 = vmatpush1.msra.mxu0 %v2205
    %2331 = vmatprep.mubr.f32.mxu0 %v2261
    %2332 = vmatmul.mubr.f32.gmra.mrb[0].mxu0 %v2253
    %v2333 = vpop.f32.mrb[0].mxu0
    %v2334 = vadd.f32 %v2243, %v2333
    %v2335 = vpop.f32.mrb[0].mxu0
    %2336 = vdwg.mxu0
    %2337 = vmatprep.subr.mxu0 0.0
    %2338 = vmatpush1.msra.mxu0 %v2206
    %2339 = vmatprep.subr.mxu0 0.0
    %2340 = vmatpush1.msra.mxu0 %v2207
    %2341 = vmatprep.subr.mxu0 0.0
    %2342 = vmatpush1.msra.mxu0 %v2208
    %2343 = vmatprep.subr.mxu0 0.0
    %2344 = vmatpush1.msra.mxu0 %v2209
    %2345 = vmatprep.subr.mxu0 0.0
    %2346 = vmatpush1.msra.mxu0 %v2210
    %2347 = vmatprep.subr.mxu0 0.0
    %2348 = vmatpush1.msra.mxu0 %v2211
    %2349 = vmatprep.subr.mxu0 0.0
    %2350 = vmatpush1.msra.mxu0 %v2212
    %2351 = vmatprep.subr.mxu0 0.0
    %2352 = vmatpush1.msra.mxu0 %v2213
    %2353 = vmatprep.subr.mxu0 0.0
    %2354 = vmatpush1.msra.mxu0 %v2214
    %2355 = vmatprep.subr.mxu0 0.0
    %2356 = vmatpush1.msra.mxu0 %v2215
    %2357 = vmatprep.subr.mxu0 0.0
    %2358 = vmatpush1.msra.mxu0 %v2216
    %2359 = vmatprep.subr.mxu0 0.0
    %2360 = vmatpush1.msra.mxu0 %v2217
    %2361 = vmatprep.subr.mxu0 0.0
    %2362 = vmatpush1.msra.mxu0 %v2218
    %2363 = vmatprep.subr.mxu0 0.0
    %2364 = vmatpush1.msra.mxu0 %v2219
    %2365 = vmatprep.subr.mxu0 0.0
    %2366 = vmatpush1.msra.mxu0 %v2220
    %2367 = vmatprep.subr.mxu0 0.0
    %2368 = vmatpush1.msra.mxu0 %v2221
    %2369 = vmatprep.subr.mxu0 0.0
    %2370 = vmatpush1.msra.mxu0 %v2222
    %2371 = vmatprep.subr.mxu0 0.0
    %2372 = vmatpush1.msra.mxu0 %v2223
    %2373 = vmatprep.subr.mxu0 0.0
    %2374 = vmatpush1.msra.mxu0 %v2224
    %2375 = vmatprep.subr.mxu0 0.0
    %2376 = vmatpush1.msra.mxu0 %v2225
    %2377 = vmatprep.subr.mxu0 0.0
    %2378 = vmatpush1.msra.mxu0 %v2226
    %2379 = vmatprep.subr.mxu0 0.0
    %2380 = vmatpush1.msra.mxu0 %v2227
    %2381 = vmatprep.subr.mxu0 0.0
    %2382 = vmatpush1.msra.mxu0 %v2228
    %2383 = vmatprep.subr.mxu0 0.0
    %2384 = vmatpush1.msra.mxu0 %v2229
    %2385 = vmatprep.subr.mxu0 0.0
    %2386 = vmatpush1.msra.mxu0 %v2230
    %2387 = vmatprep.subr.mxu0 0.0
    %2388 = vmatpush1.msra.mxu0 %v2231
    %2389 = vmatprep.subr.mxu0 0.0
    %2390 = vmatpush1.msra.mxu0 %v2232
    %2391 = vmatprep.subr.mxu0 0.0
    %2392 = vmatpush1.msra.mxu0 %v2233
    %2393 = vmatprep.subr.mxu0 0.0
    %2394 = vmatpush1.msra.mxu0 %v2234
    %2395 = vmatprep.subr.mxu0 0.0
    %2396 = vmatpush1.msra.mxu0 %v2235
    %2397 = vmatprep.subr.mxu0 0.0
    %2398 = vmatpush1.msra.mxu0 %v2236
    %2399 = vmatprep.subr.mxu0 0.0
    %2400 = vmatpush1.msra.mxu0 %v2237
    %2401 = vmatprep.mubr.f32.mxu0 %v2262
    %2402 = vmatmul.mubr.f32.gmra.mrb[0].mxu0 %v2260
    %v2403 = vpop.f32.mrb[0].mxu0
    %v2404 = vadd.f32 %v2334, %v2403
    %v2405 = vpop.f32.mrb[0].mxu0
    %2406 = vdwg.mxu0
    %v2407 = vmax.f32 %v2404, 0.0
    %v2408 = vld [vmem:[%s7] sm:$0xff]
    %v2409 = vld [vmem:[%s7 + $0x8] sm:$0xff]
    %v2410 = vld [vmem:[%s7 + $0x10] sm:$0xff]
    %v2411 = vld [vmem:[%s7 + $0x18] sm:$0xff]
    %v2412 = vld [vmem:[%s8] sm:$0x1]
    %v2414 = vlaneseq
    %v2415 = vshrl.u32 %v2414, 7
    %v2416 = vsub.s32 0, %v2415
    %v2417 = vrot.slane %v2412, %v2416
    %vm2419 = vcmask 261120
    %v2421 = vsel %vm2419, %v2407, 0
    %2423 = vmatprep.subr.mxu0 0.0
    %2424 = vmatpush1.msra.mxu0 %v2408
    %2425 = vmatprep.subr.mxu0 0.0
    %2426 = vmatpush1.msra.mxu0 %v2409
    %2427 = vmatprep.subr.mxu0 0.0
    %2428 = vmatpush1.msra.mxu0 %v2410
    %2429 = vmatprep.subr.mxu0 0.0
    %2430 = vmatpush1.msra.mxu0 %v2411
    %2431 = vmatprep.subr.mxu0 0.0
    %2432 = vmatpush1.msra.mxu0 0.0
    %2433 = vmatprep.subr.mxu0 0.0
    %2434 = vmatpush1.msra.mxu0 0.0
    %2435 = vmatprep.subr.mxu0 0.0
    %2436 = vmatpush1.msra.mxu0 0.0
    %2437 = vmatprep.subr.mxu0 0.0
    %2438 = vmatpush1.msra.mxu0 0.0
    %2439 = vmatprep.subr.mxu0 0.0
    %2440 = vmatpush1.msra.mxu0 0.0
    %2441 = vmatprep.subr.mxu0 0.0
    %2442 = vmatpush1.msra.mxu0 0.0
    %2443 = vmatprep.subr.mxu0 0.0
    %2444 = vmatpush1.msra.mxu0 0.0
    %2445 = vmatprep.subr.mxu0 0.0
    %2446 = vmatpush1.msra.mxu0 0.0
    %2447 = vmatprep.subr.mxu0 0.0
    %2448 = vmatpush1.msra.mxu0 0.0
    %2449 = vmatprep.subr.mxu0 0.0
    %2450 = vmatpush1.msra.mxu0 0.0
    %2451 = vmatprep.subr.mxu0 0.0
    %2452 = vmatpush1.msra.mxu0 0.0
    %2453 = vmatprep.subr.mxu0 0.0
    %2454 = vmatpush1.msra.mxu0 0.0
    %2455 = vmatprep.subr.mxu0 0.0
    %2456 = vmatpush1.msra.mxu0 0.0
    %2457 = vmatprep.subr.mxu0 0.0
    %2458 = vmatpush1.msra.mxu0 0.0
    %2459 = vmatprep.subr.mxu0 0.0
    %2460 = vmatpush1.msra.mxu0 0.0
    %2461 = vmatprep.subr.mxu0 0.0
    %2462 = vmatpush1.msra.mxu0 0.0
    %2463 = vmatprep.subr.mxu0 0.0
    %2464 = vmatpush1.msra.mxu0 0.0
    %2465 = vmatprep.subr.mxu0 0.0
    %2466 = vmatpush1.msra.mxu0 0.0
    %2467 = vmatprep.subr.mxu0 0.0
    %2468 = vmatpush1.msra.mxu0 0.0
    %2469 = vmatprep.subr.mxu0 0.0
    %2470 = vmatpush1.msra.mxu0 0.0
    %2471 = vmatprep.subr.mxu0 0.0
    %2472 = vmatpush1.msra.mxu0 0.0
    %2473 = vmatprep.subr.mxu0 0.0
    %2474 = vmatpush1.msra.mxu0 0.0
    %2475 = vmatprep.subr.mxu0 0.0
    %2476 = vmatpush1.msra.mxu0 0.0
    %2477 = vmatprep.subr.mxu0 0.0
    %2478 = vmatpush1.msra.mxu0 0.0
    %2479 = vmatprep.subr.mxu0 0.0
    %2480 = vmatpush1.msra.mxu0 0.0
    %2481 = vmatprep.subr.mxu0 0.0
    %2482 = vmatpush1.msra.mxu0 0.0
    %2483 = vmatprep.subr.mxu0 0.0
    %2484 = vmatpush1.msra.mxu0 0.0
    %2485 = vmatprep.subr.mxu0 0.0
    %2486 = vmatpush1.msra.mxu0 0.0
    %2487 = vmatprep.mubr.f32.mxu0 0.0
    %2488 = vmatmul.mubr.f32.gmra.mrb[0].mxu0 %v2421
    %v2489 = vpop.f32.mrb[0].mxu0
    %v2490 = vadd.f32 %v2417, %v2489
    %v2491 = vpop.f32.mrb[0].mxu0
    %2492 = vdwg.mxu0
    %vm2493 = vcmask 74752
    %2494 = vst.msk [vmem:[#allocation4] sm:$0x3] %vm2493, %v2490
    // Predicated region
    $region38: #{cnn_forward.1} parent=1 // pred_check
      _
    $region39: #{cnn_forward.1} parent=1 // pred_check_branch
      %2496 = sbr.rel (0) target = $region41
    $region40: #{cnn_forward.1} parent=1 // pred_region
      %s2498 = ssub.s32 32, 32
      %2499 = vsyncadd [#allocation5], %s2498
      %s2501 = sshll.u32 [#allocation4], 4
      %s2502 = int_to_ptr.vmem [resolvable:$true] %s2501
      %2504 = dma.vmem_to_hbm [thread:$0]  %s2502, 32, %s9, [#allocation5]
    $region41: #{cnn_forward.1} parent=1 // pred_fallthru
      _
    // Predicated region
    $region42: #{cnn_forward.1} parent=1 // pred_check
      _
    $region43: #{cnn_forward.1} parent=1 // pred_check_branch
      %2506 = sbr.rel (0) target = $region45
    $region44: #{cnn_forward.1} parent=1 // pred_region
      %2507 = dma.done [#allocation5], 32
    $region45: #{cnn_forward.1} parent=1 // pred_fallthru
      _
    %2508 = vsyncpa [#allocation5], 1

</llo_original>
